<compile_context>
chip_gen: v6e
topology: v6e:2x2x1
jax: 0.10.0
libtpu: 0.0.40
codegen_flags: <defaults>
</compile_context>

<pallas_src>
import functools

import jax
import jax.numpy as jnp
from jax.experimental import pallas as pl
from jax.experimental.pallas import tpu as pltpu


H = 300        # hidden width of both MLPs
X_DIM = 784    # 28*28 image
X_PAD = 896    # 7*128 -> lane-dense x_mean store (sliced back to 784 outside the kernel)


def _elu(x):
    # ELU(alpha=1) in f32 on the VPU/EUP.  The negative branch uses exp(x)-1; the
    # expm1 refinement is < 1e-7 absolute near 0, far below the bf16-weight noise
    # floor, and exp has a guaranteed Mosaic lowering on all TPU generations.
    return jnp.where(x > 0, x, jnp.exp(x) - 1.0)


def _mm(a_f32, w_bf16):
    # bf16 operands on the MXU, f32 accumulation.
    return jnp.dot(a_f32.astype(jnp.bfloat16), w_bf16,
                   preferred_element_type=jnp.float32)


def vae_kernel(x_ref, eps_ref,
               we1, be1, we2, be2, we3, be3,
               wd1, bd1, wd2, bd2, wd3, bd3,
               enc_ref, xmean_ref, *, latent_size):
    # ---- Encoder: 784 -> 300 -> 300 -> 2*latent ----
    x = x_ref[...]
    h = _elu(_mm(x, we1[...]) + be1[...])
    h = _elu(_mm(h, we2[...]) + be2[...])
    enc = _mm(h, we3[...]) + be3[...]
    enc_ref[...] = enc                      # (tile_b, 2*latent): z_mean | z_logvar

    # ---- Reparameterization: z = mu + exp(logvar/2) * eps ----
    z_mean = enc[:, :latent_size]
    z_logvar = enc[:, latent_size:]
    z = z_mean + jnp.exp(z_logvar * 0.5) * eps_ref[...]

    # ---- Decoder: latent -> 300 -> 300 -> 896 (784 + pad); "-5.0" folded into bd3 ----
    h = _elu(_mm(z, wd1[...]) + bd1[...])
    h = _elu(_mm(h, wd2[...]) + bd2[...])
    xmean_ref[...] = _mm(h, wd3[...]) + bd3[...]


def vae_forward(x, eps, kparams, *, tile_b=128):
    """Runs the fused VAE forward.  tile_b=128 saturates the v5e MXU; use 256 on
    v6e/v7x if the batch is large.  Weights stay resident in VMEM across batch tiles."""
    (we1, be1, we2, be2, we3, be3, wd1, bd1, wd2, bd2, wd3, bd3) = kparams
    latent = eps.shape[-1]
    B = x.shape[0]

    # Pad the batch to a sublane-friendly multiple of 8, then to a multiple of the tile.
    b8 = max(8, ((B + 7) // 8) * 8)
    tb = tile_b if b8 >= tile_b else b8
    b_pad = ((b8 + tb - 1) // tb) * tb
    if b_pad != B:
        x = jnp.pad(x, ((0, b_pad - B), (0, 0)))
        eps = jnp.pad(eps, ((0, b_pad - B), (0, 0)))

    grid = (b_pad // tb,)

    def resident(arr):
        # Same block index every grid step -> DMA'd once, held in VMEM for all batch tiles.
        return pl.BlockSpec(arr.shape, lambda i: (0, 0))

    # NOTE: the 12 weight/bias inputs could be packed into 1-2 HBM buffers to save DMA
    # descriptors, but un-aligned lane slices (300/784 boundaries) inside VMEM would cost
    # relayout copies that outweigh the ~per-descriptor overhead here.
    enc_out, xmean_pad = pl.pallas_call(
        functools.partial(vae_kernel, latent_size=latent),
        out_shape=(jax.ShapeDtypeStruct((b_pad, 2 * latent), jnp.float32),
                   jax.ShapeDtypeStruct((b_pad, X_PAD), jnp.float32)),
        grid_spec=pltpu.PrefetchScalarGridSpec(
            num_scalar_prefetch=0,
            grid=grid,
            in_specs=[
                pl.BlockSpec((tb, X_DIM), lambda i: (i, 0)),    # x tile
                pl.BlockSpec((tb, latent), lambda i: (i, 0)),   # eps tile
                resident(we1), resident(be1),
                resident(we2), resident(be2),
                resident(we3), resident(be3),
                resident(wd1), resident(bd1),
                resident(wd2), resident(bd2),
                resident(wd3), resident(bd3),
            ],
            out_specs=(
                pl.BlockSpec((tb, 2 * latent), lambda i: (i, 0)),
                pl.BlockSpec((tb, X_PAD), lambda i: (i, 0)),
            ),
        ),
        compiler_params=pltpu.CompilerParams(
            dimension_semantics=("parallel",)),
    )(x, eps, we1, be1, we2, be2, we3, be3, wd1, bd1, wd2, bd2, wd3, bd3)

    z_mean = enc_out[:B, :latent]
    z_logvar = enc_out[:B, latent:]
    x_mean = xmean_pad[:B, :X_DIM]
    return z_mean, z_logvar, x_mean


# ----------------------------- parameters --------------------------------------------

def init_params(key, latent_size, h=H, x_dim=X_DIM):
    """PyTorch nn.Linear-style init, f32, weights stored (in, out)."""
    ks = jax.random.split(key, 12)

    def lin(kw, kb, fan_in, fan_out):
        bound = 1.0 / jnp.sqrt(jnp.float32(fan_in))
        w = jax.random.uniform(kw, (fan_in, fan_out), jnp.float32, -bound, bound)
        b = jax.random.uniform(kb, (1, fan_out), jnp.float32, -bound, bound)
        return w, b

    we1, be1 = lin(ks[0], ks[1], x_dim, h)
    we2, be2 = lin(ks[2], ks[3], h, h)
    we3, be3 = lin(ks[4], ks[5], h, 2 * latent_size)
    wd1, bd1 = lin(ks[6], ks[7], latent_size, h)
    wd2, bd2 = lin(ks[8], ks[9], h, h)
    wd3, bd3 = lin(ks[10], ks[11], h, x_dim)
    return dict(we1=we1, be1=be1, we2=we2, be2=be2, we3=we3, be3=be3,
                wd1=wd1, bd1=bd1, wd2=wd2, bd2=bd2, wd3=wd3, bd3=bd3)


def prepare_kernel_params(p):
    """Host-side packing done once:
         * weights -> bf16 (halves the dominant weight DMA; MXU-native on v5e/v6e/v7x)
         * biases stay f32
         * fold the decoder's constant -5.0 into bd3
         * zero-pad wd3/bd3 columns 784 -> 896 for a lane-dense output store
    """
    pad = X_PAD - X_DIM
    wd3 = jnp.pad(p["wd3"], ((0, 0), (0, pad)))
    bd3 = jnp.pad(p["bd3"] - 5.0, ((0, 0), (0, pad)))
    bf16 = lambda w: w.astype(jnp.bfloat16)
    return (bf16(p["we1"]), p["be1"], bf16(p["we2"]), p["be2"],
            bf16(p["we3"]), p["be3"],
            bf16(p["wd1"]), p["bd1"], bf16(p["wd2"]), p["bd2"],
            bf16(wd3), bd3)


# ----------------------------- references --------------------------------------------

def reference_forward_f32(x, eps, p):
    """Pure-f32 reference matching the PyTorch VAE.forward semantics exactly."""
    latent = eps.shape[-1]
    h = _elu(x @ p["we1"] + p["be1"])
    h = _elu(h @ p["we2"] + p["be2"])
    enc = h @ p["we3"] + p["be3"]
    z_mean, z_logvar = enc[:, :latent], enc[:, latent:]
    z = z_mean + jnp.exp(z_logvar / 2.0) * eps
    h = _elu(z @ p["wd1"] + p["bd1"])
    h = _elu(h @ p["wd2"] + p["bd2"])
    x_mean = h @ p["wd3"] + p["bd3"] - 5.0
    return z_mean, z_logvar, x_mean


def reference_forward_bf16(x, eps, kparams, latent):
    """Emulates the kernel's exact numerics (bf16 matmul operands, f32 accumulation)."""
    (we1, be1, we2, be2, we3, be3, wd1, bd1, wd2, bd2, wd3, bd3) = kparams
    h = _elu(_mm(x, we1) + be1)
    h = _elu(_mm(h, we2) + be2)
    enc = _mm(h, we3) + be3
    z_mean, z_logvar = enc[:, :latent], enc[:, latent:]
    z = z_mean + jnp.exp(z_logvar * 0.5) * eps
    h = _elu(_mm(z, wd1) + bd1)
    h = _elu(_mm(h, wd2) + bd2)
    x_mean = (_mm(h, wd3) + bd3)[:, :X_DIM]
    return z_mean, z_logvar, x_mean


# ----------------------------- demo / self-test ---------------------------------------

if __name__ == "__main__":
    latent_size = 32
    batch = 8

    key = jax.random.PRNGKey(0)
    kx, keps, kp = jax.random.split(key, 3)
    x = jax.random.uniform(kx, (batch, X_DIM), jnp.float32)            # MNIST-like pixels
    eps = jax.random.normal(keps, (batch, latent_size), jnp.float32)   # torch.randn_like noise

    params = init_params(kp, latent_size)
    kparams = prepare_kernel_params(params)

    z_mean, z_logvar, x_mean = jax.block_until_ready(vae_forward(x, eps, kparams))

    assert z_mean.shape == (batch, latent_size), z_mean.shape
    assert z_logvar.shape == (batch, latent_size), z_logvar.shape
    assert x_mean.shape == (batch, X_DIM), x_mean.shape

    # Strict check vs a reference with identical numerics (bf16 operands, f32 accum).
    r_mean, r_logvar, r_xmean = reference_forward_bf16(x, eps, kparams, latent_size)
    assert jnp.allclose(z_mean, r_mean, atol=1e-2, rtol=1e-2)
    assert jnp.allclose(z_logvar, r_logvar, atol=1e-2, rtol=1e-2)
    assert jnp.allclose(x_mean, r_xmean, atol=1e-2, rtol=1e-2)

    # Loose sanity check vs the exact f32 PyTorch-equivalent semantics (bf16 weight noise).
    f_mean, f_logvar, f_xmean = reference_forward_f32(x, eps, params)
    assert jnp.allclose(z_mean, f_mean, atol=0.3)
    assert jnp.allclose(z_logvar, f_logvar, atol=0.3)
    assert jnp.allclose(x_mean, f_xmean, atol=0.3)

    print("KERNEL_OK")
</pallas_src>

<mosaic_0001>
module attributes {stable_mosaic.version = 11 : i64} {
  func.func @vae_kernel(%arg0: i32, %arg1: memref<8x784xf32, #tpu.memory_space<vmem>>, %arg2: memref<8x32xf32, #tpu.memory_space<vmem>>, %arg3: memref<784x300xbf16, #tpu.memory_space<vmem>>, %arg4: memref<1x300xf32, #tpu.memory_space<vmem>>, %arg5: memref<300x300xbf16, #tpu.memory_space<vmem>>, %arg6: memref<1x300xf32, #tpu.memory_space<vmem>>, %arg7: memref<300x64xbf16, #tpu.memory_space<vmem>>, %arg8: memref<1x64xf32, #tpu.memory_space<vmem>>, %arg9: memref<32x300xbf16, #tpu.memory_space<vmem>>, %arg10: memref<1x300xf32, #tpu.memory_space<vmem>>, %arg11: memref<300x300xbf16, #tpu.memory_space<vmem>>, %arg12: memref<1x300xf32, #tpu.memory_space<vmem>>, %arg13: memref<300x896xbf16, #tpu.memory_space<vmem>>, %arg14: memref<1x896xf32, #tpu.memory_space<vmem>>, %arg15: memref<8x64xf32, #tpu.memory_space<vmem>>, %arg16: memref<8x896xf32, #tpu.memory_space<vmem>>) attributes {dimension_semantics = [#tpu.dimension_semantics<parallel>], iteration_bounds = array<i64: 1>, scalar_prefetch = 0 : i64, scratch_operands = 0 : i64, tpu.core_type = #tpu.core_type<tc>, window_params = [{transform_indices = @transform_0, window_bounds = array<i64: 8, 784>}, {transform_indices = @transform_1, window_bounds = array<i64: 8, 32>}, {pipeline_mode = #tpu.pipeline_mode<synchronous>, transform_indices = @transform_2, window_bounds = array<i64: 784, 300>}, {pipeline_mode = #tpu.pipeline_mode<synchronous>, transform_indices = @transform_3, window_bounds = array<i64: 1, 300>}, {pipeline_mode = #tpu.pipeline_mode<synchronous>, transform_indices = @transform_4, window_bounds = array<i64: 300, 300>}, {pipeline_mode = #tpu.pipeline_mode<synchronous>, transform_indices = @transform_5, window_bounds = array<i64: 1, 300>}, {pipeline_mode = #tpu.pipeline_mode<synchronous>, transform_indices = @transform_6, window_bounds = array<i64: 300, 64>}, {pipeline_mode = #tpu.pipeline_mode<synchronous>, transform_indices = @transform_7, window_bounds = array<i64: 1, 64>}, {pipeline_mode = #tpu.pipeline_mode<synchronous>, transform_indices = @transform_8, window_bounds = array<i64: 32, 300>}, {pipeline_mode = #tpu.pipeline_mode<synchronous>, transform_indices = @transform_9, window_bounds = array<i64: 1, 300>}, {pipeline_mode = #tpu.pipeline_mode<synchronous>, transform_indices = @transform_10, window_bounds = array<i64: 300, 300>}, {pipeline_mode = #tpu.pipeline_mode<synchronous>, transform_indices = @transform_11, window_bounds = array<i64: 1, 300>}, {pipeline_mode = #tpu.pipeline_mode<synchronous>, transform_indices = @transform_12, window_bounds = array<i64: 300, 896>}, {pipeline_mode = #tpu.pipeline_mode<synchronous>, transform_indices = @transform_13, window_bounds = array<i64: 1, 896>}, {transform_indices = @transform_14, window_bounds = array<i64: 8, 64>}, {transform_indices = @transform_15, window_bounds = array<i64: 8, 896>}]} {
    %c0 = arith.constant 0 : index
    %c0_0 = arith.constant 0 : index
    %0 = vector.load %arg1[%c0, %c0_0] : memref<8x784xf32, #tpu.memory_space<vmem>>, vector<8x784xf32>
    %c0_1 = arith.constant 0 : index
    %c0_2 = arith.constant 0 : index
    %1 = vector.load %arg3[%c0_1, %c0_2] : memref<784x300xbf16, #tpu.memory_space<vmem>>, vector<784x300xbf16>
    %2 = arith.truncf %0 : vector<8x784xf32> to vector<8x784xbf16>
    %cst = arith.constant dense<0.000000e+00> : vector<8x300xf32>
    %3 = tpu.matmul %2, %1, %cst {dimension_numbers = #tpu.dot_dimension_numbers<[1], [0], [0], [1], [0, 0, 1, 1], [], []>} : vector<8x784xbf16>, vector<784x300xbf16>, vector<8x300xf32> -> vector<8x300xf32>
    %c0_3 = arith.constant 0 : index
    %c0_4 = arith.constant 0 : index
    %4 = vector.load %arg4[%c0_3, %c0_4] : memref<1x300xf32, #tpu.memory_space<vmem>>, vector<1x300xf32>
    %5 = vector.broadcast %4 : vector<1x300xf32> to vector<8x300xf32>
    %6 = arith.addf %3, %5 : vector<8x300xf32>
    %cst_5 = arith.constant 0.000000e+00 : f32
    %7 = vector.broadcast %cst_5 : f32 to vector<8x300xf32>
    %8 = arith.cmpf ogt, %6, %7 : vector<8x300xf32>
    %9 = math.exp %6 : vector<8x300xf32>
    %cst_6 = arith.constant 1.000000e+00 : f32
    %10 = vector.broadcast %cst_6 : f32 to vector<8x300xf32>
    %11 = arith.subf %9, %10 : vector<8x300xf32>
    %12 = arith.select %8, %6, %11 : vector<8x300xi1>, vector<8x300xf32>
    %c0_7 = arith.constant 0 : index
    %c0_8 = arith.constant 0 : index
    %13 = vector.load %arg5[%c0_7, %c0_8] : memref<300x300xbf16, #tpu.memory_space<vmem>>, vector<300x300xbf16>
    %14 = arith.truncf %12 : vector<8x300xf32> to vector<8x300xbf16>
    %cst_9 = arith.constant dense<0.000000e+00> : vector<8x300xf32>
    %15 = tpu.matmul %14, %13, %cst_9 {dimension_numbers = #tpu.dot_dimension_numbers<[1], [0], [0], [1], [0, 0, 1, 1], [], []>} : vector<8x300xbf16>, vector<300x300xbf16>, vector<8x300xf32> -> vector<8x300xf32>
    %c0_10 = arith.constant 0 : index
    %c0_11 = arith.constant 0 : index
    %16 = vector.load %arg6[%c0_10, %c0_11] : memref<1x300xf32, #tpu.memory_space<vmem>>, vector<1x300xf32>
    %17 = vector.broadcast %16 : vector<1x300xf32> to vector<8x300xf32>
    %18 = arith.addf %15, %17 : vector<8x300xf32>
    %cst_12 = arith.constant 0.000000e+00 : f32
    %19 = vector.broadcast %cst_12 : f32 to vector<8x300xf32>
    %20 = arith.cmpf ogt, %18, %19 : vector<8x300xf32>
    %21 = math.exp %18 : vector<8x300xf32>
    %cst_13 = arith.constant 1.000000e+00 : f32
    %22 = vector.broadcast %cst_13 : f32 to vector<8x300xf32>
    %23 = arith.subf %21, %22 : vector<8x300xf32>
    %24 = arith.select %20, %18, %23 : vector<8x300xi1>, vector<8x300xf32>
    %c0_14 = arith.constant 0 : index
    %c0_15 = arith.constant 0 : index
    %25 = vector.load %arg7[%c0_14, %c0_15] : memref<300x64xbf16, #tpu.memory_space<vmem>>, vector<300x64xbf16>
    %26 = arith.truncf %24 : vector<8x300xf32> to vector<8x300xbf16>
    %cst_16 = arith.constant dense<0.000000e+00> : vector<8x64xf32>
    %27 = tpu.matmul %26, %25, %cst_16 {dimension_numbers = #tpu.dot_dimension_numbers<[1], [0], [0], [1], [0, 0, 1, 1], [], []>} : vector<8x300xbf16>, vector<300x64xbf16>, vector<8x64xf32> -> vector<8x64xf32>
    %c0_17 = arith.constant 0 : index
    %c0_18 = arith.constant 0 : index
    %28 = vector.load %arg8[%c0_17, %c0_18] : memref<1x64xf32, #tpu.memory_space<vmem>>, vector<1x64xf32>
    %29 = vector.broadcast %28 : vector<1x64xf32> to vector<8x64xf32>
    %30 = arith.addf %27, %29 : vector<8x64xf32>
    %c0_19 = arith.constant 0 : index
    %c0_20 = arith.constant 0 : index
    %31 = vector.load %arg15[%c0_19, %c0_20] : memref<8x64xf32, #tpu.memory_space<vmem>>, vector<8x64xf32>
    tpu.vector_store %arg15[%c0_19, %c0_20], %30 {strides = array<i32>} : memref<8x64xf32, #tpu.memory_space<vmem>>, vector<8x64xf32>,
    %32 = vector.extract_strided_slice %30 {offsets = [0, 0], sizes = [8, 32], strides = [1, 1]} : vector<8x64xf32> to vector<8x32xf32>
    %33 = vector.extract_strided_slice %30 {offsets = [0, 32], sizes = [8, 32], strides = [1, 1]} : vector<8x64xf32> to vector<8x32xf32>
    %cst_21 = arith.constant 5.000000e-01 : f32
    %34 = vector.broadcast %cst_21 : f32 to vector<8x32xf32>
    %35 = arith.mulf %33, %34 : vector<8x32xf32>
    %36 = math.exp %35 : vector<8x32xf32>
    %c0_22 = arith.constant 0 : index
    %c0_23 = arith.constant 0 : index
    %37 = vector.load %arg2[%c0_22, %c0_23] : memref<8x32xf32, #tpu.memory_space<vmem>>, vector<8x32xf32>
    %38 = arith.mulf %36, %37 : vector<8x32xf32>
    %39 = arith.addf %32, %38 : vector<8x32xf32>
    %c0_24 = arith.constant 0 : index
    %c0_25 = arith.constant 0 : index
    %40 = vector.load %arg9[%c0_24, %c0_25] : memref<32x300xbf16, #tpu.memory_space<vmem>>, vector<32x300xbf16>
    %41 = arith.truncf %39 : vector<8x32xf32> to vector<8x32xbf16>
    %cst_26 = arith.constant dense<0.000000e+00> : vector<8x300xf32>
    %42 = tpu.matmul %41, %40, %cst_26 {dimension_numbers = #tpu.dot_dimension_numbers<[1], [0], [0], [1], [0, 0, 1, 1], [], []>} : vector<8x32xbf16>, vector<32x300xbf16>, vector<8x300xf32> -> vector<8x300xf32>
    %c0_27 = arith.constant 0 : index
    %c0_28 = arith.constant 0 : index
    %43 = vector.load %arg10[%c0_27, %c0_28] : memref<1x300xf32, #tpu.memory_space<vmem>>, vector<1x300xf32>
    %44 = vector.broadcast %43 : vector<1x300xf32> to vector<8x300xf32>
    %45 = arith.addf %42, %44 : vector<8x300xf32>
    %cst_29 = arith.constant 0.000000e+00 : f32
    %46 = vector.broadcast %cst_29 : f32 to vector<8x300xf32>
    %47 = arith.cmpf ogt, %45, %46 : vector<8x300xf32>
    %48 = math.exp %45 : vector<8x300xf32>
    %cst_30 = arith.constant 1.000000e+00 : f32
    %49 = vector.broadcast %cst_30 : f32 to vector<8x300xf32>
    %50 = arith.subf %48, %49 : vector<8x300xf32>
    %51 = arith.select %47, %45, %50 : vector<8x300xi1>, vector<8x300xf32>
    %c0_31 = arith.constant 0 : index
    %c0_32 = arith.constant 0 : index
    %52 = vector.load %arg11[%c0_31, %c0_32] : memref<300x300xbf16, #tpu.memory_space<vmem>>, vector<300x300xbf16>
    %53 = arith.truncf %51 : vector<8x300xf32> to vector<8x300xbf16>
    %cst_33 = arith.constant dense<0.000000e+00> : vector<8x300xf32>
    %54 = tpu.matmul %53, %52, %cst_33 {dimension_numbers = #tpu.dot_dimension_numbers<[1], [0], [0], [1], [0, 0, 1, 1], [], []>} : vector<8x300xbf16>, vector<300x300xbf16>, vector<8x300xf32> -> vector<8x300xf32>
    %c0_34 = arith.constant 0 : index
    %c0_35 = arith.constant 0 : index
    %55 = vector.load %arg12[%c0_34, %c0_35] : memref<1x300xf32, #tpu.memory_space<vmem>>, vector<1x300xf32>
    %56 = vector.broadcast %55 : vector<1x300xf32> to vector<8x300xf32>
    %57 = arith.addf %54, %56 : vector<8x300xf32>
    %cst_36 = arith.constant 0.000000e+00 : f32
    %58 = vector.broadcast %cst_36 : f32 to vector<8x300xf32>
    %59 = arith.cmpf ogt, %57, %58 : vector<8x300xf32>
    %60 = math.exp %57 : vector<8x300xf32>
    %cst_37 = arith.constant 1.000000e+00 : f32
    %61 = vector.broadcast %cst_37 : f32 to vector<8x300xf32>
    %62 = arith.subf %60, %61 : vector<8x300xf32>
    %63 = arith.select %59, %57, %62 : vector<8x300xi1>, vector<8x300xf32>
    %c0_38 = arith.constant 0 : index
    %c0_39 = arith.constant 0 : index
    %64 = vector.load %arg13[%c0_38, %c0_39] : memref<300x896xbf16, #tpu.memory_space<vmem>>, vector<300x896xbf16>
    %65 = arith.truncf %63 : vector<8x300xf32> to vector<8x300xbf16>
    %cst_40 = arith.constant dense<0.000000e+00> : vector<8x896xf32>
    %66 = tpu.matmul %65, %64, %cst_40 {dimension_numbers = #tpu.dot_dimension_numbers<[1], [0], [0], [1], [0, 0, 1, 1], [], []>} : vector<8x300xbf16>, vector<300x896xbf16>, vector<8x896xf32> -> vector<8x896xf32>
    %c0_41 = arith.constant 0 : index
    %c0_42 = arith.constant 0 : index
    %67 = vector.load %arg14[%c0_41, %c0_42] : memref<1x896xf32, #tpu.memory_space<vmem>>, vector<1x896xf32>
    %68 = vector.broadcast %67 : vector<1x896xf32> to vector<8x896xf32>
    %69 = arith.addf %66, %68 : vector<8x896xf32>
    %c0_43 = arith.constant 0 : index
    %c0_44 = arith.constant 0 : index
    %70 = vector.load %arg16[%c0_43, %c0_44] : memref<8x896xf32, #tpu.memory_space<vmem>>, vector<8x896xf32>
    tpu.vector_store %arg16[%c0_43, %c0_44], %69 {strides = array<i32>} : memref<8x896xf32, #tpu.memory_space<vmem>>, vector<8x896xf32>,
    return
  }
  func.func @transform_0(%arg0: i32) -> (i32, i32) {
    %c0_i32 = arith.constant 0 : i32
    %c0_i32_0 = arith.constant 0 : i32
    return %arg0, %c0_i32 : i32, i32
  }
  func.func @transform_1(%arg0: i32) -> (i32, i32) {
    %c0_i32 = arith.constant 0 : i32
    %c0_i32_0 = arith.constant 0 : i32
    return %arg0, %c0_i32 : i32, i32
  }
  func.func @transform_2(%arg0: i32) -> (i32, i32) {
    %c0_i32 = arith.constant 0 : i32
    %c0_i32_0 = arith.constant 0 : i32
    %c0_i32_1 = arith.constant 0 : i32
    return %c0_i32, %c0_i32_0 : i32, i32
  }
  func.func @transform_3(%arg0: i32) -> (i32, i32) {
    %c0_i32 = arith.constant 0 : i32
    %c0_i32_0 = arith.constant 0 : i32
    %c0_i32_1 = arith.constant 0 : i32
    return %c0_i32, %c0_i32_0 : i32, i32
  }
  func.func @transform_4(%arg0: i32) -> (i32, i32) {
    %c0_i32 = arith.constant 0 : i32
    %c0_i32_0 = arith.constant 0 : i32
    %c0_i32_1 = arith.constant 0 : i32
    return %c0_i32, %c0_i32_0 : i32, i32
  }
  func.func @transform_5(%arg0: i32) -> (i32, i32) {
    %c0_i32 = arith.constant 0 : i32
    %c0_i32_0 = arith.constant 0 : i32
    %c0_i32_1 = arith.constant 0 : i32
    return %c0_i32, %c0_i32_0 : i32, i32
  }
  func.func @transform_6(%arg0: i32) -> (i32, i32) {
    %c0_i32 = arith.constant 0 : i32
    %c0_i32_0 = arith.constant 0 : i32
    %c0_i32_1 = arith.constant 0 : i32
    return %c0_i32, %c0_i32_0 : i32, i32
  }
  func.func @transform_7(%arg0: i32) -> (i32, i32) {
    %c0_i32 = arith.constant 0 : i32
    %c0_i32_0 = arith.constant 0 : i32
    %c0_i32_1 = arith.constant 0 : i32
    return %c0_i32, %c0_i32_0 : i32, i32
  }
  func.func @transform_8(%arg0: i32) -> (i32, i32) {
    %c0_i32 = arith.constant 0 : i32
    %c0_i32_0 = arith.constant 0 : i32
    %c0_i32_1 = arith.constant 0 : i32
    return %c0_i32, %c0_i32_0 : i32, i32
  }
  func.func @transform_9(%arg0: i32) -> (i32, i32) {
    %c0_i32 = arith.constant 0 : i32
    %c0_i32_0 = arith.constant 0 : i32
    %c0_i32_1 = arith.constant 0 : i32
    return %c0_i32, %c0_i32_0 : i32, i32
  }
  func.func @transform_10(%arg0: i32) -> (i32, i32) {
    %c0_i32 = arith.constant 0 : i32
    %c0_i32_0 = arith.constant 0 : i32
    %c0_i32_1 = arith.constant 0 : i32
    return %c0_i32, %c0_i32_0 : i32, i32
  }
  func.func @transform_11(%arg0: i32) -> (i32, i32) {
    %c0_i32 = arith.constant 0 : i32
    %c0_i32_0 = arith.constant 0 : i32
    %c0_i32_1 = arith.constant 0 : i32
    return %c0_i32, %c0_i32_0 : i32, i32
  }
  func.func @transform_12(%arg0: i32) -> (i32, i32) {
    %c0_i32 = arith.constant 0 : i32
    %c0_i32_0 = arith.constant 0 : i32
    %c0_i32_1 = arith.constant 0 : i32
    return %c0_i32, %c0_i32_0 : i32, i32
  }
  func.func @transform_13(%arg0: i32) -> (i32, i32) {
    %c0_i32 = arith.constant 0 : i32
    %c0_i32_0 = arith.constant 0 : i32
    %c0_i32_1 = arith.constant 0 : i32
    return %c0_i32, %c0_i32_0 : i32, i32
  }
  func.func @transform_14(%arg0: i32) -> (i32, i32) {
    %c0_i32 = arith.constant 0 : i32
    %c0_i32_0 = arith.constant 0 : i32
    return %arg0, %c0_i32 : i32, i32
  }
  func.func @transform_15(%arg0: i32) -> (i32, i32) {
    %c0_i32 = arith.constant 0 : i32
    %c0_i32_0 = arith.constant 0 : i32
    return %arg0, %c0_i32 : i32, i32
  }
}

</mosaic_0001>

<llo_original>
// kernel: tpu_custom_call.1
$region0: #{tpu_custom_call.1}
  #allocation0 [shape = 'u32[]', space=smem, size = 0x4, offset = 0x4, fixed_abs, tag = 'smem constant byte address 0x4 - core index']
  #allocation1 [shape = 'u32[144,128]{1,0:T(1,128)}', space=vmem, size = 0x12000, scoped, tag = 'internal scratch']
  %s0 = inlined_call_operand.vmem [shape: f32[8,784], index: 0, kind: input, shape index: {}]
  %s1 = inlined_call_operand.vmem [shape: f32[8,32], index: 1, kind: input, shape index: {}]
  %s2 = inlined_call_operand.vmem [shape: bf16[784,300], index: 2, kind: input, shape index: {}]
  %s3 = inlined_call_operand.vmem [shape: f32[1,300], index: 3, kind: input, shape index: {}]
  %s4 = inlined_call_operand.vmem [shape: bf16[300,300], index: 4, kind: input, shape index: {}]
  %s5 = inlined_call_operand.vmem [shape: f32[1,300], index: 5, kind: input, shape index: {}]
  %s6 = inlined_call_operand.vmem [shape: bf16[300,64], index: 6, kind: input, shape index: {}]
  %s7 = inlined_call_operand.vmem [shape: f32[1,64], index: 7, kind: input, shape index: {}]
  %s8 = inlined_call_operand.vmem [shape: bf16[32,300], index: 8, kind: input, shape index: {}]
  %s9 = inlined_call_operand.vmem [shape: f32[1,300], index: 9, kind: input, shape index: {}]
  %s10 = inlined_call_operand.vmem [shape: bf16[300,300], index: 10, kind: input, shape index: {}]
  %s11 = inlined_call_operand.vmem [shape: f32[1,300], index: 11, kind: input, shape index: {}]
  %s12 = inlined_call_operand.vmem [shape: bf16[300,896], index: 12, kind: input, shape index: {}]
  %s13 = inlined_call_operand.vmem [shape: f32[1,896], index: 13, kind: input, shape index: {}]
  %s14 = inlined_call_operand.hbm [shape: f32[8,64], index: 14, kind: output, shape index: {0}]
  %s15 = inlined_call_operand.hbm [shape: f32[8,896], index: 15, kind: output, shape index: {1}]
  %16 = xla_tuple %s14, %s15
  %s17 = sld [smem:[#allocation0]]
  $region74: #{tpu_custom_call.1} parent=0
    _
  %s19 = ssub.s32 1, %s17
  %s20 = scalar_select 0, %s19, %s17
  $region1: #{tpu_custom_call.1} parent=0
    #allocation2 [shape = 'u8[4096]{0}', space=vmem, size = 0x1000, scoped, tag = 'output window, operand 0, single buffered']
    #allocation3 [shape = 's32[1]{0}', space=sflag, size = 0x4, scoped, tag = 'scoped memory for tpu_custom_call.1']
    #allocation4 [shape = 'u8[28672]{0}', space=vmem, size = 0x7000, scoped, tag = 'output window, operand 1, single buffered']
    #allocation5 [shape = 's32[1]{0}', space=sflag, size = 0x4, scoped, tag = 'scoped memory for tpu_custom_call.1']
    %21 = vsyncpa [#allocation3], 0
    %22 = vsyncpa [#allocation5], 0
    // Predicated region
    $region2: #{tpu_custom_call.1} parent=1 // pred_check
      _
    $region3: #{tpu_custom_call.1} parent=1 // pred_check_branch
      %24 = sbr.rel (0) target = $region5
    $region4: #{tpu_custom_call.1} parent=1 // pred_region
      _
    $region5: #{tpu_custom_call.1} parent=1 // pred_fallthru
      _
    // Predicated region
    $region6: #{tpu_custom_call.1} parent=1 // pred_check
      _
    $region7: #{tpu_custom_call.1} parent=1 // pred_check_branch
      %26 = sbr.rel (0) target = $region9
    $region8: #{tpu_custom_call.1} parent=1 // pred_region
      _
    $region9: #{tpu_custom_call.1} parent=1 // pred_fallthru
      _
    // Predicated region
    $region10: #{tpu_custom_call.1} parent=1 // pred_check
      _
    $region11: #{tpu_custom_call.1} parent=1 // pred_check_branch
      %28 = sbr.rel (0) target = $region13
    $region12: #{tpu_custom_call.1} parent=1 // pred_region
      _
    $region13: #{tpu_custom_call.1} parent=1 // pred_fallthru
      _
    // Predicated region
    $region14: #{tpu_custom_call.1} parent=1 // pred_check
      _
    $region15: #{tpu_custom_call.1} parent=1 // pred_check_branch
      %30 = sbr.rel (0) target = $region17
    $region16: #{tpu_custom_call.1} parent=1 // pred_region
      _
    $region17: #{tpu_custom_call.1} parent=1 // pred_fallthru
      _
    // Predicated region
    $region18: #{tpu_custom_call.1} parent=1 // pred_check
      _
    $region19: #{tpu_custom_call.1} parent=1 // pred_check_branch
      %32 = sbr.rel (0) target = $region21
    $region20: #{tpu_custom_call.1} parent=1 // pred_region
      _
    $region21: #{tpu_custom_call.1} parent=1 // pred_fallthru
      _
    // Predicated region
    $region22: #{tpu_custom_call.1} parent=1 // pred_check
      _
    $region23: #{tpu_custom_call.1} parent=1 // pred_check_branch
      %34 = sbr.rel (0) target = $region25
    $region24: #{tpu_custom_call.1} parent=1 // pred_region
      _
    $region25: #{tpu_custom_call.1} parent=1 // pred_fallthru
      _
    // Predicated region
    $region26: #{tpu_custom_call.1} parent=1 // pred_check
      _
    $region27: #{tpu_custom_call.1} parent=1 // pred_check_branch
      %36 = sbr.rel (0) target = $region29
    $region28: #{tpu_custom_call.1} parent=1 // pred_region
      _
    $region29: #{tpu_custom_call.1} parent=1 // pred_fallthru
      _
    // Predicated region
    $region30: #{tpu_custom_call.1} parent=1 // pred_check
      _
    $region31: #{tpu_custom_call.1} parent=1 // pred_check_branch
      %38 = sbr.rel (0) target = $region33
    $region32: #{tpu_custom_call.1} parent=1 // pred_region
      _
    $region33: #{tpu_custom_call.1} parent=1 // pred_fallthru
      _
    // Predicated region
    $region34: #{tpu_custom_call.1} parent=1 // pred_check
      _
    $region35: #{tpu_custom_call.1} parent=1 // pred_check_branch
      %40 = sbr.rel (0) target = $region37
    $region36: #{tpu_custom_call.1} parent=1 // pred_region
      _
    $region37: #{tpu_custom_call.1} parent=1 // pred_fallthru
      _
    // Predicated region
    $region38: #{tpu_custom_call.1} parent=1 // pred_check
      _
    $region39: #{tpu_custom_call.1} parent=1 // pred_check_branch
      %42 = sbr.rel (0) target = $region41
    $region40: #{tpu_custom_call.1} parent=1 // pred_region
      _
    $region41: #{tpu_custom_call.1} parent=1 // pred_fallthru
      _
    // Predicated region
    $region42: #{tpu_custom_call.1} parent=1 // pred_check
      _
    $region43: #{tpu_custom_call.1} parent=1 // pred_check_branch
      %44 = sbr.rel (0) target = $region45
    $region44: #{tpu_custom_call.1} parent=1 // pred_region
      _
    $region45: #{tpu_custom_call.1} parent=1 // pred_fallthru
      _
    // Predicated region
    $region46: #{tpu_custom_call.1} parent=1 // pred_check
      _
    $region47: #{tpu_custom_call.1} parent=1 // pred_check_branch
      %46 = sbr.rel (0) target = $region49
    $region48: #{tpu_custom_call.1} parent=1 // pred_region
      _
    $region49: #{tpu_custom_call.1} parent=1 // pred_fallthru
      _
    // Predicated region
    $region50: #{tpu_custom_call.1} parent=1 // pred_check
      _
    $region51: #{tpu_custom_call.1} parent=1 // pred_check_branch
      %48 = sbr.rel (0) target = $region53
    $region52: #{tpu_custom_call.1} parent=1 // pred_region
      _
    $region53: #{tpu_custom_call.1} parent=1 // pred_fallthru
      _
    // Predicated region
    $region54: #{tpu_custom_call.1} parent=1 // pred_check
      _
    $region55: #{tpu_custom_call.1} parent=1 // pred_check_branch
      %50 = sbr.rel (0) target = $region57
    $region56: #{tpu_custom_call.1} parent=1 // pred_region
      _
    $region57: #{tpu_custom_call.1} parent=1 // pred_fallthru
      _
    %v52 = vld [vmem:[%s0] sm:$0xff]
    %v53 = vld [vmem:[%s0 + $0x8] sm:$0xff]
    %v54 = vld [vmem:[%s0 + $0x10] sm:$0xff]
    %v55 = vld [vmem:[%s0 + $0x18] sm:$0xff]
    %v56 = vld [vmem:[%s0 + $0x20] sm:$0xff]
    %v57 = vld [vmem:[%s0 + $0x28] sm:$0xff]
    %v58 = vld [vmem:[%s0 + $0x30] sm:$0xff]
    %v59 = vld [vmem:[%s2] sm:$0xff]
    %v60 = vld [vmem:[%s2 + $0x8] sm:$0xf]
    %v61 = vld [vmem:[%s2 + $0xc] sm:$0xff]
    %v62 = vld [vmem:[%s2 + $0x14] sm:$0xf]
    %v63 = vld [vmem:[%s2 + $0x18] sm:$0xff]
    %v64 = vld [vmem:[%s2 + $0x20] sm:$0xf]
    %v65 = vld [vmem:[%s2 + $0x24] sm:$0xff]
    %v66 = vld [vmem:[%s2 + $0x2c] sm:$0xf]
    %v67 = vld [vmem:[%s2 + $0x30] sm:$0xff]
    %v68 = vld [vmem:[%s2 + $0x38] sm:$0xf]
    %v69 = vld [vmem:[%s2 + $0x3c] sm:$0xff]
    %v70 = vld [vmem:[%s2 + $0x44] sm:$0xf]
    %v71 = vld [vmem:[%s2 + $0x48] sm:$0xff]
    %v72 = vld [vmem:[%s2 + $0x50] sm:$0xf]
    %v73 = vld [vmem:[%s2 + $0x54] sm:$0xff]
    %v74 = vld [vmem:[%s2 + $0x5c] sm:$0xf]
    %v75 = vld [vmem:[%s2 + $0x60] sm:$0xff]
    %v76 = vld [vmem:[%s2 + $0x68] sm:$0xf]
    %v77 = vld [vmem:[%s2 + $0x6c] sm:$0xff]
    %v78 = vld [vmem:[%s2 + $0x74] sm:$0xf]
    %v79 = vld [vmem:[%s2 + $0x78] sm:$0xff]
    %v80 = vld [vmem:[%s2 + $0x80] sm:$0xf]
    %v81 = vld [vmem:[%s2 + $0x84] sm:$0xff]
    %v82 = vld [vmem:[%s2 + $0x8c] sm:$0xf]
    %v83 = vld [vmem:[%s2 + $0x90] sm:$0xff]
    %v84 = vld [vmem:[%s2 + $0x98] sm:$0xf]
    %v85 = vld [vmem:[%s2 + $0x9c] sm:$0xff]
    %v86 = vld [vmem:[%s2 + $0xa4] sm:$0xf]
    %v87 = vld [vmem:[%s2 + $0xa8] sm:$0xff]
    %v88 = vld [vmem:[%s2 + $0xb0] sm:$0xf]
    %v89 = vld [vmem:[%s2 + $0xb4] sm:$0xff]
    %v90 = vld [vmem:[%s2 + $0xbc] sm:$0xf]
    %v91 = vld [vmem:[%s2 + $0xc0] sm:$0xff]
    %v92 = vld [vmem:[%s2 + $0xc8] sm:$0xf]
    %v93 = vld [vmem:[%s2 + $0xcc] sm:$0xff]
    %v94 = vld [vmem:[%s2 + $0xd4] sm:$0xf]
    %v95 = vld [vmem:[%s2 + $0xd8] sm:$0xff]
    %v96 = vld [vmem:[%s2 + $0xe0] sm:$0xf]
    %v97 = vld [vmem:[%s2 + $0xe4] sm:$0xff]
    %v98 = vld [vmem:[%s2 + $0xec] sm:$0xf]
    %v99 = vld [vmem:[%s2 + $0xf0] sm:$0xff]
    %v100 = vld [vmem:[%s2 + $0xf8] sm:$0xf]
    %v101 = vld [vmem:[%s2 + $0xfc] sm:$0xff]
    %v102 = vld [vmem:[%s2 + $0x104] sm:$0xf]
    %v103 = vld [vmem:[%s2 + $0x108] sm:$0xff]
    %v104 = vld [vmem:[%s2 + $0x110] sm:$0xf]
    %v105 = vld [vmem:[%s2 + $0x114] sm:$0xff]
    %v106 = vld [vmem:[%s2 + $0x11c] sm:$0xf]
    %v107 = vld [vmem:[%s2 + $0x120] sm:$0xff]
    %v108 = vld [vmem:[%s2 + $0x128] sm:$0xf]
    %v109 = vld [vmem:[%s2 + $0x12c] sm:$0xff]
    %v110 = vld [vmem:[%s2 + $0x134] sm:$0xf]
    %v111 = vld [vmem:[%s2 + $0x138] sm:$0xff]
    %v112 = vld [vmem:[%s2 + $0x140] sm:$0xf]
    %v113 = vld [vmem:[%s2 + $0x144] sm:$0xff]
    %v114 = vld [vmem:[%s2 + $0x14c] sm:$0xf]
    %v115 = vld [vmem:[%s2 + $0x150] sm:$0xff]
    %v116 = vld [vmem:[%s2 + $0x158] sm:$0xf]
    %v117 = vld [vmem:[%s2 + $0x15c] sm:$0xff]
    %v118 = vld [vmem:[%s2 + $0x164] sm:$0xf]
    %v119 = vld [vmem:[%s2 + $0x168] sm:$0xff]
    %v120 = vld [vmem:[%s2 + $0x170] sm:$0xf]
    %v121 = vld [vmem:[%s2 + $0x174] sm:$0xff]
    %v122 = vld [vmem:[%s2 + $0x17c] sm:$0xf]
    %v123 = vld [vmem:[%s2 + $0x180] sm:$0xff]
    %v124 = vld [vmem:[%s2 + $0x188] sm:$0xf]
    %v125 = vld [vmem:[%s2 + $0x18c] sm:$0xff]
    %v126 = vld [vmem:[%s2 + $0x194] sm:$0xf]
    %v127 = vld [vmem:[%s2 + $0x198] sm:$0xff]
    %v128 = vld [vmem:[%s2 + $0x1a0] sm:$0xf]
    %v129 = vld [vmem:[%s2 + $0x1a4] sm:$0xff]
    %v130 = vld [vmem:[%s2 + $0x1ac] sm:$0xf]
    %v131 = vld [vmem:[%s2 + $0x1b0] sm:$0xff]
    %v132 = vld [vmem:[%s2 + $0x1b8] sm:$0xf]
    %v133 = vld [vmem:[%s2 + $0x1bc] sm:$0xff]
    %v134 = vld [vmem:[%s2 + $0x1c4] sm:$0xf]
    %v135 = vld [vmem:[%s2 + $0x1c8] sm:$0xff]
    %v136 = vld [vmem:[%s2 + $0x1d0] sm:$0xf]
    %v137 = vld [vmem:[%s2 + $0x1d4] sm:$0xff]
    %v138 = vld [vmem:[%s2 + $0x1dc] sm:$0xf]
    %v139 = vld [vmem:[%s2 + $0x1e0] sm:$0xff]
    %v140 = vld [vmem:[%s2 + $0x1e8] sm:$0xf]
    %v141 = vld [vmem:[%s2 + $0x1ec] sm:$0xff]
    %v142 = vld [vmem:[%s2 + $0x1f4] sm:$0xf]
    %v143 = vld [vmem:[%s2 + $0x1f8] sm:$0xff]
    %v144 = vld [vmem:[%s2 + $0x200] sm:$0xf]
    %v145 = vld [vmem:[%s2 + $0x204] sm:$0xff]
    %v146 = vld [vmem:[%s2 + $0x20c] sm:$0xf]
    %v147 = vld [vmem:[%s2 + $0x210] sm:$0xff]
    %v148 = vld [vmem:[%s2 + $0x218] sm:$0xf]
    %v149 = vld [vmem:[%s2 + $0x21c] sm:$0xff]
    %v150 = vld [vmem:[%s2 + $0x224] sm:$0xf]
    %v151 = vld [vmem:[%s2 + $0x228] sm:$0xff]
    %v152 = vld [vmem:[%s2 + $0x230] sm:$0xf]
    %v153 = vld [vmem:[%s2 + $0x234] sm:$0xff]
    %v154 = vld [vmem:[%s2 + $0x23c] sm:$0xf]
    %v155 = vld [vmem:[%s2 + $0x240] sm:$0xff]
    %v156 = vld [vmem:[%s2 + $0x248] sm:$0xf]
    %v157 = vld [vmem:[%s2 + $0x24c] sm:$0xff]
    %v158 = vld [vmem:[%s2 + $0x254] sm:$0xf]
    %v159 = vld [vmem:[%s2 + $0x258] sm:$0xff]
    %v160 = vld [vmem:[%s2 + $0x260] sm:$0xf]
    %v161 = vld [vmem:[%s2 + $0x264] sm:$0xff]
    %v162 = vld [vmem:[%s2 + $0x26c] sm:$0xf]
    %v163 = vld [vmem:[%s2 + $0x270] sm:$0xff]
    %v164 = vld [vmem:[%s2 + $0x278] sm:$0xf]
    %v165 = vld [vmem:[%s2 + $0x27c] sm:$0xff]
    %v166 = vld [vmem:[%s2 + $0x284] sm:$0xf]
    %v167 = vld [vmem:[%s2 + $0x288] sm:$0xff]
    %v168 = vld [vmem:[%s2 + $0x290] sm:$0xf]
    %v169 = vld [vmem:[%s2 + $0x294] sm:$0xff]
    %v170 = vld [vmem:[%s2 + $0x29c] sm:$0xf]
    %v171 = vld [vmem:[%s2 + $0x2a0] sm:$0xff]
    %v172 = vld [vmem:[%s2 + $0x2a8] sm:$0xf]
    %v173 = vld [vmem:[%s2 + $0x2ac] sm:$0xff]
    %v174 = vld [vmem:[%s2 + $0x2b4] sm:$0xf]
    %v175 = vld [vmem:[%s2 + $0x2b8] sm:$0xff]
    %v176 = vld [vmem:[%s2 + $0x2c0] sm:$0xf]
    %v177 = vld [vmem:[%s2 + $0x2c4] sm:$0xff]
    %v178 = vld [vmem:[%s2 + $0x2cc] sm:$0xf]
    %v179 = vld [vmem:[%s2 + $0x2d0] sm:$0xff]
    %v180 = vld [vmem:[%s2 + $0x2d8] sm:$0xf]
    %v181 = vld [vmem:[%s2 + $0x2dc] sm:$0xff]
    %v182 = vld [vmem:[%s2 + $0x2e4] sm:$0xf]
    %v183 = vld [vmem:[%s2 + $0x2e8] sm:$0xff]
    %v184 = vld [vmem:[%s2 + $0x2f0] sm:$0xf]
    %v185 = vld [vmem:[%s2 + $0x2f4] sm:$0xff]
    %v186 = vld [vmem:[%s2 + $0x2fc] sm:$0xf]
    %v187 = vld [vmem:[%s2 + $0x300] sm:$0xff]
    %v188 = vld [vmem:[%s2 + $0x308] sm:$0xf]
    %v189 = vld [vmem:[%s2 + $0x30c] sm:$0xff]
    %v190 = vld [vmem:[%s2 + $0x314] sm:$0xf]
    %v191 = vld [vmem:[%s2 + $0x318] sm:$0xff]
    %v192 = vld [vmem:[%s2 + $0x320] sm:$0xf]
    %v193 = vld [vmem:[%s2 + $0x324] sm:$0xff]
    %v194 = vld [vmem:[%s2 + $0x32c] sm:$0xf]
    %v195 = vld [vmem:[%s2 + $0x330] sm:$0xff]
    %v196 = vld [vmem:[%s2 + $0x338] sm:$0xf]
    %v197 = vld [vmem:[%s2 + $0x33c] sm:$0xff]
    %v198 = vld [vmem:[%s2 + $0x344] sm:$0xf]
    %v199 = vld [vmem:[%s2 + $0x348] sm:$0xff]
    %v200 = vld [vmem:[%s2 + $0x350] sm:$0xf]
    %v201 = vld [vmem:[%s2 + $0x354] sm:$0xff]
    %v202 = vld [vmem:[%s2 + $0x35c] sm:$0xf]
    %v203 = vld [vmem:[%s2 + $0x360] sm:$0xff]
    %v204 = vld [vmem:[%s2 + $0x368] sm:$0xf]
    %v205 = vld [vmem:[%s2 + $0x36c] sm:$0xff]
    %v206 = vld [vmem:[%s2 + $0x374] sm:$0xf]
    %v207 = vld [vmem:[%s2 + $0x378] sm:$0xff]
    %v208 = vld [vmem:[%s2 + $0x380] sm:$0xf]
    %v209 = vld [vmem:[%s2 + $0x384] sm:$0xff]
    %v210 = vld [vmem:[%s2 + $0x38c] sm:$0xf]
    %v211 = vld [vmem:[%s2 + $0x390] sm:$0xff]
    %v212 = vld [vmem:[%s2 + $0x398] sm:$0xf]
    %v213 = vld [vmem:[%s2 + $0x39c] sm:$0xff]
    %v214 = vld [vmem:[%s2 + $0x3a4] sm:$0xf]
    %v215 = vld [vmem:[%s2 + $0x3a8] sm:$0xff]
    %v216 = vld [vmem:[%s2 + $0x3b0] sm:$0xf]
    %v217 = vld [vmem:[%s2 + $0x3b4] sm:$0xff]
    %v218 = vld [vmem:[%s2 + $0x3bc] sm:$0xf]
    %v219 = vld [vmem:[%s2 + $0x3c0] sm:$0xff]
    %v220 = vld [vmem:[%s2 + $0x3c8] sm:$0xf]
    %v221 = vld [vmem:[%s2 + $0x3cc] sm:$0xff]
    %v222 = vld [vmem:[%s2 + $0x3d4] sm:$0xf]
    %v223 = vld [vmem:[%s2 + $0x3d8] sm:$0xff]
    %v224 = vld [vmem:[%s2 + $0x3e0] sm:$0xf]
    %v225 = vld [vmem:[%s2 + $0x3e4] sm:$0xff]
    %v226 = vld [vmem:[%s2 + $0x3ec] sm:$0xf]
    %v227 = vld [vmem:[%s2 + $0x3f0] sm:$0xff]
    %v228 = vld [vmem:[%s2 + $0x3f8] sm:$0xf]
    %v229 = vld [vmem:[%s2 + $0x3fc] sm:$0xff]
    %v230 = vld [vmem:[%s2 + $0x404] sm:$0xf]
    %v231 = vld [vmem:[%s2 + $0x408] sm:$0xff]
    %v232 = vld [vmem:[%s2 + $0x410] sm:$0xf]
    %v233 = vld [vmem:[%s2 + $0x414] sm:$0xff]
    %v234 = vld [vmem:[%s2 + $0x41c] sm:$0xf]
    %v235 = vld [vmem:[%s2 + $0x420] sm:$0xff]
    %v236 = vld [vmem:[%s2 + $0x428] sm:$0xf]
    %v237 = vld [vmem:[%s2 + $0x42c] sm:$0xff]
    %v238 = vld [vmem:[%s2 + $0x434] sm:$0xf]
    %v239 = vld [vmem:[%s2 + $0x438] sm:$0xff]
    %v240 = vld [vmem:[%s2 + $0x440] sm:$0xf]
    %v241 = vld [vmem:[%s2 + $0x444] sm:$0xff]
    %v242 = vld [vmem:[%s2 + $0x44c] sm:$0xf]
    %v243 = vld [vmem:[%s2 + $0x450] sm:$0xff]
    %v244 = vld [vmem:[%s2 + $0x458] sm:$0xf]
    %v245 = vld [vmem:[%s2 + $0x45c] sm:$0xff]
    %v246 = vld [vmem:[%s2 + $0x464] sm:$0xf]
    %v247 = vld [vmem:[%s2 + $0x468] sm:$0xff]
    %v248 = vld [vmem:[%s2 + $0x470] sm:$0xf]
    %v249 = vld [vmem:[%s2 + $0x474] sm:$0xff]
    %v250 = vld [vmem:[%s2 + $0x47c] sm:$0xf]
    %v251 = vld [vmem:[%s2 + $0x480] sm:$0xff]
    %v252 = vld [vmem:[%s2 + $0x488] sm:$0xf]
    %v253 = vld [vmem:[%s2 + $0x48c] sm:$0xff]
    %v254 = vld [vmem:[%s2 + $0x494] sm:$0xf]
    %v255 = vpack.c.bf16 %v52, %v52
    %v256 = vpack.c.bf16 %v53, %v53
    %v257 = vpack.c.bf16 %v54, %v54
    %v258 = vpack.c.bf16 %v55, %v55
    %v259 = vpack.c.bf16 %v56, %v56
    %v260 = vpack.c.bf16 %v57, %v57
    %v261 = vpack.c.bf16 %v58, %v58
    %v262 = vld [vmem:[%s3] sm:$0x7]
    %v264 = vlaneseq
    %v265 = vshrl.u32 %v264, 7
    %v266 = vsub.s32 0, %v265
    %v267 = vrot.slane %v262, %v266
    %v268 = vlaneseq
    %v269 = vshrl.u32 %v268, 7
    %v270 = vsub.s32 1, %v269
    %v271 = vrot.slane %v262, %v270
    %v272 = vlaneseq
    %v273 = vshrl.u32 %v272, 7
    %v274 = vsub.s32 2, %v273
    %v275 = vrot.slane %v262, %v274
    %v475 = vunpack.c.l.b16 %v59
    %v476 = vunpack.c.h.b16 %v59
    %v477 = vunpack.c.l.b16 %v60
    %v478 = vunpack.c.l.b16 %v61
    %v479 = vunpack.c.h.b16 %v61
    %v480 = vunpack.c.l.b16 %v62
    %v481 = vunpack.c.l.b16 %v63
    %v482 = vunpack.c.h.b16 %v63
    %v483 = vunpack.c.l.b16 %v64
    %v484 = vunpack.c.l.b16 %v65
    %v485 = vunpack.c.h.b16 %v65
    %v486 = vunpack.c.l.b16 %v66
    %v487 = vunpack.c.l.b16 %v67
    %v488 = vunpack.c.h.b16 %v67
    %v489 = vunpack.c.l.b16 %v68
    %v490 = vunpack.c.l.b16 %v69
    %v491 = vunpack.c.h.b16 %v69
    %v492 = vunpack.c.l.b16 %v70
    %v493 = vunpack.c.l.b16 %v71
    %v494 = vunpack.c.h.b16 %v71
    %v495 = vunpack.c.l.b16 %v72
    %v496 = vunpack.c.l.b16 %v73
    %v497 = vunpack.c.h.b16 %v73
    %v498 = vunpack.c.l.b16 %v74
    %v499 = vunpack.c.l.b16 %v75
    %v500 = vunpack.c.h.b16 %v75
    %v501 = vunpack.c.l.b16 %v76
    %v502 = vunpack.c.l.b16 %v77
    %v503 = vunpack.c.h.b16 %v77
    %v504 = vunpack.c.l.b16 %v78
    %v505 = vunpack.c.l.b16 %v79
    %v506 = vunpack.c.h.b16 %v79
    %v507 = vunpack.c.l.b16 %v80
    %v508 = vunpack.c.l.b16 %v81
    %v509 = vunpack.c.h.b16 %v81
    %v510 = vunpack.c.l.b16 %v82
    %v511 = vunpack.c.l.b16 %v83
    %v512 = vunpack.c.h.b16 %v83
    %v513 = vunpack.c.l.b16 %v84
    %v514 = vunpack.c.l.b16 %v85
    %v515 = vunpack.c.h.b16 %v85
    %v516 = vunpack.c.l.b16 %v86
    %v517 = vunpack.c.l.b16 %v87
    %v518 = vunpack.c.h.b16 %v87
    %v519 = vunpack.c.l.b16 %v88
    %v520 = vunpack.c.l.b16 %v89
    %v521 = vunpack.c.h.b16 %v89
    %v522 = vunpack.c.l.b16 %v90
    %v523 = vunpack.c.l.b16 %v91
    %v524 = vunpack.c.h.b16 %v91
    %v525 = vunpack.c.l.b16 %v92
    %v526 = vunpack.c.l.b16 %v93
    %v527 = vunpack.c.h.b16 %v93
    %v528 = vunpack.c.l.b16 %v94
    %v529 = vunpack.c.l.b16 %v95
    %v530 = vunpack.c.h.b16 %v95
    %v531 = vunpack.c.l.b16 %v96
    %v532 = vunpack.c.l.b16 %v97
    %v533 = vunpack.c.h.b16 %v97
    %v534 = vunpack.c.l.b16 %v98
    %v535 = vunpack.c.l.b16 %v99
    %v536 = vunpack.c.h.b16 %v99
    %v537 = vunpack.c.l.b16 %v100
    %v538 = vunpack.c.l.b16 %v101
    %v539 = vunpack.c.h.b16 %v101
    %v540 = vunpack.c.l.b16 %v102
    %v541 = vunpack.c.l.b16 %v103
    %v542 = vunpack.c.h.b16 %v103
    %v543 = vunpack.c.l.b16 %v104
    %v544 = vunpack.c.l.b16 %v105
    %v545 = vunpack.c.h.b16 %v105
    %v546 = vunpack.c.l.b16 %v106
    %v547 = vunpack.c.l.b16 %v107
    %v548 = vunpack.c.h.b16 %v107
    %v549 = vunpack.c.l.b16 %v108
    %v550 = vunpack.c.l.b16 %v109
    %v551 = vunpack.c.h.b16 %v109
    %v552 = vunpack.c.l.b16 %v110
    %v553 = vunpack.c.l.b16 %v111
    %v554 = vunpack.c.h.b16 %v111
    %v555 = vunpack.c.l.b16 %v112
    %v556 = vunpack.c.l.b16 %v113
    %v557 = vunpack.c.h.b16 %v113
    %v558 = vunpack.c.l.b16 %v114
    %v559 = vunpack.c.l.b16 %v115
    %v560 = vunpack.c.h.b16 %v115
    %v561 = vunpack.c.l.b16 %v116
    %v562 = vunpack.c.l.b16 %v117
    %v563 = vunpack.c.h.b16 %v117
    %v564 = vunpack.c.l.b16 %v118
    %v565 = vunpack.c.l.b16 %v119
    %v566 = vunpack.c.h.b16 %v119
    %v567 = vunpack.c.l.b16 %v120
    %v568 = vunpack.c.l.b16 %v121
    %v569 = vunpack.c.h.b16 %v121
    %v570 = vunpack.c.l.b16 %v122
    %v571 = vunpack.c.l.b16 %v123
    %v572 = vunpack.c.h.b16 %v123
    %v573 = vunpack.c.l.b16 %v124
    %v574 = vunpack.c.l.b16 %v125
    %v575 = vunpack.c.h.b16 %v125
    %v576 = vunpack.c.l.b16 %v126
    %v577 = vunpack.c.l.b16 %v127
    %v578 = vunpack.c.h.b16 %v127
    %v579 = vunpack.c.l.b16 %v128
    %v580 = vunpack.c.l.b16 %v129
    %v581 = vunpack.c.h.b16 %v129
    %v582 = vunpack.c.l.b16 %v130
    %v583 = vunpack.c.l.b16 %v131
    %v584 = vunpack.c.h.b16 %v131
    %v585 = vunpack.c.l.b16 %v132
    %v586 = vunpack.c.l.b16 %v133
    %v587 = vunpack.c.h.b16 %v133
    %v588 = vunpack.c.l.b16 %v134
    %v589 = vunpack.c.l.b16 %v135
    %v590 = vunpack.c.h.b16 %v135
    %v591 = vunpack.c.l.b16 %v136
    %v592 = vunpack.c.l.b16 %v137
    %v593 = vunpack.c.h.b16 %v137
    %v594 = vunpack.c.l.b16 %v138
    %v595 = vunpack.c.l.b16 %v139
    %v596 = vunpack.c.h.b16 %v139
    %v597 = vunpack.c.l.b16 %v140
    %v598 = vunpack.c.l.b16 %v141
    %v599 = vunpack.c.h.b16 %v141
    %v600 = vunpack.c.l.b16 %v142
    %v601 = vunpack.c.l.b16 %v143
    %v602 = vunpack.c.h.b16 %v143
    %v603 = vunpack.c.l.b16 %v144
    %v604 = vunpack.c.l.b16 %v145
    %v605 = vunpack.c.h.b16 %v145
    %v606 = vunpack.c.l.b16 %v146
    %v607 = vunpack.c.l.b16 %v147
    %v608 = vunpack.c.h.b16 %v147
    %v609 = vunpack.c.l.b16 %v148
    %v610 = vunpack.c.l.b16 %v149
    %v611 = vunpack.c.h.b16 %v149
    %v612 = vunpack.c.l.b16 %v150
    %v613 = vunpack.c.l.b16 %v151
    %v614 = vunpack.c.h.b16 %v151
    %v615 = vunpack.c.l.b16 %v152
    %v616 = vunpack.c.l.b16 %v153
    %v617 = vunpack.c.h.b16 %v153
    %v618 = vunpack.c.l.b16 %v154
    %v619 = vunpack.c.l.b16 %v155
    %v620 = vunpack.c.h.b16 %v155
    %v621 = vunpack.c.l.b16 %v156
    %v622 = vunpack.c.l.b16 %v157
    %v623 = vunpack.c.h.b16 %v157
    %v624 = vunpack.c.l.b16 %v158
    %v625 = vunpack.c.l.b16 %v159
    %v626 = vunpack.c.h.b16 %v159
    %v627 = vunpack.c.l.b16 %v160
    %v628 = vunpack.c.l.b16 %v161
    %v629 = vunpack.c.h.b16 %v161
    %v630 = vunpack.c.l.b16 %v162
    %v631 = vunpack.c.l.b16 %v163
    %v632 = vunpack.c.h.b16 %v163
    %v633 = vunpack.c.l.b16 %v164
    %v634 = vunpack.c.l.b16 %v165
    %v635 = vunpack.c.h.b16 %v165
    %v636 = vunpack.c.l.b16 %v166
    %v637 = vunpack.c.l.b16 %v167
    %v638 = vunpack.c.h.b16 %v167
    %v639 = vunpack.c.l.b16 %v168
    %v640 = vunpack.c.l.b16 %v169
    %v641 = vunpack.c.h.b16 %v169
    %v642 = vunpack.c.l.b16 %v170
    %v643 = vunpack.c.l.b16 %v171
    %v644 = vunpack.c.h.b16 %v171
    %v645 = vunpack.c.l.b16 %v172
    %v646 = vunpack.c.l.b16 %v173
    %v647 = vunpack.c.h.b16 %v173
    %v648 = vunpack.c.l.b16 %v174
    %v649 = vunpack.c.l.b16 %v175
    %v650 = vunpack.c.h.b16 %v175
    %v651 = vunpack.c.l.b16 %v176
    %v652 = vunpack.c.l.b16 %v177
    %v653 = vunpack.c.h.b16 %v177
    %v654 = vunpack.c.l.b16 %v178
    %v655 = vunpack.c.l.b16 %v179
    %v656 = vunpack.c.h.b16 %v179
    %v657 = vunpack.c.l.b16 %v180
    %v658 = vunpack.c.l.b16 %v181
    %v659 = vunpack.c.h.b16 %v181
    %v660 = vunpack.c.l.b16 %v182
    %v661 = vunpack.c.l.b16 %v183
    %v662 = vunpack.c.h.b16 %v183
    %v663 = vunpack.c.l.b16 %v184
    %v664 = vunpack.c.l.b16 %v185
    %v665 = vunpack.c.h.b16 %v185
    %v666 = vunpack.c.l.b16 %v186
    %v667 = vunpack.c.l.b16 %v187
    %v668 = vunpack.c.h.b16 %v187
    %v669 = vunpack.c.l.b16 %v188
    %v670 = vunpack.c.l.b16 %v189
    %v671 = vunpack.c.h.b16 %v189
    %v672 = vunpack.c.l.b16 %v190
    %v673 = vunpack.c.l.b16 %v191
    %v674 = vunpack.c.h.b16 %v191
    %v675 = vunpack.c.l.b16 %v192
    %v676 = vunpack.c.l.b16 %v193
    %v677 = vunpack.c.h.b16 %v193
    %v678 = vunpack.c.l.b16 %v194
    %v679 = vunpack.c.l.b16 %v195
    %v680 = vunpack.c.h.b16 %v195
    %v681 = vunpack.c.l.b16 %v196
    %v682 = vunpack.c.l.b16 %v197
    %v683 = vunpack.c.h.b16 %v197
    %v684 = vunpack.c.l.b16 %v198
    %v685 = vunpack.c.l.b16 %v199
    %v686 = vunpack.c.h.b16 %v199
    %v687 = vunpack.c.l.b16 %v200
    %v688 = vunpack.c.l.b16 %v201
    %v689 = vunpack.c.h.b16 %v201
    %v690 = vunpack.c.l.b16 %v202
    %v691 = vunpack.c.l.b16 %v203
    %v692 = vunpack.c.h.b16 %v203
    %v693 = vunpack.c.l.b16 %v204
    %v694 = vunpack.c.l.b16 %v205
    %v695 = vunpack.c.h.b16 %v205
    %v696 = vunpack.c.l.b16 %v206
    %v697 = vunpack.c.l.b16 %v207
    %v698 = vunpack.c.h.b16 %v207
    %v699 = vunpack.c.l.b16 %v208
    %v700 = vunpack.c.l.b16 %v209
    %v701 = vunpack.c.h.b16 %v209
    %v702 = vunpack.c.l.b16 %v210
    %v703 = vunpack.c.l.b16 %v211
    %v704 = vunpack.c.h.b16 %v211
    %v705 = vunpack.c.l.b16 %v212
    %v706 = vunpack.c.l.b16 %v213
    %v707 = vunpack.c.h.b16 %v213
    %v708 = vunpack.c.l.b16 %v214
    %v709 = vunpack.c.l.b16 %v215
    %v710 = vunpack.c.h.b16 %v215
    %v711 = vunpack.c.l.b16 %v216
    %v712 = vunpack.c.l.b16 %v217
    %v713 = vunpack.c.h.b16 %v217
    %v714 = vunpack.c.l.b16 %v218
    %v715 = vunpack.c.l.b16 %v219
    %v716 = vunpack.c.h.b16 %v219
    %v717 = vunpack.c.l.b16 %v220
    %v718 = vunpack.c.l.b16 %v221
    %v719 = vunpack.c.h.b16 %v221
    %v720 = vunpack.c.l.b16 %v222
    %v721 = vunpack.c.l.b16 %v223
    %v722 = vunpack.c.h.b16 %v223
    %v723 = vunpack.c.l.b16 %v224
    %v724 = vunpack.c.l.b16 %v225
    %v725 = vunpack.c.h.b16 %v225
    %v726 = vunpack.c.l.b16 %v226
    %v727 = vunpack.c.l.b16 %v227
    %v728 = vunpack.c.h.b16 %v227
    %v729 = vunpack.c.l.b16 %v228
    %v730 = vunpack.c.l.b16 %v229
    %v731 = vunpack.c.h.b16 %v229
    %v732 = vunpack.c.l.b16 %v230
    %v733 = vunpack.c.l.b16 %v231
    %v734 = vunpack.c.h.b16 %v231
    %v735 = vunpack.c.l.b16 %v232
    %v736 = vunpack.c.l.b16 %v233
    %v737 = vunpack.c.h.b16 %v233
    %v738 = vunpack.c.l.b16 %v234
    %v739 = vunpack.c.l.b16 %v235
    %v740 = vunpack.c.h.b16 %v235
    %v741 = vunpack.c.l.b16 %v236
    %v742 = vunpack.c.l.b16 %v237
    %v743 = vunpack.c.h.b16 %v237
    %v744 = vunpack.c.l.b16 %v238
    %v745 = vunpack.c.l.b16 %v239
    %v746 = vunpack.c.h.b16 %v239
    %v747 = vunpack.c.l.b16 %v240
    %v748 = vunpack.c.l.b16 %v241
    %v749 = vunpack.c.h.b16 %v241
    %v750 = vunpack.c.l.b16 %v242
    %v751 = vunpack.c.l.b16 %v243
    %v752 = vunpack.c.h.b16 %v243
    %v753 = vunpack.c.l.b16 %v244
    %v754 = vunpack.c.l.b16 %v245
    %v755 = vunpack.c.h.b16 %v245
    %v756 = vunpack.c.l.b16 %v246
    %v757 = vunpack.c.l.b16 %v247
    %v758 = vunpack.c.h.b16 %v247
    %v759 = vunpack.c.l.b16 %v248
    %v760 = vunpack.c.l.b16 %v249
    %v761 = vunpack.c.h.b16 %v249
    %v762 = vunpack.c.l.b16 %v250
    %v763 = vunpack.c.l.b16 %v251
    %v764 = vunpack.c.h.b16 %v251
    %v765 = vunpack.c.l.b16 %v252
    %v766 = vunpack.c.l.b16 %v253
    %v767 = vunpack.c.h.b16 %v253
    %v768 = vunpack.c.l.b16 %v254
    %v769 = vpack.c.b16 %v478, %v475
    %v770 = vpack.c.b16 %v479, %v476
    %v771 = vpack.c.b16 %v480, %v477
    %v772 = vpack.c.b16 %v484, %v481
    %v773 = vpack.c.b16 %v485, %v482
    %v774 = vpack.c.b16 %v486, %v483
    %v775 = vpack.c.b16 %v490, %v487
    %v776 = vpack.c.b16 %v491, %v488
    %v777 = vpack.c.b16 %v492, %v489
    %v778 = vpack.c.b16 %v496, %v493
    %v779 = vpack.c.b16 %v497, %v494
    %v780 = vpack.c.b16 %v498, %v495
    %v781 = vpack.c.b16 %v502, %v499
    %v782 = vpack.c.b16 %v503, %v500
    %v783 = vpack.c.b16 %v504, %v501
    %v784 = vpack.c.b16 %v508, %v505
    %v785 = vpack.c.b16 %v509, %v506
    %v786 = vpack.c.b16 %v510, %v507
    %v787 = vpack.c.b16 %v514, %v511
    %v788 = vpack.c.b16 %v515, %v512
    %v789 = vpack.c.b16 %v516, %v513
    %v790 = vpack.c.b16 %v520, %v517
    %v791 = vpack.c.b16 %v521, %v518
    %v792 = vpack.c.b16 %v522, %v519
    %v793 = vpack.c.b16 %v526, %v523
    %v794 = vpack.c.b16 %v527, %v524
    %v795 = vpack.c.b16 %v528, %v525
    %v796 = vpack.c.b16 %v532, %v529
    %v797 = vpack.c.b16 %v533, %v530
    %v798 = vpack.c.b16 %v534, %v531
    %v799 = vpack.c.b16 %v538, %v535
    %v800 = vpack.c.b16 %v539, %v536
    %v801 = vpack.c.b16 %v540, %v537
    %v802 = vpack.c.b16 %v544, %v541
    %v803 = vpack.c.b16 %v545, %v542
    %v804 = vpack.c.b16 %v546, %v543
    %v805 = vpack.c.b16 %v550, %v547
    %v806 = vpack.c.b16 %v551, %v548
    %v807 = vpack.c.b16 %v552, %v549
    %v808 = vpack.c.b16 %v556, %v553
    %v809 = vpack.c.b16 %v557, %v554
    %v810 = vpack.c.b16 %v558, %v555
    %v811 = vpack.c.b16 %v562, %v559
    %v812 = vpack.c.b16 %v563, %v560
    %v813 = vpack.c.b16 %v564, %v561
    %v814 = vpack.c.b16 %v568, %v565
    %v815 = vpack.c.b16 %v569, %v566
    %v816 = vpack.c.b16 %v570, %v567
    %v817 = vpack.c.b16 %v574, %v571
    %v818 = vpack.c.b16 %v575, %v572
    %v819 = vpack.c.b16 %v576, %v573
    %v820 = vpack.c.b16 %v580, %v577
    %v821 = vpack.c.b16 %v581, %v578
    %v822 = vpack.c.b16 %v582, %v579
    %v823 = vpack.c.b16 %v586, %v583
    %v824 = vpack.c.b16 %v587, %v584
    %v825 = vpack.c.b16 %v588, %v585
    %v826 = vpack.c.b16 %v592, %v589
    %v827 = vpack.c.b16 %v593, %v590
    %v828 = vpack.c.b16 %v594, %v591
    %v829 = vpack.c.b16 %v598, %v595
    %v830 = vpack.c.b16 %v599, %v596
    %v831 = vpack.c.b16 %v600, %v597
    %v832 = vpack.c.b16 %v604, %v601
    %v833 = vpack.c.b16 %v605, %v602
    %v834 = vpack.c.b16 %v606, %v603
    %v835 = vpack.c.b16 %v610, %v607
    %v836 = vpack.c.b16 %v611, %v608
    %v837 = vpack.c.b16 %v612, %v609
    %v838 = vpack.c.b16 %v616, %v613
    %v839 = vpack.c.b16 %v617, %v614
    %v840 = vpack.c.b16 %v618, %v615
    %v841 = vpack.c.b16 %v622, %v619
    %v842 = vpack.c.b16 %v623, %v620
    %v843 = vpack.c.b16 %v624, %v621
    %v844 = vpack.c.b16 %v628, %v625
    %v845 = vpack.c.b16 %v629, %v626
    %v846 = vpack.c.b16 %v630, %v627
    %v847 = vpack.c.b16 %v634, %v631
    %v848 = vpack.c.b16 %v635, %v632
    %v849 = vpack.c.b16 %v636, %v633
    %v850 = vpack.c.b16 %v640, %v637
    %v851 = vpack.c.b16 %v641, %v638
    %v852 = vpack.c.b16 %v642, %v639
    %v853 = vpack.c.b16 %v646, %v643
    %v854 = vpack.c.b16 %v647, %v644
    %v855 = vpack.c.b16 %v648, %v645
    %v856 = vpack.c.b16 %v652, %v649
    %v857 = vpack.c.b16 %v653, %v650
    %v858 = vpack.c.b16 %v654, %v651
    %v859 = vpack.c.b16 %v658, %v655
    %v860 = vpack.c.b16 %v659, %v656
    %v861 = vpack.c.b16 %v660, %v657
    %v862 = vpack.c.b16 %v664, %v661
    %v863 = vpack.c.b16 %v665, %v662
    %v864 = vpack.c.b16 %v666, %v663
    %v865 = vpack.c.b16 %v670, %v667
    %v866 = vpack.c.b16 %v671, %v668
    %v867 = vpack.c.b16 %v672, %v669
    %v868 = vpack.c.b16 %v676, %v673
    %v869 = vpack.c.b16 %v677, %v674
    %v870 = vpack.c.b16 %v678, %v675
    %v871 = vpack.c.b16 %v682, %v679
    %v872 = vpack.c.b16 %v683, %v680
    %v873 = vpack.c.b16 %v684, %v681
    %v874 = vpack.c.b16 %v688, %v685
    %v875 = vpack.c.b16 %v689, %v686
    %v876 = vpack.c.b16 %v690, %v687
    %v877 = vpack.c.b16 %v694, %v691
    %v878 = vpack.c.b16 %v695, %v692
    %v879 = vpack.c.b16 %v696, %v693
    %v880 = vpack.c.b16 %v700, %v697
    %v881 = vpack.c.b16 %v701, %v698
    %v882 = vpack.c.b16 %v702, %v699
    %v883 = vpack.c.b16 %v706, %v703
    %v884 = vpack.c.b16 %v707, %v704
    %v885 = vpack.c.b16 %v708, %v705
    %v886 = vpack.c.b16 %v712, %v709
    %v887 = vpack.c.b16 %v713, %v710
    %v888 = vpack.c.b16 %v714, %v711
    %v889 = vpack.c.b16 %v718, %v715
    %v890 = vpack.c.b16 %v719, %v716
    %v891 = vpack.c.b16 %v720, %v717
    %v892 = vpack.c.b16 %v724, %v721
    %v893 = vpack.c.b16 %v725, %v722
    %v894 = vpack.c.b16 %v726, %v723
    %v895 = vpack.c.b16 %v730, %v727
    %v896 = vpack.c.b16 %v731, %v728
    %v897 = vpack.c.b16 %v732, %v729
    %v898 = vpack.c.b16 %v736, %v733
    %v899 = vpack.c.b16 %v737, %v734
    %v900 = vpack.c.b16 %v738, %v735
    %v901 = vpack.c.b16 %v742, %v739
    %v902 = vpack.c.b16 %v743, %v740
    %v903 = vpack.c.b16 %v744, %v741
    %v904 = vpack.c.b16 %v748, %v745
    %v905 = vpack.c.b16 %v749, %v746
    %v906 = vpack.c.b16 %v750, %v747
    %v907 = vpack.c.b16 %v754, %v751
    %v908 = vpack.c.b16 %v755, %v752
    %v909 = vpack.c.b16 %v756, %v753
    %v910 = vpack.c.b16 %v760, %v757
    %v911 = vpack.c.b16 %v761, %v758
    %v912 = vpack.c.b16 %v762, %v759
    %v913 = vpack.c.b16 %v766, %v763
    %v914 = vpack.c.b16 %v767, %v764
    %v915 = vpack.c.b16 %v768, %v765
    %vm1063 = vcmask 130048
    %v1065 = vsel %vm1063, %v261, 0
    %1067 = vmatprep.subr.bf16.mxu0 %v791
    %1068 = vmatpush1.bf16.msra.mxu0 %v790
    %1069 = vmatprep.subr.bf16.mxu0 %v788
    %1070 = vmatpush1.bf16.msra.mxu0 %v787
    %1071 = vmatprep.subr.bf16.mxu0 %v785
    %1072 = vmatpush1.bf16.msra.mxu0 %v784
    %1073 = vmatprep.subr.bf16.mxu0 %v782
    %1074 = vmatpush1.bf16.msra.mxu0 %v781
    %1075 = vmatprep.subr.bf16.mxu0 %v779
    %1076 = vmatpush1.bf16.msra.mxu0 %v778
    %1077 = vmatprep.subr.bf16.mxu0 %v776
    %1078 = vmatpush1.bf16.msra.mxu0 %v775
    %1079 = vmatprep.subr.bf16.mxu0 %v773
    %1080 = vmatpush1.bf16.msra.mxu0 %v772
    %1081 = vmatprep.subr.bf16.mxu0 %v770
    %1082 = vmatpush1.bf16.msra.mxu0 %v769
    %1083 = vmatprep.subr.bf16.mxu0 %v815
    %1084 = vmatpush2.bf16.msra.mxu0 %v814
    %1085 = vmatprep.subr.bf16.mxu0 %v812
    %1086 = vmatpush2.bf16.msra.mxu0 %v811
    %1087 = vmatprep.subr.bf16.mxu0 %v809
    %1088 = vmatpush2.bf16.msra.mxu0 %v808
    %1089 = vmatprep.subr.bf16.mxu0 %v806
    %1090 = vmatpush2.bf16.msra.mxu0 %v805
    %1091 = vmatprep.subr.bf16.mxu0 %v803
    %1092 = vmatpush2.bf16.msra.mxu0 %v802
    %1093 = vmatprep.subr.bf16.mxu0 %v800
    %1094 = vmatpush2.bf16.msra.mxu0 %v799
    %1095 = vmatprep.subr.bf16.mxu0 %v797
    %1096 = vmatpush2.bf16.msra.mxu0 %v796
    %1097 = vmatprep.subr.bf16.mxu0 %v794
    %1098 = vmatpush2.bf16.msra.mxu0 %v793
    %1099 = vmatprep.mubr.bf16.mxu0 %v256
    %1100 = vmatmul.mubr.bf16.gmra.mxu0 %v255
    %v1101 = vpop.f32.mrf.mxu0
    %v1102 = vadd.f32 %v267, %v1101
    %v1103 = vpop.f32.mrf.mxu0
    %v1104 = vadd.f32 %v271, %v1103
    %v1105 = vpop.f32.mrf.mxu0
    %v1106 = vpop.f32.mrf.mxu0
    %1107 = vdwg.mxu0
    %1108 = vmatprep.subr.bf16.mxu0 %v839
    %1109 = vmatpush1.bf16.msra.mxu0 %v838
    %1110 = vmatprep.subr.bf16.mxu0 %v836
    %1111 = vmatpush1.bf16.msra.mxu0 %v835
    %1112 = vmatprep.subr.bf16.mxu0 %v833
    %1113 = vmatpush1.bf16.msra.mxu0 %v832
    %1114 = vmatprep.subr.bf16.mxu0 %v830
    %1115 = vmatpush1.bf16.msra.mxu0 %v829
    %1116 = vmatprep.subr.bf16.mxu0 %v827
    %1117 = vmatpush1.bf16.msra.mxu0 %v826
    %1118 = vmatprep.subr.bf16.mxu0 %v824
    %1119 = vmatpush1.bf16.msra.mxu0 %v823
    %1120 = vmatprep.subr.bf16.mxu0 %v821
    %1121 = vmatpush1.bf16.msra.mxu0 %v820
    %1122 = vmatprep.subr.bf16.mxu0 %v818
    %1123 = vmatpush1.bf16.msra.mxu0 %v817
    %1124 = vmatprep.subr.bf16.mxu0 %v863
    %1125 = vmatpush2.bf16.msra.mxu0 %v862
    %1126 = vmatprep.subr.bf16.mxu0 %v860
    %1127 = vmatpush2.bf16.msra.mxu0 %v859
    %1128 = vmatprep.subr.bf16.mxu0 %v857
    %1129 = vmatpush2.bf16.msra.mxu0 %v856
    %1130 = vmatprep.subr.bf16.mxu0 %v854
    %1131 = vmatpush2.bf16.msra.mxu0 %v853
    %1132 = vmatprep.subr.bf16.mxu0 %v851
    %1133 = vmatpush2.bf16.msra.mxu0 %v850
    %1134 = vmatprep.subr.bf16.mxu0 %v848
    %1135 = vmatpush2.bf16.msra.mxu0 %v847
    %1136 = vmatprep.subr.bf16.mxu0 %v845
    %1137 = vmatpush2.bf16.msra.mxu0 %v844
    %1138 = vmatprep.subr.bf16.mxu0 %v842
    %1139 = vmatpush2.bf16.msra.mxu0 %v841
    %1140 = vmatprep.mubr.bf16.mxu0 %v258
    %1141 = vmatmul.mubr.bf16.gmra.mxu0 %v257
    %v1142 = vpop.f32.mrf.mxu0
    %v1143 = vadd.f32 %v1102, %v1142
    %v1144 = vpop.f32.mrf.mxu0
    %v1145 = vadd.f32 %v1104, %v1144
    %v1146 = vpop.f32.mrf.mxu0
    %v1147 = vpop.f32.mrf.mxu0
    %1148 = vdwg.mxu0
    %1149 = vmatprep.subr.bf16.mxu0 %v887
    %1150 = vmatpush1.bf16.msra.mxu0 %v886
    %1151 = vmatprep.subr.bf16.mxu0 %v884
    %1152 = vmatpush1.bf16.msra.mxu0 %v883
    %1153 = vmatprep.subr.bf16.mxu0 %v881
    %1154 = vmatpush1.bf16.msra.mxu0 %v880
    %1155 = vmatprep.subr.bf16.mxu0 %v878
    %1156 = vmatpush1.bf16.msra.mxu0 %v877
    %1157 = vmatprep.subr.bf16.mxu0 %v875
    %1158 = vmatpush1.bf16.msra.mxu0 %v874
    %1159 = vmatprep.subr.bf16.mxu0 %v872
    %1160 = vmatpush1.bf16.msra.mxu0 %v871
    %1161 = vmatprep.subr.bf16.mxu0 %v869
    %1162 = vmatpush1.bf16.msra.mxu0 %v868
    %1163 = vmatprep.subr.bf16.mxu0 %v866
    %1164 = vmatpush1.bf16.msra.mxu0 %v865
    %1165 = vmatprep.subr.bf16.mxu0 %v911
    %1166 = vmatpush2.bf16.msra.mxu0 %v910
    %1167 = vmatprep.subr.bf16.mxu0 %v908
    %1168 = vmatpush2.bf16.msra.mxu0 %v907
    %1169 = vmatprep.subr.bf16.mxu0 %v905
    %1170 = vmatpush2.bf16.msra.mxu0 %v904
    %1171 = vmatprep.subr.bf16.mxu0 %v902
    %1172 = vmatpush2.bf16.msra.mxu0 %v901
    %1173 = vmatprep.subr.bf16.mxu0 %v899
    %1174 = vmatpush2.bf16.msra.mxu0 %v898
    %1175 = vmatprep.subr.bf16.mxu0 %v896
    %1176 = vmatpush2.bf16.msra.mxu0 %v895
    %1177 = vmatprep.subr.bf16.mxu0 %v893
    %1178 = vmatpush2.bf16.msra.mxu0 %v892
    %1179 = vmatprep.subr.bf16.mxu0 %v890
    %1180 = vmatpush2.bf16.msra.mxu0 %v889
    %1181 = vmatprep.mubr.bf16.mxu0 %v260
    %1182 = vmatmul.mubr.bf16.gmra.mxu0 %v259
    %v1183 = vpop.f32.mrf.mxu0
    %v1184 = vadd.f32 %v1143, %v1183
    %v1185 = vpop.f32.mrf.mxu0
    %v1186 = vadd.f32 %v1145, %v1185
    %v1187 = vpop.f32.mrf.mxu0
    %v1188 = vpop.f32.mrf.mxu0
    %1189 = vdwg.mxu0
    %1190 = vmatprep.subr.bf16.mxu0 0
    %1191 = vmatpush1.bf16.msra.mxu0 0
    %1192 = vmatprep.subr.bf16.mxu0 0
    %1193 = vmatpush1.bf16.msra.mxu0 0
    %1194 = vmatprep.subr.bf16.mxu0 0
    %1195 = vmatpush1.bf16.msra.mxu0 0
    %1196 = vmatprep.subr.bf16.mxu0 0
    %1197 = vmatpush1.bf16.msra.mxu0 0
    %1198 = vmatprep.subr.bf16.mxu0 0
    %1199 = vmatpush1.bf16.msra.mxu0 0
    %1200 = vmatprep.subr.bf16.mxu0 0
    %1201 = vmatpush1.bf16.msra.mxu0 0
    %1202 = vmatprep.subr.bf16.mxu0 0
    %1203 = vmatpush1.bf16.msra.mxu0 0
    %1204 = vmatprep.subr.bf16.mxu0 %v914
    %1205 = vmatpush1.bf16.msra.mxu0 %v913
    %1206 = vmatprep.subr.bf16.mxu0 0
    %1207 = vmatpush2.bf16.msra.mxu0 0
    %1208 = vmatprep.subr.bf16.mxu0 0
    %1209 = vmatpush2.bf16.msra.mxu0 0
    %1210 = vmatprep.subr.bf16.mxu0 0
    %1211 = vmatpush2.bf16.msra.mxu0 0
    %1212 = vmatprep.subr.bf16.mxu0 0
    %1213 = vmatpush2.bf16.msra.mxu0 0
    %1214 = vmatprep.subr.bf16.mxu0 0
    %1215 = vmatpush2.bf16.msra.mxu0 0
    %1216 = vmatprep.subr.bf16.mxu0 0
    %1217 = vmatpush2.bf16.msra.mxu0 0
    %1218 = vmatprep.subr.bf16.mxu0 0
    %1219 = vmatpush2.bf16.msra.mxu0 0
    %1220 = vmatprep.subr.bf16.mxu0 0
    %1221 = vmatpush2.bf16.msra.mxu0 0
    %1222 = vmatprep.mubr.bf16.mxu0 0
    %1223 = vmatmul.mubr.bf16.gmra.mxu0 %v1065
    %v1224 = vpop.f32.mrf.mxu0
    %v1225 = vadd.f32 %v1184, %v1224
    %v1226 = vpop.f32.mrf.mxu0
    %v1227 = vadd.f32 %v1186, %v1226
    %v1228 = vpop.f32.mrf.mxu0
    %v1229 = vpop.f32.mrf.mxu0
    %1230 = vdwg.mxu0
    %1231 = vmatprep.subr.bf16.mxu0 0
    %1232 = vmatpush1.bf16.msra.mxu0 %v792
    %1233 = vmatprep.subr.bf16.mxu0 0
    %1234 = vmatpush1.bf16.msra.mxu0 %v789
    %1235 = vmatprep.subr.bf16.mxu0 0
    %1236 = vmatpush1.bf16.msra.mxu0 %v786
    %1237 = vmatprep.subr.bf16.mxu0 0
    %1238 = vmatpush1.bf16.msra.mxu0 %v783
    %1239 = vmatprep.subr.bf16.mxu0 0
    %1240 = vmatpush1.bf16.msra.mxu0 %v780
    %1241 = vmatprep.subr.bf16.mxu0 0
    %1242 = vmatpush1.bf16.msra.mxu0 %v777
    %1243 = vmatprep.subr.bf16.mxu0 0
    %1244 = vmatpush1.bf16.msra.mxu0 %v774
    %1245 = vmatprep.subr.bf16.mxu0 0
    %1246 = vmatpush1.bf16.msra.mxu0 %v771
    %1247 = vmatprep.subr.bf16.mxu0 0
    %1248 = vmatpush2.bf16.msra.mxu0 %v816
    %1249 = vmatprep.subr.bf16.mxu0 0
    %1250 = vmatpush2.bf16.msra.mxu0 %v813
    %1251 = vmatprep.subr.bf16.mxu0 0
    %1252 = vmatpush2.bf16.msra.mxu0 %v810
    %1253 = vmatprep.subr.bf16.mxu0 0
    %1254 = vmatpush2.bf16.msra.mxu0 %v807
    %1255 = vmatprep.subr.bf16.mxu0 0
    %1256 = vmatpush2.bf16.msra.mxu0 %v804
    %1257 = vmatprep.subr.bf16.mxu0 0
    %1258 = vmatpush2.bf16.msra.mxu0 %v801
    %1259 = vmatprep.subr.bf16.mxu0 0
    %1260 = vmatpush2.bf16.msra.mxu0 %v798
    %1261 = vmatprep.subr.bf16.mxu0 0
    %1262 = vmatpush2.bf16.msra.mxu0 %v795
    %1263 = vmatprep.mubr.bf16.mxu0 %v256
    %1264 = vmatmul.mubr.bf16.gmra.mxu0 %v255
    %v1265 = vpop.f32.mrf.mxu0
    %v1266 = vadd.f32 %v275, %v1265
    %v1267 = vpop.f32.mrf.mxu0
    %v1268 = vpop.f32.mrf.mxu0
    %v1269 = vpop.f32.mrf.mxu0
    %1270 = vdwg.mxu0
    %1271 = vmatprep.subr.bf16.mxu0 0
    %1272 = vmatpush1.bf16.msra.mxu0 %v840
    %1273 = vmatprep.subr.bf16.mxu0 0
    %1274 = vmatpush1.bf16.msra.mxu0 %v837
    %1275 = vmatprep.subr.bf16.mxu0 0
    %1276 = vmatpush1.bf16.msra.mxu0 %v834
    %1277 = vmatprep.subr.bf16.mxu0 0
    %1278 = vmatpush1.bf16.msra.mxu0 %v831
    %1279 = vmatprep.subr.bf16.mxu0 0
    %1280 = vmatpush1.bf16.msra.mxu0 %v828
    %1281 = vmatprep.subr.bf16.mxu0 0
    %1282 = vmatpush1.bf16.msra.mxu0 %v825
    %1283 = vmatprep.subr.bf16.mxu0 0
    %1284 = vmatpush1.bf16.msra.mxu0 %v822
    %1285 = vmatprep.subr.bf16.mxu0 0
    %1286 = vmatpush1.bf16.msra.mxu0 %v819
    %1287 = vmatprep.subr.bf16.mxu0 0
    %1288 = vmatpush2.bf16.msra.mxu0 %v864
    %1289 = vmatprep.subr.bf16.mxu0 0
    %1290 = vmatpush2.bf16.msra.mxu0 %v861
    %1291 = vmatprep.subr.bf16.mxu0 0
    %1292 = vmatpush2.bf16.msra.mxu0 %v858
    %1293 = vmatprep.subr.bf16.mxu0 0
    %1294 = vmatpush2.bf16.msra.mxu0 %v855
    %1295 = vmatprep.subr.bf16.mxu0 0
    %1296 = vmatpush2.bf16.msra.mxu0 %v852
    %1297 = vmatprep.subr.bf16.mxu0 0
    %1298 = vmatpush2.bf16.msra.mxu0 %v849
    %1299 = vmatprep.subr.bf16.mxu0 0
    %1300 = vmatpush2.bf16.msra.mxu0 %v846
    %1301 = vmatprep.subr.bf16.mxu0 0
    %1302 = vmatpush2.bf16.msra.mxu0 %v843
    %1303 = vmatprep.mubr.bf16.mxu0 %v258
    %1304 = vmatmul.mubr.bf16.gmra.mxu0 %v257
    %v1305 = vpop.f32.mrf.mxu0
    %v1306 = vadd.f32 %v1266, %v1305
    %v1307 = vpop.f32.mrf.mxu0
    %v1308 = vpop.f32.mrf.mxu0
    %v1309 = vpop.f32.mrf.mxu0
    %1310 = vdwg.mxu0
    %1311 = vmatprep.subr.bf16.mxu0 0
    %1312 = vmatpush1.bf16.msra.mxu0 %v888
    %1313 = vmatprep.subr.bf16.mxu0 0
    %1314 = vmatpush1.bf16.msra.mxu0 %v885
    %1315 = vmatprep.subr.bf16.mxu0 0
    %1316 = vmatpush1.bf16.msra.mxu0 %v882
    %1317 = vmatprep.subr.bf16.mxu0 0
    %1318 = vmatpush1.bf16.msra.mxu0 %v879
    %1319 = vmatprep.subr.bf16.mxu0 0
    %1320 = vmatpush1.bf16.msra.mxu0 %v876
    %1321 = vmatprep.subr.bf16.mxu0 0
    %1322 = vmatpush1.bf16.msra.mxu0 %v873
    %1323 = vmatprep.subr.bf16.mxu0 0
    %1324 = vmatpush1.bf16.msra.mxu0 %v870
    %1325 = vmatprep.subr.bf16.mxu0 0
    %1326 = vmatpush1.bf16.msra.mxu0 %v867
    %1327 = vmatprep.subr.bf16.mxu0 0
    %1328 = vmatpush2.bf16.msra.mxu0 %v912
    %1329 = vmatprep.subr.bf16.mxu0 0
    %1330 = vmatpush2.bf16.msra.mxu0 %v909
    %1331 = vmatprep.subr.bf16.mxu0 0
    %1332 = vmatpush2.bf16.msra.mxu0 %v906
    %1333 = vmatprep.subr.bf16.mxu0 0
    %1334 = vmatpush2.bf16.msra.mxu0 %v903
    %1335 = vmatprep.subr.bf16.mxu0 0
    %1336 = vmatpush2.bf16.msra.mxu0 %v900
    %1337 = vmatprep.subr.bf16.mxu0 0
    %1338 = vmatpush2.bf16.msra.mxu0 %v897
    %1339 = vmatprep.subr.bf16.mxu0 0
    %1340 = vmatpush2.bf16.msra.mxu0 %v894
    %1341 = vmatprep.subr.bf16.mxu0 0
    %1342 = vmatpush2.bf16.msra.mxu0 %v891
    %1343 = vmatprep.mubr.bf16.mxu0 %v260
    %1344 = vmatmul.mubr.bf16.gmra.mxu0 %v259
    %v1345 = vpop.f32.mrf.mxu0
    %v1346 = vadd.f32 %v1306, %v1345
    %v1347 = vpop.f32.mrf.mxu0
    %v1348 = vpop.f32.mrf.mxu0
    %v1349 = vpop.f32.mrf.mxu0
    %1350 = vdwg.mxu0
    %1351 = vmatprep.subr.bf16.mxu0 0
    %1352 = vmatpush1.bf16.msra.mxu0 0
    %1353 = vmatprep.subr.bf16.mxu0 0
    %1354 = vmatpush1.bf16.msra.mxu0 0
    %1355 = vmatprep.subr.bf16.mxu0 0
    %1356 = vmatpush1.bf16.msra.mxu0 0
    %1357 = vmatprep.subr.bf16.mxu0 0
    %1358 = vmatpush1.bf16.msra.mxu0 0
    %1359 = vmatprep.subr.bf16.mxu0 0
    %1360 = vmatpush1.bf16.msra.mxu0 0
    %1361 = vmatprep.subr.bf16.mxu0 0
    %1362 = vmatpush1.bf16.msra.mxu0 0
    %1363 = vmatprep.subr.bf16.mxu0 0
    %1364 = vmatpush1.bf16.msra.mxu0 0
    %1365 = vmatprep.subr.bf16.mxu0 0
    %1366 = vmatpush1.bf16.msra.mxu0 %v915
    %1367 = vmatprep.subr.bf16.mxu0 0
    %1368 = vmatpush2.bf16.msra.mxu0 0
    %1369 = vmatprep.subr.bf16.mxu0 0
    %1370 = vmatpush2.bf16.msra.mxu0 0
    %1371 = vmatprep.subr.bf16.mxu0 0
    %1372 = vmatpush2.bf16.msra.mxu0 0
    %1373 = vmatprep.subr.bf16.mxu0 0
    %1374 = vmatpush2.bf16.msra.mxu0 0
    %1375 = vmatprep.subr.bf16.mxu0 0
    %1376 = vmatpush2.bf16.msra.mxu0 0
    %1377 = vmatprep.subr.bf16.mxu0 0
    %1378 = vmatpush2.bf16.msra.mxu0 0
    %1379 = vmatprep.subr.bf16.mxu0 0
    %1380 = vmatpush2.bf16.msra.mxu0 0
    %1381 = vmatprep.subr.bf16.mxu0 0
    %1382 = vmatpush2.bf16.msra.mxu0 0
    %1383 = vmatprep.mubr.bf16.mxu0 0
    %1384 = vmatmul.mubr.bf16.gmra.mxu0 %v1065
    %v1385 = vpop.f32.mrf.mxu0
    %v1386 = vadd.f32 %v1346, %v1385
    %v1387 = vpop.f32.mrf.mxu0
    %v1388 = vpop.f32.mrf.mxu0
    %v1389 = vpop.f32.mrf.mxu0
    %1390 = vdwg.mxu0
    %vm1391 = vcmp.gt.f32.partialorder %v1225, 0.0
    %vm1392 = vcmp.gt.f32.partialorder %v1227, 0.0
    %vm1393 = vcmp.gt.f32.partialorder %v1386, 0.0
    %v1394 = vmul.f32 %v1225, 1.442695
    %v1395 = vpow.pop %v1394
    %v1396 = vmul.f32 %v1227, 1.442695
    %v1397 = vpow.pop %v1396
    %v1398 = vmul.f32 %v1386, 1.442695
    %v1399 = vpow.pop %v1398
    %v1400 = vsub.f32 %v1395, 1.0
    %v1401 = vsub.f32 %v1397, 1.0
    %v1402 = vsub.f32 %v1399, 1.0
    %v1403 = vsel %vm1391, %v1225, %v1400
    %v1404 = vsel %vm1392, %v1227, %v1401
    %v1405 = vsel %vm1393, %v1386, %v1402
    %v1406 = vld [vmem:[%s4] sm:$0xff]
    %v1407 = vld [vmem:[%s4 + $0x8] sm:$0xf]
    %v1408 = vld [vmem:[%s4 + $0xc] sm:$0xff]
    %v1409 = vld [vmem:[%s4 + $0x14] sm:$0xf]
    %v1410 = vld [vmem:[%s4 + $0x18] sm:$0xff]
    %v1411 = vld [vmem:[%s4 + $0x20] sm:$0xf]
    %v1412 = vld [vmem:[%s4 + $0x24] sm:$0xff]
    %v1413 = vld [vmem:[%s4 + $0x2c] sm:$0xf]
    %v1414 = vld [vmem:[%s4 + $0x30] sm:$0xff]
    %v1415 = vld [vmem:[%s4 + $0x38] sm:$0xf]
    %v1416 = vld [vmem:[%s4 + $0x3c] sm:$0xff]
    %v1417 = vld [vmem:[%s4 + $0x44] sm:$0xf]
    %v1418 = vld [vmem:[%s4 + $0x48] sm:$0xff]
    %v1419 = vld [vmem:[%s4 + $0x50] sm:$0xf]
    %v1420 = vld [vmem:[%s4 + $0x54] sm:$0xff]
    %v1421 = vld [vmem:[%s4 + $0x5c] sm:$0xf]
    %v1422 = vld [vmem:[%s4 + $0x60] sm:$0xff]
    %v1423 = vld [vmem:[%s4 + $0x68] sm:$0xf]
    %v1424 = vld [vmem:[%s4 + $0x6c] sm:$0xff]
    %v1425 = vld [vmem:[%s4 + $0x74] sm:$0xf]
    %v1426 = vld [vmem:[%s4 + $0x78] sm:$0xff]
    %v1427 = vld [vmem:[%s4 + $0x80] sm:$0xf]
    %v1428 = vld [vmem:[%s4 + $0x84] sm:$0xff]
    %v1429 = vld [vmem:[%s4 + $0x8c] sm:$0xf]
    %v1430 = vld [vmem:[%s4 + $0x90] sm:$0xff]
    %v1431 = vld [vmem:[%s4 + $0x98] sm:$0xf]
    %v1432 = vld [vmem:[%s4 + $0x9c] sm:$0xff]
    %v1433 = vld [vmem:[%s4 + $0xa4] sm:$0xf]
    %v1434 = vld [vmem:[%s4 + $0xa8] sm:$0xff]
    %v1435 = vld [vmem:[%s4 + $0xb0] sm:$0xf]
    %v1436 = vld [vmem:[%s4 + $0xb4] sm:$0xff]
    %v1437 = vld [vmem:[%s4 + $0xbc] sm:$0xf]
    %v1438 = vld [vmem:[%s4 + $0xc0] sm:$0xff]
    %v1439 = vld [vmem:[%s4 + $0xc8] sm:$0xf]
    %v1440 = vld [vmem:[%s4 + $0xcc] sm:$0xff]
    %v1441 = vld [vmem:[%s4 + $0xd4] sm:$0xf]
    %v1442 = vld [vmem:[%s4 + $0xd8] sm:$0xff]
    %v1443 = vld [vmem:[%s4 + $0xe0] sm:$0xf]
    %v1444 = vld [vmem:[%s4 + $0xe4] sm:$0xff]
    %v1445 = vld [vmem:[%s4 + $0xec] sm:$0xf]
    %v1446 = vld [vmem:[%s4 + $0xf0] sm:$0xff]
    %v1447 = vld [vmem:[%s4 + $0xf8] sm:$0xf]
    %v1448 = vld [vmem:[%s4 + $0xfc] sm:$0xff]
    %v1449 = vld [vmem:[%s4 + $0x104] sm:$0xf]
    %v1450 = vld [vmem:[%s4 + $0x108] sm:$0xff]
    %v1451 = vld [vmem:[%s4 + $0x110] sm:$0xf]
    %v1452 = vld [vmem:[%s4 + $0x114] sm:$0xff]
    %v1453 = vld [vmem:[%s4 + $0x11c] sm:$0xf]
    %v1454 = vld [vmem:[%s4 + $0x120] sm:$0xff]
    %v1455 = vld [vmem:[%s4 + $0x128] sm:$0xf]
    %v1456 = vld [vmem:[%s4 + $0x12c] sm:$0xff]
    %v1457 = vld [vmem:[%s4 + $0x134] sm:$0xf]
    %v1458 = vld [vmem:[%s4 + $0x138] sm:$0xff]
    %v1459 = vld [vmem:[%s4 + $0x140] sm:$0xf]
    %v1460 = vld [vmem:[%s4 + $0x144] sm:$0xff]
    %v1461 = vld [vmem:[%s4 + $0x14c] sm:$0xf]
    %v1462 = vld [vmem:[%s4 + $0x150] sm:$0xff]
    %v1463 = vld [vmem:[%s4 + $0x158] sm:$0xf]
    %v1464 = vld [vmem:[%s4 + $0x15c] sm:$0xff]
    %v1465 = vld [vmem:[%s4 + $0x164] sm:$0xf]
    %v1466 = vld [vmem:[%s4 + $0x168] sm:$0xff]
    %v1467 = vld [vmem:[%s4 + $0x170] sm:$0xf]
    %v1468 = vld [vmem:[%s4 + $0x174] sm:$0xff]
    %v1469 = vld [vmem:[%s4 + $0x17c] sm:$0xf]
    %v1470 = vld [vmem:[%s4 + $0x180] sm:$0xff]
    %v1471 = vld [vmem:[%s4 + $0x188] sm:$0xf]
    %v1472 = vld [vmem:[%s4 + $0x18c] sm:$0xff]
    %v1473 = vld [vmem:[%s4 + $0x194] sm:$0xf]
    %v1474 = vld [vmem:[%s4 + $0x198] sm:$0xff]
    %v1475 = vld [vmem:[%s4 + $0x1a0] sm:$0xf]
    %v1476 = vld [vmem:[%s4 + $0x1a4] sm:$0xff]
    %v1477 = vld [vmem:[%s4 + $0x1ac] sm:$0xf]
    %v1478 = vld [vmem:[%s4 + $0x1b0] sm:$0xff]
    %v1479 = vld [vmem:[%s4 + $0x1b8] sm:$0xf]
    %v1480 = vld [vmem:[%s4 + $0x1bc] sm:$0x33]
    %v1481 = vld [vmem:[%s4 + $0x1c4] sm:$0x3]
    %v1482 = vpack.c.bf16 %v1403, %v1403
    %v1483 = vpack.c.bf16 %v1404, %v1404
    %v1484 = vpack.c.bf16 %v1405, %v1405
    %v1485 = vld [vmem:[%s5] sm:$0x7]
    %v1487 = vlaneseq
    %v1488 = vshrl.u32 %v1487, 7
    %v1489 = vsub.s32 0, %v1488
    %v1490 = vrot.slane %v1485, %v1489
    %v1491 = vlaneseq
    %v1492 = vshrl.u32 %v1491, 7
    %v1493 = vsub.s32 1, %v1492
    %v1494 = vrot.slane %v1485, %v1493
    %v1495 = vlaneseq
    %v1496 = vshrl.u32 %v1495, 7
    %v1497 = vsub.s32 2, %v1496
    %v1498 = vrot.slane %v1485, %v1497
    %v1578 = vunpack.c.l.b16 %v1406
    %v1579 = vunpack.c.h.b16 %v1406
    %v1580 = vunpack.c.l.b16 %v1407
    %v1581 = vunpack.c.l.b16 %v1408
    %v1582 = vunpack.c.h.b16 %v1408
    %v1583 = vunpack.c.l.b16 %v1409
    %v1584 = vunpack.c.l.b16 %v1410
    %v1585 = vunpack.c.h.b16 %v1410
    %v1586 = vunpack.c.l.b16 %v1411
    %v1587 = vunpack.c.l.b16 %v1412
    %v1588 = vunpack.c.h.b16 %v1412
    %v1589 = vunpack.c.l.b16 %v1413
    %v1590 = vunpack.c.l.b16 %v1414
    %v1591 = vunpack.c.h.b16 %v1414
    %v1592 = vunpack.c.l.b16 %v1415
    %v1593 = vunpack.c.l.b16 %v1416
    %v1594 = vunpack.c.h.b16 %v1416
    %v1595 = vunpack.c.l.b16 %v1417
    %v1596 = vunpack.c.l.b16 %v1418
    %v1597 = vunpack.c.h.b16 %v1418
    %v1598 = vunpack.c.l.b16 %v1419
    %v1599 = vunpack.c.l.b16 %v1420
    %v1600 = vunpack.c.h.b16 %v1420
    %v1601 = vunpack.c.l.b16 %v1421
    %v1602 = vunpack.c.l.b16 %v1422
    %v1603 = vunpack.c.h.b16 %v1422
    %v1604 = vunpack.c.l.b16 %v1423
    %v1605 = vunpack.c.l.b16 %v1424
    %v1606 = vunpack.c.h.b16 %v1424
    %v1607 = vunpack.c.l.b16 %v1425
    %v1608 = vunpack.c.l.b16 %v1426
    %v1609 = vunpack.c.h.b16 %v1426
    %v1610 = vunpack.c.l.b16 %v1427
    %v1611 = vunpack.c.l.b16 %v1428
    %v1612 = vunpack.c.h.b16 %v1428
    %v1613 = vunpack.c.l.b16 %v1429
    %v1614 = vunpack.c.l.b16 %v1430
    %v1615 = vunpack.c.h.b16 %v1430
    %v1616 = vunpack.c.l.b16 %v1431
    %v1617 = vunpack.c.l.b16 %v1432
    %v1618 = vunpack.c.h.b16 %v1432
    %v1619 = vunpack.c.l.b16 %v1433
    %v1620 = vunpack.c.l.b16 %v1434
    %v1621 = vunpack.c.h.b16 %v1434
    %v1622 = vunpack.c.l.b16 %v1435
    %v1623 = vunpack.c.l.b16 %v1436
    %v1624 = vunpack.c.h.b16 %v1436
    %v1625 = vunpack.c.l.b16 %v1437
    %v1626 = vunpack.c.l.b16 %v1438
    %v1627 = vunpack.c.h.b16 %v1438
    %v1628 = vunpack.c.l.b16 %v1439
    %v1629 = vunpack.c.l.b16 %v1440
    %v1630 = vunpack.c.h.b16 %v1440
    %v1631 = vunpack.c.l.b16 %v1441
    %v1632 = vunpack.c.l.b16 %v1442
    %v1633 = vunpack.c.h.b16 %v1442
    %v1634 = vunpack.c.l.b16 %v1443
    %v1635 = vunpack.c.l.b16 %v1444
    %v1636 = vunpack.c.h.b16 %v1444
    %v1637 = vunpack.c.l.b16 %v1445
    %v1638 = vunpack.c.l.b16 %v1446
    %v1639 = vunpack.c.h.b16 %v1446
    %v1640 = vunpack.c.l.b16 %v1447
    %v1641 = vunpack.c.l.b16 %v1448
    %v1642 = vunpack.c.h.b16 %v1448
    %v1643 = vunpack.c.l.b16 %v1449
    %v1644 = vunpack.c.l.b16 %v1450
    %v1645 = vunpack.c.h.b16 %v1450
    %v1646 = vunpack.c.l.b16 %v1451
    %v1647 = vunpack.c.l.b16 %v1452
    %v1648 = vunpack.c.h.b16 %v1452
    %v1649 = vunpack.c.l.b16 %v1453
    %v1650 = vunpack.c.l.b16 %v1454
    %v1651 = vunpack.c.h.b16 %v1454
    %v1652 = vunpack.c.l.b16 %v1455
    %v1653 = vunpack.c.l.b16 %v1456
    %v1654 = vunpack.c.h.b16 %v1456
    %v1655 = vunpack.c.l.b16 %v1457
    %v1656 = vunpack.c.l.b16 %v1458
    %v1657 = vunpack.c.h.b16 %v1458
    %v1658 = vunpack.c.l.b16 %v1459
    %v1659 = vunpack.c.l.b16 %v1460
    %v1660 = vunpack.c.h.b16 %v1460
    %v1661 = vunpack.c.l.b16 %v1461
    %v1662 = vunpack.c.l.b16 %v1462
    %v1663 = vunpack.c.h.b16 %v1462
    %v1664 = vunpack.c.l.b16 %v1463
    %v1665 = vunpack.c.l.b16 %v1464
    %v1666 = vunpack.c.h.b16 %v1464
    %v1667 = vunpack.c.l.b16 %v1465
    %v1668 = vunpack.c.l.b16 %v1466
    %v1669 = vunpack.c.h.b16 %v1466
    %v1670 = vunpack.c.l.b16 %v1467
    %v1671 = vunpack.c.l.b16 %v1468
    %v1672 = vunpack.c.h.b16 %v1468
    %v1673 = vunpack.c.l.b16 %v1469
    %v1674 = vunpack.c.l.b16 %v1470
    %v1675 = vunpack.c.h.b16 %v1470
    %v1676 = vunpack.c.l.b16 %v1471
    %v1677 = vunpack.c.l.b16 %v1472
    %v1678 = vunpack.c.h.b16 %v1472
    %v1679 = vunpack.c.l.b16 %v1473
    %v1680 = vunpack.c.l.b16 %v1474
    %v1681 = vunpack.c.h.b16 %v1474
    %v1682 = vunpack.c.l.b16 %v1475
    %v1683 = vunpack.c.l.b16 %v1476
    %v1684 = vunpack.c.h.b16 %v1476
    %v1685 = vunpack.c.l.b16 %v1477
    %v1686 = vunpack.c.l.b16 %v1478
    %v1687 = vunpack.c.h.b16 %v1478
    %v1688 = vunpack.c.l.b16 %v1479
    %v1689 = vunpack.c.l.b16 %v1480
    %v1690 = vunpack.c.h.b16 %v1480
    %v1691 = vunpack.c.l.b16 %v1481
    %v1692 = vpack.c.b16 %v1581, %v1578
    %v1693 = vpack.c.b16 %v1582, %v1579
    %v1694 = vpack.c.b16 %v1583, %v1580
    %v1695 = vpack.c.b16 %v1587, %v1584
    %v1696 = vpack.c.b16 %v1588, %v1585
    %v1697 = vpack.c.b16 %v1589, %v1586
    %v1698 = vpack.c.b16 %v1593, %v1590
    %v1699 = vpack.c.b16 %v1594, %v1591
    %v1700 = vpack.c.b16 %v1595, %v1592
    %v1701 = vpack.c.b16 %v1599, %v1596
    %v1702 = vpack.c.b16 %v1600, %v1597
    %v1703 = vpack.c.b16 %v1601, %v1598
    %v1704 = vpack.c.b16 %v1605, %v1602
    %v1705 = vpack.c.b16 %v1606, %v1603
    %v1706 = vpack.c.b16 %v1607, %v1604
    %v1707 = vpack.c.b16 %v1611, %v1608
    %v1708 = vpack.c.b16 %v1612, %v1609
    %v1709 = vpack.c.b16 %v1613, %v1610
    %v1710 = vpack.c.b16 %v1617, %v1614
    %v1711 = vpack.c.b16 %v1618, %v1615
    %v1712 = vpack.c.b16 %v1619, %v1616
    %v1713 = vpack.c.b16 %v1623, %v1620
    %v1714 = vpack.c.b16 %v1624, %v1621
    %v1715 = vpack.c.b16 %v1625, %v1622
    %v1716 = vpack.c.b16 %v1629, %v1626
    %v1717 = vpack.c.b16 %v1630, %v1627
    %v1718 = vpack.c.b16 %v1631, %v1628
    %v1719 = vpack.c.b16 %v1635, %v1632
    %v1720 = vpack.c.b16 %v1636, %v1633
    %v1721 = vpack.c.b16 %v1637, %v1634
    %v1722 = vpack.c.b16 %v1641, %v1638
    %v1723 = vpack.c.b16 %v1642, %v1639
    %v1724 = vpack.c.b16 %v1643, %v1640
    %v1725 = vpack.c.b16 %v1647, %v1644
    %v1726 = vpack.c.b16 %v1648, %v1645
    %v1727 = vpack.c.b16 %v1649, %v1646
    %v1728 = vpack.c.b16 %v1653, %v1650
    %v1729 = vpack.c.b16 %v1654, %v1651
    %v1730 = vpack.c.b16 %v1655, %v1652
    %v1731 = vpack.c.b16 %v1659, %v1656
    %v1732 = vpack.c.b16 %v1660, %v1657
    %v1733 = vpack.c.b16 %v1661, %v1658
    %v1734 = vpack.c.b16 %v1665, %v1662
    %v1735 = vpack.c.b16 %v1666, %v1663
    %v1736 = vpack.c.b16 %v1667, %v1664
    %v1737 = vpack.c.b16 %v1671, %v1668
    %v1738 = vpack.c.b16 %v1672, %v1669
    %v1739 = vpack.c.b16 %v1673, %v1670
    %v1740 = vpack.c.b16 %v1677, %v1674
    %v1741 = vpack.c.b16 %v1678, %v1675
    %v1742 = vpack.c.b16 %v1679, %v1676
    %v1743 = vpack.c.b16 %v1683, %v1680
    %v1744 = vpack.c.b16 %v1684, %v1681
    %v1745 = vpack.c.b16 %v1685, %v1682
    %v1746 = vpack.c.b16 %v1689, %v1686
    %v1747 = vpack.c.b16 %v1690, %v1687
    %v1748 = vpack.c.b16 %v1691, %v1688
    %vm1803 = vcmask 359424
    %v1805 = vsel %vm1803, %v1484, 0
    %vm1807 = vcmask 1045504
    %v1809 = vsel %vm1807, %v1746, 0
    %v1812 = vsel %vm1807, %v1747, 0
    %v1815 = vsel %vm1807, %v1748, 0
    %1817 = vmatprep.subr.bf16.mxu0 %v1714
    %1818 = vmatpush1.bf16.msra.mxu0 %v1713
    %1819 = vmatprep.subr.bf16.mxu0 %v1711
    %1820 = vmatpush1.bf16.msra.mxu0 %v1710
    %1821 = vmatprep.subr.bf16.mxu0 %v1708
    %1822 = vmatpush1.bf16.msra.mxu0 %v1707
    %1823 = vmatprep.subr.bf16.mxu0 %v1705
    %1824 = vmatpush1.bf16.msra.mxu0 %v1704
    %1825 = vmatprep.subr.bf16.mxu0 %v1702
    %1826 = vmatpush1.bf16.msra.mxu0 %v1701
    %1827 = vmatprep.subr.bf16.mxu0 %v1699
    %1828 = vmatpush1.bf16.msra.mxu0 %v1698
    %1829 = vmatprep.subr.bf16.mxu0 %v1696
    %1830 = vmatpush1.bf16.msra.mxu0 %v1695
    %1831 = vmatprep.subr.bf16.mxu0 %v1693
    %1832 = vmatpush1.bf16.msra.mxu0 %v1692
    %1833 = vmatprep.subr.bf16.mxu0 %v1738
    %1834 = vmatpush2.bf16.msra.mxu0 %v1737
    %1835 = vmatprep.subr.bf16.mxu0 %v1735
    %1836 = vmatpush2.bf16.msra.mxu0 %v1734
    %1837 = vmatprep.subr.bf16.mxu0 %v1732
    %1838 = vmatpush2.bf16.msra.mxu0 %v1731
    %1839 = vmatprep.subr.bf16.mxu0 %v1729
    %1840 = vmatpush2.bf16.msra.mxu0 %v1728
    %1841 = vmatprep.subr.bf16.mxu0 %v1726
    %1842 = vmatpush2.bf16.msra.mxu0 %v1725
    %1843 = vmatprep.subr.bf16.mxu0 %v1723
    %1844 = vmatpush2.bf16.msra.mxu0 %v1722
    %1845 = vmatprep.subr.bf16.mxu0 %v1720
    %1846 = vmatpush2.bf16.msra.mxu0 %v1719
    %1847 = vmatprep.subr.bf16.mxu0 %v1717
    %1848 = vmatpush2.bf16.msra.mxu0 %v1716
    %1849 = vmatprep.mubr.bf16.mxu0 %v1483
    %1850 = vmatmul.mubr.bf16.gmra.mxu0 %v1482
    %v1851 = vpop.f32.mrf.mxu0
    %v1852 = vadd.f32 %v1490, %v1851
    %v1853 = vpop.f32.mrf.mxu0
    %v1854 = vadd.f32 %v1494, %v1853
    %v1855 = vpop.f32.mrf.mxu0
    %v1856 = vpop.f32.mrf.mxu0
    %1857 = vdwg.mxu0
    %1858 = vmatprep.subr.bf16.mxu0 0
    %1859 = vmatpush1.bf16.msra.mxu0 0
    %1860 = vmatprep.subr.bf16.mxu0 0
    %1861 = vmatpush1.bf16.msra.mxu0 0
    %1862 = vmatprep.subr.bf16.mxu0 0
    %1863 = vmatpush1.bf16.msra.mxu0 0
    %1864 = vmatprep.subr.bf16.mxu0 0
    %1865 = vmatpush1.bf16.msra.mxu0 0
    %1866 = vmatprep.subr.bf16.mxu0 0
    %1867 = vmatpush1.bf16.msra.mxu0 0
    %1868 = vmatprep.subr.bf16.mxu0 %v1812
    %1869 = vmatpush1.bf16.msra.mxu0 %v1809
    %1870 = vmatprep.subr.bf16.mxu0 %v1744
    %1871 = vmatpush1.bf16.msra.mxu0 %v1743
    %1872 = vmatprep.subr.bf16.mxu0 %v1741
    %1873 = vmatpush1.bf16.msra.mxu0 %v1740
    %1874 = vmatprep.subr.bf16.mxu0 0
    %1875 = vmatpush2.bf16.msra.mxu0 0
    %1876 = vmatprep.subr.bf16.mxu0 0
    %1877 = vmatpush2.bf16.msra.mxu0 0
    %1878 = vmatprep.subr.bf16.mxu0 0
    %1879 = vmatpush2.bf16.msra.mxu0 0
    %1880 = vmatprep.subr.bf16.mxu0 0
    %1881 = vmatpush2.bf16.msra.mxu0 0
    %1882 = vmatprep.subr.bf16.mxu0 0
    %1883 = vmatpush2.bf16.msra.mxu0 0
    %1884 = vmatprep.subr.bf16.mxu0 0
    %1885 = vmatpush2.bf16.msra.mxu0 0
    %1886 = vmatprep.subr.bf16.mxu0 0
    %1887 = vmatpush2.bf16.msra.mxu0 0
    %1888 = vmatprep.subr.bf16.mxu0 0
    %1889 = vmatpush2.bf16.msra.mxu0 0
    %1890 = vmatprep.mubr.bf16.mxu0 0
    %1891 = vmatmul.mubr.bf16.gmra.mxu0 %v1805
    %v1892 = vpop.f32.mrf.mxu0
    %v1893 = vadd.f32 %v1852, %v1892
    %v1894 = vpop.f32.mrf.mxu0
    %v1895 = vadd.f32 %v1854, %v1894
    %v1896 = vpop.f32.mrf.mxu0
    %v1897 = vpop.f32.mrf.mxu0
    %1898 = vdwg.mxu0
    %1899 = vmatprep.subr.bf16.mxu0 0
    %1900 = vmatpush1.bf16.msra.mxu0 %v1715
    %1901 = vmatprep.subr.bf16.mxu0 0
    %1902 = vmatpush1.bf16.msra.mxu0 %v1712
    %1903 = vmatprep.subr.bf16.mxu0 0
    %1904 = vmatpush1.bf16.msra.mxu0 %v1709
    %1905 = vmatprep.subr.bf16.mxu0 0
    %1906 = vmatpush1.bf16.msra.mxu0 %v1706
    %1907 = vmatprep.subr.bf16.mxu0 0
    %1908 = vmatpush1.bf16.msra.mxu0 %v1703
    %1909 = vmatprep.subr.bf16.mxu0 0
    %1910 = vmatpush1.bf16.msra.mxu0 %v1700
    %1911 = vmatprep.subr.bf16.mxu0 0
    %1912 = vmatpush1.bf16.msra.mxu0 %v1697
    %1913 = vmatprep.subr.bf16.mxu0 0
    %1914 = vmatpush1.bf16.msra.mxu0 %v1694
    %1915 = vmatprep.subr.bf16.mxu0 0
    %1916 = vmatpush2.bf16.msra.mxu0 %v1739
    %1917 = vmatprep.subr.bf16.mxu0 0
    %1918 = vmatpush2.bf16.msra.mxu0 %v1736
    %1919 = vmatprep.subr.bf16.mxu0 0
    %1920 = vmatpush2.bf16.msra.mxu0 %v1733
    %1921 = vmatprep.subr.bf16.mxu0 0
    %1922 = vmatpush2.bf16.msra.mxu0 %v1730
    %1923 = vmatprep.subr.bf16.mxu0 0
    %1924 = vmatpush2.bf16.msra.mxu0 %v1727
    %1925 = vmatprep.subr.bf16.mxu0 0
    %1926 = vmatpush2.bf16.msra.mxu0 %v1724
    %1927 = vmatprep.subr.bf16.mxu0 0
    %1928 = vmatpush2.bf16.msra.mxu0 %v1721
    %1929 = vmatprep.subr.bf16.mxu0 0
    %1930 = vmatpush2.bf16.msra.mxu0 %v1718
    %1931 = vmatprep.mubr.bf16.mxu0 %v1483
    %1932 = vmatmul.mubr.bf16.gmra.mxu0 %v1482
    %v1933 = vpop.f32.mrf.mxu0
    %v1934 = vadd.f32 %v1498, %v1933
    %v1935 = vpop.f32.mrf.mxu0
    %v1936 = vpop.f32.mrf.mxu0
    %v1937 = vpop.f32.mrf.mxu0
    %1938 = vdwg.mxu0
    %1939 = vmatprep.subr.bf16.mxu0 0
    %1940 = vmatpush1.bf16.msra.mxu0 0
    %1941 = vmatprep.subr.bf16.mxu0 0
    %1942 = vmatpush1.bf16.msra.mxu0 0
    %1943 = vmatprep.subr.bf16.mxu0 0
    %1944 = vmatpush1.bf16.msra.mxu0 0
    %1945 = vmatprep.subr.bf16.mxu0 0
    %1946 = vmatpush1.bf16.msra.mxu0 0
    %1947 = vmatprep.subr.bf16.mxu0 0
    %1948 = vmatpush1.bf16.msra.mxu0 0
    %1949 = vmatprep.subr.bf16.mxu0 0
    %1950 = vmatpush1.bf16.msra.mxu0 %v1815
    %1951 = vmatprep.subr.bf16.mxu0 0
    %1952 = vmatpush1.bf16.msra.mxu0 %v1745
    %1953 = vmatprep.subr.bf16.mxu0 0
    %1954 = vmatpush1.bf16.msra.mxu0 %v1742
    %1955 = vmatprep.subr.bf16.mxu0 0
    %1956 = vmatpush2.bf16.msra.mxu0 0
    %1957 = vmatprep.subr.bf16.mxu0 0
    %1958 = vmatpush2.bf16.msra.mxu0 0
    %1959 = vmatprep.subr.bf16.mxu0 0
    %1960 = vmatpush2.bf16.msra.mxu0 0
    %1961 = vmatprep.subr.bf16.mxu0 0
    %1962 = vmatpush2.bf16.msra.mxu0 0
    %1963 = vmatprep.subr.bf16.mxu0 0
    %1964 = vmatpush2.bf16.msra.mxu0 0
    %1965 = vmatprep.subr.bf16.mxu0 0
    %1966 = vmatpush2.bf16.msra.mxu0 0
    %1967 = vmatprep.subr.bf16.mxu0 0
    %1968 = vmatpush2.bf16.msra.mxu0 0
    %1969 = vmatprep.subr.bf16.mxu0 0
    %1970 = vmatpush2.bf16.msra.mxu0 0
    %1971 = vmatprep.mubr.bf16.mxu0 0
    %1972 = vmatmul.mubr.bf16.gmra.mxu0 %v1805
    %v1973 = vpop.f32.mrf.mxu0
    %v1974 = vadd.f32 %v1934, %v1973
    %v1975 = vpop.f32.mrf.mxu0
    %v1976 = vpop.f32.mrf.mxu0
    %v1977 = vpop.f32.mrf.mxu0
    %1978 = vdwg.mxu0
    %vm1979 = vcmp.gt.f32.partialorder %v1893, 0.0
    %vm1980 = vcmp.gt.f32.partialorder %v1895, 0.0
    %vm1981 = vcmp.gt.f32.partialorder %v1974, 0.0
    %v1982 = vmul.f32 %v1893, 1.442695
    %v1983 = vpow.pop %v1982
    %v1984 = vmul.f32 %v1895, 1.442695
    %v1985 = vpow.pop %v1984
    %v1986 = vmul.f32 %v1974, 1.442695
    %v1987 = vpow.pop %v1986
    %v1988 = vsub.f32 %v1983, 1.0
    %v1989 = vsub.f32 %v1985, 1.0
    %v1990 = vsub.f32 %v1987, 1.0
    %v1991 = vsel %vm1979, %v1893, %v1988
    %v1992 = vsel %vm1980, %v1895, %v1989
    %v1993 = vsel %vm1981, %v1974, %v1990
    %v1994 = vld [vmem:[%s6] sm:$0xf]
    %v1995 = vld [vmem:[%s6 + $0x4] sm:$0xf]
    %v1996 = vld [vmem:[%s6 + $0x8] sm:$0xf]
    %v1997 = vld [vmem:[%s6 + $0xc] sm:$0xf]
    %v1998 = vld [vmem:[%s6 + $0x10] sm:$0xf]
    %v1999 = vld [vmem:[%s6 + $0x14] sm:$0xf]
    %v2000 = vld [vmem:[%s6 + $0x18] sm:$0xf]
    %v2001 = vld [vmem:[%s6 + $0x1c] sm:$0xf]
    %v2002 = vld [vmem:[%s6 + $0x20] sm:$0xf]
    %v2003 = vld [vmem:[%s6 + $0x24] sm:$0xf]
    %v2004 = vld [vmem:[%s6 + $0x28] sm:$0xf]
    %v2005 = vld [vmem:[%s6 + $0x2c] sm:$0xf]
    %v2006 = vld [vmem:[%s6 + $0x30] sm:$0xf]
    %v2007 = vld [vmem:[%s6 + $0x34] sm:$0xf]
    %v2008 = vld [vmem:[%s6 + $0x38] sm:$0xf]
    %v2009 = vld [vmem:[%s6 + $0x3c] sm:$0xf]
    %v2010 = vld [vmem:[%s6 + $0x40] sm:$0xf]
    %v2011 = vld [vmem:[%s6 + $0x44] sm:$0xf]
    %v2012 = vld [vmem:[%s6 + $0x48] sm:$0xf]
    %v2013 = vld [vmem:[%s6 + $0x4c] sm:$0xf]
    %v2014 = vld [vmem:[%s6 + $0x50] sm:$0xf]
    %v2015 = vld [vmem:[%s6 + $0x54] sm:$0xf]
    %v2016 = vld [vmem:[%s6 + $0x58] sm:$0xf]
    %v2017 = vld [vmem:[%s6 + $0x5c] sm:$0xf]
    %v2018 = vld [vmem:[%s6 + $0x60] sm:$0xf]
    %v2019 = vld [vmem:[%s6 + $0x64] sm:$0xf]
    %v2020 = vld [vmem:[%s6 + $0x68] sm:$0xf]
    %v2021 = vld [vmem:[%s6 + $0x6c] sm:$0xf]
    %v2022 = vld [vmem:[%s6 + $0x70] sm:$0xf]
    %v2023 = vld [vmem:[%s6 + $0x74] sm:$0xf]
    %v2024 = vld [vmem:[%s6 + $0x78] sm:$0xf]
    %v2025 = vld [vmem:[%s6 + $0x7c] sm:$0xf]
    %v2026 = vld [vmem:[%s6 + $0x80] sm:$0xf]
    %v2027 = vld [vmem:[%s6 + $0x84] sm:$0xf]
    %v2028 = vld [vmem:[%s6 + $0x88] sm:$0xf]
    %v2029 = vld [vmem:[%s6 + $0x8c] sm:$0xf]
    %v2030 = vld [vmem:[%s6 + $0x90] sm:$0xf]
    %v2031 = vld [vmem:[%s6 + $0x94] sm:$0x3]
    %v2032 = vpack.c.bf16 %v1991, %v1991
    %v2033 = vpack.c.bf16 %v1992, %v1992
    %v2034 = vpack.c.bf16 %v1993, %v1993
    %v2035 = vld [vmem:[%s7] sm:$0x1]
    %v2037 = vlaneseq
    %v2038 = vshrl.u32 %v2037, 7
    %v2039 = vsub.s32 0, %v2038
    %v2040 = vrot.slane %v2035, %v2039
    %v2080 = vunpack.c.l.b16 %v1994
    %v2081 = vunpack.c.l.b16 %v1995
    %v2082 = vunpack.c.l.b16 %v1996
    %v2083 = vunpack.c.l.b16 %v1997
    %v2084 = vunpack.c.l.b16 %v1998
    %v2085 = vunpack.c.l.b16 %v1999
    %v2086 = vunpack.c.l.b16 %v2000
    %v2087 = vunpack.c.l.b16 %v2001
    %v2088 = vunpack.c.l.b16 %v2002
    %v2089 = vunpack.c.l.b16 %v2003
    %v2090 = vunpack.c.l.b16 %v2004
    %v2091 = vunpack.c.l.b16 %v2005
    %v2092 = vunpack.c.l.b16 %v2006
    %v2093 = vunpack.c.l.b16 %v2007
    %v2094 = vunpack.c.l.b16 %v2008
    %v2095 = vunpack.c.l.b16 %v2009
    %v2096 = vunpack.c.l.b16 %v2010
    %v2097 = vunpack.c.l.b16 %v2011
    %v2098 = vunpack.c.l.b16 %v2012
    %v2099 = vunpack.c.l.b16 %v2013
    %v2100 = vunpack.c.l.b16 %v2014
    %v2101 = vunpack.c.l.b16 %v2015
    %v2102 = vunpack.c.l.b16 %v2016
    %v2103 = vunpack.c.l.b16 %v2017
    %v2104 = vunpack.c.l.b16 %v2018
    %v2105 = vunpack.c.l.b16 %v2019
    %v2106 = vunpack.c.l.b16 %v2020
    %v2107 = vunpack.c.l.b16 %v2021
    %v2108 = vunpack.c.l.b16 %v2022
    %v2109 = vunpack.c.l.b16 %v2023
    %v2110 = vunpack.c.l.b16 %v2024
    %v2111 = vunpack.c.l.b16 %v2025
    %v2112 = vunpack.c.l.b16 %v2026
    %v2113 = vunpack.c.l.b16 %v2027
    %v2114 = vunpack.c.l.b16 %v2028
    %v2115 = vunpack.c.l.b16 %v2029
    %v2116 = vunpack.c.l.b16 %v2030
    %v2117 = vunpack.c.l.b16 %v2031
    %v2118 = vpack.c.b16 %v2081, %v2080
    %v2119 = vpack.c.b16 %v2083, %v2082
    %v2120 = vpack.c.b16 %v2085, %v2084
    %v2121 = vpack.c.b16 %v2087, %v2086
    %v2122 = vpack.c.b16 %v2089, %v2088
    %v2123 = vpack.c.b16 %v2091, %v2090
    %v2124 = vpack.c.b16 %v2093, %v2092
    %v2125 = vpack.c.b16 %v2095, %v2094
    %v2126 = vpack.c.b16 %v2097, %v2096
    %v2127 = vpack.c.b16 %v2099, %v2098
    %v2128 = vpack.c.b16 %v2101, %v2100
    %v2129 = vpack.c.b16 %v2103, %v2102
    %v2130 = vpack.c.b16 %v2105, %v2104
    %v2131 = vpack.c.b16 %v2107, %v2106
    %v2132 = vpack.c.b16 %v2109, %v2108
    %v2133 = vpack.c.b16 %v2111, %v2110
    %v2134 = vpack.c.b16 %v2113, %v2112
    %v2135 = vpack.c.b16 %v2115, %v2114
    %v2136 = vpack.c.b16 %v2117, %v2116
    %v2156 = vsel %vm1803, %v2034, 0
    %v2159 = vsel %vm1807, %v2136, 0
    %2161 = vmatprep.subr.bf16.mxu0 0
    %2162 = vmatpush1.bf16.msra.mxu0 %v2125
    %2163 = vmatprep.subr.bf16.mxu0 0
    %2164 = vmatpush1.bf16.msra.mxu0 %v2124
    %2165 = vmatprep.subr.bf16.mxu0 0
    %2166 = vmatpush1.bf16.msra.mxu0 %v2123
    %2167 = vmatprep.subr.bf16.mxu0 0
    %2168 = vmatpush1.bf16.msra.mxu0 %v2122
    %2169 = vmatprep.subr.bf16.mxu0 0
    %2170 = vmatpush1.bf16.msra.mxu0 %v2121
    %2171 = vmatprep.subr.bf16.mxu0 0
    %2172 = vmatpush1.bf16.msra.mxu0 %v2120
    %2173 = vmatprep.subr.bf16.mxu0 0
    %2174 = vmatpush1.bf16.msra.mxu0 %v2119
    %2175 = vmatprep.subr.bf16.mxu0 0
    %2176 = vmatpush1.bf16.msra.mxu0 %v2118
    %2177 = vmatprep.subr.bf16.mxu0 0
    %2178 = vmatpush2.bf16.msra.mxu0 %v2133
    %2179 = vmatprep.subr.bf16.mxu0 0
    %2180 = vmatpush2.bf16.msra.mxu0 %v2132
    %2181 = vmatprep.subr.bf16.mxu0 0
    %2182 = vmatpush2.bf16.msra.mxu0 %v2131
    %2183 = vmatprep.subr.bf16.mxu0 0
    %2184 = vmatpush2.bf16.msra.mxu0 %v2130
    %2185 = vmatprep.subr.bf16.mxu0 0
    %2186 = vmatpush2.bf16.msra.mxu0 %v2129
    %2187 = vmatprep.subr.bf16.mxu0 0
    %2188 = vmatpush2.bf16.msra.mxu0 %v2128
    %2189 = vmatprep.subr.bf16.mxu0 0
    %2190 = vmatpush2.bf16.msra.mxu0 %v2127
    %2191 = vmatprep.subr.bf16.mxu0 0
    %2192 = vmatpush2.bf16.msra.mxu0 %v2126
    %2193 = vmatprep.mubr.bf16.mxu0 %v2033
    %2194 = vmatmul.mubr.bf16.gmra.mxu0 %v2032
    %v2195 = vpop.f32.mrf.mxu0
    %v2196 = vadd.f32 %v2040, %v2195
    %v2197 = vpop.f32.mrf.mxu0
    %v2198 = vpop.f32.mrf.mxu0
    %v2199 = vpop.f32.mrf.mxu0
    %2200 = vdwg.mxu0
    %2201 = vmatprep.subr.bf16.mxu0 0
    %2202 = vmatpush1.bf16.msra.mxu0 0
    %2203 = vmatprep.subr.bf16.mxu0 0
    %2204 = vmatpush1.bf16.msra.mxu0 0
    %2205 = vmatprep.subr.bf16.mxu0 0
    %2206 = vmatpush1.bf16.msra.mxu0 0
    %2207 = vmatprep.subr.bf16.mxu0 0
    %2208 = vmatpush1.bf16.msra.mxu0 0
    %2209 = vmatprep.subr.bf16.mxu0 0
    %2210 = vmatpush1.bf16.msra.mxu0 0
    %2211 = vmatprep.subr.bf16.mxu0 0
    %2212 = vmatpush1.bf16.msra.mxu0 %v2159
    %2213 = vmatprep.subr.bf16.mxu0 0
    %2214 = vmatpush1.bf16.msra.mxu0 %v2135
    %2215 = vmatprep.subr.bf16.mxu0 0
    %2216 = vmatpush1.bf16.msra.mxu0 %v2134
    %2217 = vmatprep.subr.bf16.mxu0 0
    %2218 = vmatpush2.bf16.msra.mxu0 0
    %2219 = vmatprep.subr.bf16.mxu0 0
    %2220 = vmatpush2.bf16.msra.mxu0 0
    %2221 = vmatprep.subr.bf16.mxu0 0
    %2222 = vmatpush2.bf16.msra.mxu0 0
    %2223 = vmatprep.subr.bf16.mxu0 0
    %2224 = vmatpush2.bf16.msra.mxu0 0
    %2225 = vmatprep.subr.bf16.mxu0 0
    %2226 = vmatpush2.bf16.msra.mxu0 0
    %2227 = vmatprep.subr.bf16.mxu0 0
    %2228 = vmatpush2.bf16.msra.mxu0 0
    %2229 = vmatprep.subr.bf16.mxu0 0
    %2230 = vmatpush2.bf16.msra.mxu0 0
    %2231 = vmatprep.subr.bf16.mxu0 0
    %2232 = vmatpush2.bf16.msra.mxu0 0
    %2233 = vmatprep.mubr.bf16.mxu0 0
    %2234 = vmatmul.mubr.bf16.gmra.mxu0 %v2156
    %v2235 = vpop.f32.mrf.mxu0
    %v2236 = vadd.f32 %v2196, %v2235
    %v2237 = vpop.f32.mrf.mxu0
    %v2238 = vpop.f32.mrf.mxu0
    %v2239 = vpop.f32.mrf.mxu0
    %2240 = vdwg.mxu0
    %vm2241 = vcmask 523264
    %2242 = vst.msk [vmem:[#allocation2] sm:$0xff] %vm2241, %v2236
    %v2243 = vmul.f32 %v2236, 0.5
    %v2244 = vmul.f32 %v2243, 1.442695
    %v2245 = vpow.pop %v2244
    %v2246 = vld [vmem:[%s1] sm:$0xff]
    %2248 = vrot.lane.b32.xlu0 %v2246, 32
    %v2249 = vpop.permute.xlu0 %2248
    %v2251 = vmul.f32 %v2245, %v2249
    %2253 = vrot.lane.b32.xlu0 %v2251, 96
    %v2254 = vpop.permute.xlu0 %2253
    %v2256 = vadd.f32 %v2236, %v2254
    %v2257 = vld [vmem:[%s8] sm:$0xff]
    %v2258 = vld [vmem:[%s8 + $0x8] sm:$0xf]
    %v2259 = vld [vmem:[%s8 + $0xc] sm:$0xff]
    %v2260 = vld [vmem:[%s8 + $0x14] sm:$0xf]
    %v2261 = vld [vmem:[%s8 + $0x18] sm:$0xff]
    %v2262 = vld [vmem:[%s8 + $0x20] sm:$0xf]
    %v2263 = vld [vmem:[%s8 + $0x24] sm:$0xff]
    %v2264 = vld [vmem:[%s8 + $0x2c] sm:$0xf]
    %v2265 = vpack.c.bf16 %v2256, %v2256
    %v2266 = vld [vmem:[%s9] sm:$0x7]
    %v2268 = vlaneseq
    %v2269 = vshrl.u32 %v2268, 7
    %v2270 = vsub.s32 0, %v2269
    %v2271 = vrot.slane %v2266, %v2270
    %v2272 = vlaneseq
    %v2273 = vshrl.u32 %v2272, 7
    %v2274 = vsub.s32 1, %v2273
    %v2275 = vrot.slane %v2266, %v2274
    %v2276 = vlaneseq
    %v2277 = vshrl.u32 %v2276, 7
    %v2278 = vsub.s32 2, %v2277
    %v2279 = vrot.slane %v2266, %v2278
    %v2291 = vunpack.c.l.b16 %v2257
    %v2292 = vunpack.c.h.b16 %v2257
    %v2293 = vunpack.c.l.b16 %v2258
    %v2294 = vunpack.c.l.b16 %v2259
    %v2295 = vunpack.c.h.b16 %v2259
    %v2296 = vunpack.c.l.b16 %v2260
    %v2297 = vunpack.c.l.b16 %v2261
    %v2298 = vunpack.c.h.b16 %v2261
    %v2299 = vunpack.c.l.b16 %v2262
    %v2300 = vunpack.c.l.b16 %v2263
    %v2301 = vunpack.c.h.b16 %v2263
    %v2302 = vunpack.c.l.b16 %v2264
    %v2303 = vpack.c.b16 %v2294, %v2291
    %v2304 = vpack.c.b16 %v2295, %v2292
    %v2305 = vpack.c.b16 %v2296, %v2293
    %v2306 = vpack.c.b16 %v2300, %v2297
    %v2307 = vpack.c.b16 %v2301, %v2298
    %v2308 = vpack.c.b16 %v2302, %v2299
    %vm2315 = vcmask 261120
    %v2317 = vsel %vm2315, %v2265, 0
    %2319 = vmatprep.subr.bf16.mxu0 0
    %2320 = vmatpush1.bf16.msra.mxu0 0
    %2321 = vmatprep.subr.bf16.mxu0 0
    %2322 = vmatpush1.bf16.msra.mxu0 0
    %2323 = vmatprep.subr.bf16.mxu0 0
    %2324 = vmatpush1.bf16.msra.mxu0 0
    %2325 = vmatprep.subr.bf16.mxu0 0
    %2326 = vmatpush1.bf16.msra.mxu0 0
    %2327 = vmatprep.subr.bf16.mxu0 0
    %2328 = vmatpush1.bf16.msra.mxu0 0
    %2329 = vmatprep.subr.bf16.mxu0 0
    %2330 = vmatpush1.bf16.msra.mxu0 0
    %2331 = vmatprep.subr.bf16.mxu0 %v2307
    %2332 = vmatpush1.bf16.msra.mxu0 %v2306
    %2333 = vmatprep.subr.bf16.mxu0 %v2304
    %2334 = vmatpush1.bf16.msra.mxu0 %v2303
    %2335 = vmatprep.subr.bf16.mxu0 0
    %2336 = vmatpush2.bf16.msra.mxu0 0
    %2337 = vmatprep.subr.bf16.mxu0 0
    %2338 = vmatpush2.bf16.msra.mxu0 0
    %2339 = vmatprep.subr.bf16.mxu0 0
    %2340 = vmatpush2.bf16.msra.mxu0 0
    %2341 = vmatprep.subr.bf16.mxu0 0
    %2342 = vmatpush2.bf16.msra.mxu0 0
    %2343 = vmatprep.subr.bf16.mxu0 0
    %2344 = vmatpush2.bf16.msra.mxu0 0
    %2345 = vmatprep.subr.bf16.mxu0 0
    %2346 = vmatpush2.bf16.msra.mxu0 0
    %2347 = vmatprep.subr.bf16.mxu0 0
    %2348 = vmatpush2.bf16.msra.mxu0 0
    %2349 = vmatprep.subr.bf16.mxu0 0
    %2350 = vmatpush2.bf16.msra.mxu0 0
    %2351 = vmatprep.mubr.bf16.mxu0 0
    %2352 = vmatmul.mubr.bf16.gmra.mxu0 %v2317
    %v2353 = vpop.f32.mrf.mxu0
    %v2354 = vadd.f32 %v2271, %v2353
    %v2355 = vpop.f32.mrf.mxu0
    %v2356 = vadd.f32 %v2275, %v2355
    %v2357 = vpop.f32.mrf.mxu0
    %v2358 = vpop.f32.mrf.mxu0
    %2359 = vdwg.mxu0
    %2360 = vmatprep.subr.bf16.mxu0 0
    %2361 = vmatpush1.bf16.msra.mxu0 0
    %2362 = vmatprep.subr.bf16.mxu0 0
    %2363 = vmatpush1.bf16.msra.mxu0 0
    %2364 = vmatprep.subr.bf16.mxu0 0
    %2365 = vmatpush1.bf16.msra.mxu0 0
    %2366 = vmatprep.subr.bf16.mxu0 0
    %2367 = vmatpush1.bf16.msra.mxu0 0
    %2368 = vmatprep.subr.bf16.mxu0 0
    %2369 = vmatpush1.bf16.msra.mxu0 0
    %2370 = vmatprep.subr.bf16.mxu0 0
    %2371 = vmatpush1.bf16.msra.mxu0 0
    %2372 = vmatprep.subr.bf16.mxu0 0
    %2373 = vmatpush1.bf16.msra.mxu0 %v2308
    %2374 = vmatprep.subr.bf16.mxu0 0
    %2375 = vmatpush1.bf16.msra.mxu0 %v2305
    %2376 = vmatprep.subr.bf16.mxu0 0
    %2377 = vmatpush2.bf16.msra.mxu0 0
    %2378 = vmatprep.subr.bf16.mxu0 0
    %2379 = vmatpush2.bf16.msra.mxu0 0
    %2380 = vmatprep.subr.bf16.mxu0 0
    %2381 = vmatpush2.bf16.msra.mxu0 0
    %2382 = vmatprep.subr.bf16.mxu0 0
    %2383 = vmatpush2.bf16.msra.mxu0 0
    %2384 = vmatprep.subr.bf16.mxu0 0
    %2385 = vmatpush2.bf16.msra.mxu0 0
    %2386 = vmatprep.subr.bf16.mxu0 0
    %2387 = vmatpush2.bf16.msra.mxu0 0
    %2388 = vmatprep.subr.bf16.mxu0 0
    %2389 = vmatpush2.bf16.msra.mxu0 0
    %2390 = vmatprep.subr.bf16.mxu0 0
    %2391 = vmatpush2.bf16.msra.mxu0 0
    %2392 = vmatprep.mubr.bf16.mxu0 0
    %2393 = vmatmul.mubr.bf16.gmra.mxu0 %v2317
    %v2394 = vpop.f32.mrf.mxu0
    %v2395 = vadd.f32 %v2279, %v2394
    %v2396 = vpop.f32.mrf.mxu0
    %v2397 = vpop.f32.mrf.mxu0
    %v2398 = vpop.f32.mrf.mxu0
    %2399 = vdwg.mxu0
    %vm2400 = vcmp.gt.f32.partialorder %v2354, 0.0
    %vm2401 = vcmp.gt.f32.partialorder %v2356, 0.0
    %vm2402 = vcmp.gt.f32.partialorder %v2395, 0.0
    %v2403 = vmul.f32 %v2354, 1.442695
    %v2404 = vpow.pop %v2403
    %v2405 = vmul.f32 %v2356, 1.442695
    %v2406 = vpow.pop %v2405
    %v2407 = vmul.f32 %v2395, 1.442695
    %v2408 = vpow.pop %v2407
    %v2409 = vsub.f32 %v2404, 1.0
    %v2410 = vsub.f32 %v2406, 1.0
    %v2411 = vsub.f32 %v2408, 1.0
    %v2412 = vsel %vm2400, %v2354, %v2409
    %v2413 = vsel %vm2401, %v2356, %v2410
    %v2414 = vsel %vm2402, %v2395, %v2411
    %v2415 = vld [vmem:[%s10] sm:$0xff]
    %v2416 = vld [vmem:[%s10 + $0x8] sm:$0xf]
    %v2417 = vld [vmem:[%s10 + $0xc] sm:$0xff]
    %v2418 = vld [vmem:[%s10 + $0x14] sm:$0xf]
    %v2419 = vld [vmem:[%s10 + $0x18] sm:$0xff]
    %v2420 = vld [vmem:[%s10 + $0x20] sm:$0xf]
    %v2421 = vld [vmem:[%s10 + $0x24] sm:$0xff]
    %v2422 = vld [vmem:[%s10 + $0x2c] sm:$0xf]
    %v2423 = vld [vmem:[%s10 + $0x30] sm:$0xff]
    %v2424 = vld [vmem:[%s10 + $0x38] sm:$0xf]
    %v2425 = vld [vmem:[%s10 + $0x3c] sm:$0xff]
    %v2426 = vld [vmem:[%s10 + $0x44] sm:$0xf]
    %v2427 = vld [vmem:[%s10 + $0x48] sm:$0xff]
    %v2428 = vld [vmem:[%s10 + $0x50] sm:$0xf]
    %v2429 = vld [vmem:[%s10 + $0x54] sm:$0xff]
    %v2430 = vld [vmem:[%s10 + $0x5c] sm:$0xf]
    %v2431 = vld [vmem:[%s10 + $0x60] sm:$0xff]
    %v2432 = vld [vmem:[%s10 + $0x68] sm:$0xf]
    %v2433 = vld [vmem:[%s10 + $0x6c] sm:$0xff]
    %v2434 = vld [vmem:[%s10 + $0x74] sm:$0xf]
    %v2435 = vld [vmem:[%s10 + $0x78] sm:$0xff]
    %v2436 = vld [vmem:[%s10 + $0x80] sm:$0xf]
    %v2437 = vld [vmem:[%s10 + $0x84] sm:$0xff]
    %v2438 = vld [vmem:[%s10 + $0x8c] sm:$0xf]
    %v2439 = vld [vmem:[%s10 + $0x90] sm:$0xff]
    %v2440 = vld [vmem:[%s10 + $0x98] sm:$0xf]
    %v2441 = vld [vmem:[%s10 + $0x9c] sm:$0xff]
    %v2442 = vld [vmem:[%s10 + $0xa4] sm:$0xf]
    %v2443 = vld [vmem:[%s10 + $0xa8] sm:$0xff]
    %v2444 = vld [vmem:[%s10 + $0xb0] sm:$0xf]
    %v2445 = vld [vmem:[%s10 + $0xb4] sm:$0xff]
    %v2446 = vld [vmem:[%s10 + $0xbc] sm:$0xf]
    %v2447 = vld [vmem:[%s10 + $0xc0] sm:$0xff]
    %v2448 = vld [vmem:[%s10 + $0xc8] sm:$0xf]
    %v2449 = vld [vmem:[%s10 + $0xcc] sm:$0xff]
    %v2450 = vld [vmem:[%s10 + $0xd4] sm:$0xf]
    %v2451 = vld [vmem:[%s10 + $0xd8] sm:$0xff]
    %v2452 = vld [vmem:[%s10 + $0xe0] sm:$0xf]
    %v2453 = vld [vmem:[%s10 + $0xe4] sm:$0xff]
    %v2454 = vld [vmem:[%s10 + $0xec] sm:$0xf]
    %v2455 = vld [vmem:[%s10 + $0xf0] sm:$0xff]
    %v2456 = vld [vmem:[%s10 + $0xf8] sm:$0xf]
    %v2457 = vld [vmem:[%s10 + $0xfc] sm:$0xff]
    %v2458 = vld [vmem:[%s10 + $0x104] sm:$0xf]
    %v2459 = vld [vmem:[%s10 + $0x108] sm:$0xff]
    %v2460 = vld [vmem:[%s10 + $0x110] sm:$0xf]
    %v2461 = vld [vmem:[%s10 + $0x114] sm:$0xff]
    %v2462 = vld [vmem:[%s10 + $0x11c] sm:$0xf]
    %v2463 = vld [vmem:[%s10 + $0x120] sm:$0xff]
    %v2464 = vld [vmem:[%s10 + $0x128] sm:$0xf]
    %v2465 = vld [vmem:[%s10 + $0x12c] sm:$0xff]
    %v2466 = vld [vmem:[%s10 + $0x134] sm:$0xf]
    %v2467 = vld [vmem:[%s10 + $0x138] sm:$0xff]
    %v2468 = vld [vmem:[%s10 + $0x140] sm:$0xf]
    %v2469 = vld [vmem:[%s10 + $0x144] sm:$0xff]
    %v2470 = vld [vmem:[%s10 + $0x14c] sm:$0xf]
    %v2471 = vld [vmem:[%s10 + $0x150] sm:$0xff]
    %v2472 = vld [vmem:[%s10 + $0x158] sm:$0xf]
    %v2473 = vld [vmem:[%s10 + $0x15c] sm:$0xff]
    %v2474 = vld [vmem:[%s10 + $0x164] sm:$0xf]
    %v2475 = vld [vmem:[%s10 + $0x168] sm:$0xff]
    %v2476 = vld [vmem:[%s10 + $0x170] sm:$0xf]
    %v2477 = vld [vmem:[%s10 + $0x174] sm:$0xff]
    %v2478 = vld [vmem:[%s10 + $0x17c] sm:$0xf]
    %v2479 = vld [vmem:[%s10 + $0x180] sm:$0xff]
    %v2480 = vld [vmem:[%s10 + $0x188] sm:$0xf]
    %v2481 = vld [vmem:[%s10 + $0x18c] sm:$0xff]
    %v2482 = vld [vmem:[%s10 + $0x194] sm:$0xf]
    %v2483 = vld [vmem:[%s10 + $0x198] sm:$0xff]
    %v2484 = vld [vmem:[%s10 + $0x1a0] sm:$0xf]
    %v2485 = vld [vmem:[%s10 + $0x1a4] sm:$0xff]
    %v2486 = vld [vmem:[%s10 + $0x1ac] sm:$0xf]
    %v2487 = vld [vmem:[%s10 + $0x1b0] sm:$0xff]
    %v2488 = vld [vmem:[%s10 + $0x1b8] sm:$0xf]
    %v2489 = vld [vmem:[%s10 + $0x1bc] sm:$0x33]
    %v2490 = vld [vmem:[%s10 + $0x1c4] sm:$0x3]
    %v2491 = vpack.c.bf16 %v2412, %v2412
    %v2492 = vpack.c.bf16 %v2413, %v2413
    %v2493 = vpack.c.bf16 %v2414, %v2414
    %v2494 = vld [vmem:[%s11] sm:$0x7]
    %v2496 = vlaneseq
    %v2497 = vshrl.u32 %v2496, 7
    %v2498 = vsub.s32 0, %v2497
    %v2499 = vrot.slane %v2494, %v2498
    %v2500 = vlaneseq
    %v2501 = vshrl.u32 %v2500, 7
    %v2502 = vsub.s32 1, %v2501
    %v2503 = vrot.slane %v2494, %v2502
    %v2504 = vlaneseq
    %v2505 = vshrl.u32 %v2504, 7
    %v2506 = vsub.s32 2, %v2505
    %v2507 = vrot.slane %v2494, %v2506
    %v2587 = vunpack.c.l.b16 %v2415
    %v2588 = vunpack.c.h.b16 %v2415
    %v2589 = vunpack.c.l.b16 %v2416
    %v2590 = vunpack.c.l.b16 %v2417
    %v2591 = vunpack.c.h.b16 %v2417
    %v2592 = vunpack.c.l.b16 %v2418
    %v2593 = vunpack.c.l.b16 %v2419
    %v2594 = vunpack.c.h.b16 %v2419
    %v2595 = vunpack.c.l.b16 %v2420
    %v2596 = vunpack.c.l.b16 %v2421
    %v2597 = vunpack.c.h.b16 %v2421
    %v2598 = vunpack.c.l.b16 %v2422
    %v2599 = vunpack.c.l.b16 %v2423
    %v2600 = vunpack.c.h.b16 %v2423
    %v2601 = vunpack.c.l.b16 %v2424
    %v2602 = vunpack.c.l.b16 %v2425
    %v2603 = vunpack.c.h.b16 %v2425
    %v2604 = vunpack.c.l.b16 %v2426
    %v2605 = vunpack.c.l.b16 %v2427
    %v2606 = vunpack.c.h.b16 %v2427
    %v2607 = vunpack.c.l.b16 %v2428
    %v2608 = vunpack.c.l.b16 %v2429
    %v2609 = vunpack.c.h.b16 %v2429
    %v2610 = vunpack.c.l.b16 %v2430
    %v2611 = vunpack.c.l.b16 %v2431
    %v2612 = vunpack.c.h.b16 %v2431
    %v2613 = vunpack.c.l.b16 %v2432
    %v2614 = vunpack.c.l.b16 %v2433
    %v2615 = vunpack.c.h.b16 %v2433
    %v2616 = vunpack.c.l.b16 %v2434
    %v2617 = vunpack.c.l.b16 %v2435
    %v2618 = vunpack.c.h.b16 %v2435
    %v2619 = vunpack.c.l.b16 %v2436
    %v2620 = vunpack.c.l.b16 %v2437
    %v2621 = vunpack.c.h.b16 %v2437
    %v2622 = vunpack.c.l.b16 %v2438
    %v2623 = vunpack.c.l.b16 %v2439
    %v2624 = vunpack.c.h.b16 %v2439
    %v2625 = vunpack.c.l.b16 %v2440
    %v2626 = vunpack.c.l.b16 %v2441
    %v2627 = vunpack.c.h.b16 %v2441
    %v2628 = vunpack.c.l.b16 %v2442
    %v2629 = vunpack.c.l.b16 %v2443
    %v2630 = vunpack.c.h.b16 %v2443
    %v2631 = vunpack.c.l.b16 %v2444
    %v2632 = vunpack.c.l.b16 %v2445
    %v2633 = vunpack.c.h.b16 %v2445
    %v2634 = vunpack.c.l.b16 %v2446
    %v2635 = vunpack.c.l.b16 %v2447
    %v2636 = vunpack.c.h.b16 %v2447
    %v2637 = vunpack.c.l.b16 %v2448
    %v2638 = vunpack.c.l.b16 %v2449
    %v2639 = vunpack.c.h.b16 %v2449
    %v2640 = vunpack.c.l.b16 %v2450
    %v2641 = vunpack.c.l.b16 %v2451
    %v2642 = vunpack.c.h.b16 %v2451
    %v2643 = vunpack.c.l.b16 %v2452
    %v2644 = vunpack.c.l.b16 %v2453
    %v2645 = vunpack.c.h.b16 %v2453
    %v2646 = vunpack.c.l.b16 %v2454
    %v2647 = vunpack.c.l.b16 %v2455
    %v2648 = vunpack.c.h.b16 %v2455
    %v2649 = vunpack.c.l.b16 %v2456
    %v2650 = vunpack.c.l.b16 %v2457
    %v2651 = vunpack.c.h.b16 %v2457
    %v2652 = vunpack.c.l.b16 %v2458
    %v2653 = vunpack.c.l.b16 %v2459
    %v2654 = vunpack.c.h.b16 %v2459
    %v2655 = vunpack.c.l.b16 %v2460
    %v2656 = vunpack.c.l.b16 %v2461
    %v2657 = vunpack.c.h.b16 %v2461
    %v2658 = vunpack.c.l.b16 %v2462
    %v2659 = vunpack.c.l.b16 %v2463
    %v2660 = vunpack.c.h.b16 %v2463
    %v2661 = vunpack.c.l.b16 %v2464
    %v2662 = vunpack.c.l.b16 %v2465
    %v2663 = vunpack.c.h.b16 %v2465
    %v2664 = vunpack.c.l.b16 %v2466
    %v2665 = vunpack.c.l.b16 %v2467
    %v2666 = vunpack.c.h.b16 %v2467
    %v2667 = vunpack.c.l.b16 %v2468
    %v2668 = vunpack.c.l.b16 %v2469
    %v2669 = vunpack.c.h.b16 %v2469
    %v2670 = vunpack.c.l.b16 %v2470
    %v2671 = vunpack.c.l.b16 %v2471
    %v2672 = vunpack.c.h.b16 %v2471
    %v2673 = vunpack.c.l.b16 %v2472
    %v2674 = vunpack.c.l.b16 %v2473
    %v2675 = vunpack.c.h.b16 %v2473
    %v2676 = vunpack.c.l.b16 %v2474
    %v2677 = vunpack.c.l.b16 %v2475
    %v2678 = vunpack.c.h.b16 %v2475
    %v2679 = vunpack.c.l.b16 %v2476
    %v2680 = vunpack.c.l.b16 %v2477
    %v2681 = vunpack.c.h.b16 %v2477
    %v2682 = vunpack.c.l.b16 %v2478
    %v2683 = vunpack.c.l.b16 %v2479
    %v2684 = vunpack.c.h.b16 %v2479
    %v2685 = vunpack.c.l.b16 %v2480
    %v2686 = vunpack.c.l.b16 %v2481
    %v2687 = vunpack.c.h.b16 %v2481
    %v2688 = vunpack.c.l.b16 %v2482
    %v2689 = vunpack.c.l.b16 %v2483
    %v2690 = vunpack.c.h.b16 %v2483
    %v2691 = vunpack.c.l.b16 %v2484
    %v2692 = vunpack.c.l.b16 %v2485
    %v2693 = vunpack.c.h.b16 %v2485
    %v2694 = vunpack.c.l.b16 %v2486
    %v2695 = vunpack.c.l.b16 %v2487
    %v2696 = vunpack.c.h.b16 %v2487
    %v2697 = vunpack.c.l.b16 %v2488
    %v2698 = vunpack.c.l.b16 %v2489
    %v2699 = vunpack.c.h.b16 %v2489
    %v2700 = vunpack.c.l.b16 %v2490
    %v2701 = vpack.c.b16 %v2590, %v2587
    %v2702 = vpack.c.b16 %v2591, %v2588
    %v2703 = vpack.c.b16 %v2592, %v2589
    %v2704 = vpack.c.b16 %v2596, %v2593
    %v2705 = vpack.c.b16 %v2597, %v2594
    %v2706 = vpack.c.b16 %v2598, %v2595
    %v2707 = vpack.c.b16 %v2602, %v2599
    %v2708 = vpack.c.b16 %v2603, %v2600
    %v2709 = vpack.c.b16 %v2604, %v2601
    %v2710 = vpack.c.b16 %v2608, %v2605
    %v2711 = vpack.c.b16 %v2609, %v2606
    %v2712 = vpack.c.b16 %v2610, %v2607
    %v2713 = vpack.c.b16 %v2614, %v2611
    %v2714 = vpack.c.b16 %v2615, %v2612
    %v2715 = vpack.c.b16 %v2616, %v2613
    %v2716 = vpack.c.b16 %v2620, %v2617
    %v2717 = vpack.c.b16 %v2621, %v2618
    %v2718 = vpack.c.b16 %v2622, %v2619
    %v2719 = vpack.c.b16 %v2626, %v2623
    %v2720 = vpack.c.b16 %v2627, %v2624
    %v2721 = vpack.c.b16 %v2628, %v2625
    %v2722 = vpack.c.b16 %v2632, %v2629
    %v2723 = vpack.c.b16 %v2633, %v2630
    %v2724 = vpack.c.b16 %v2634, %v2631
    %v2725 = vpack.c.b16 %v2638, %v2635
    %v2726 = vpack.c.b16 %v2639, %v2636
    %v2727 = vpack.c.b16 %v2640, %v2637
    %v2728 = vpack.c.b16 %v2644, %v2641
    %v2729 = vpack.c.b16 %v2645, %v2642
    %v2730 = vpack.c.b16 %v2646, %v2643
    %v2731 = vpack.c.b16 %v2650, %v2647
    %v2732 = vpack.c.b16 %v2651, %v2648
    %v2733 = vpack.c.b16 %v2652, %v2649
    %v2734 = vpack.c.b16 %v2656, %v2653
    %v2735 = vpack.c.b16 %v2657, %v2654
    %v2736 = vpack.c.b16 %v2658, %v2655
    %v2737 = vpack.c.b16 %v2662, %v2659
    %v2738 = vpack.c.b16 %v2663, %v2660
    %v2739 = vpack.c.b16 %v2664, %v2661
    %v2740 = vpack.c.b16 %v2668, %v2665
    %v2741 = vpack.c.b16 %v2669, %v2666
    %v2742 = vpack.c.b16 %v2670, %v2667
    %v2743 = vpack.c.b16 %v2674, %v2671
    %v2744 = vpack.c.b16 %v2675, %v2672
    %v2745 = vpack.c.b16 %v2676, %v2673
    %v2746 = vpack.c.b16 %v2680, %v2677
    %v2747 = vpack.c.b16 %v2681, %v2678
    %v2748 = vpack.c.b16 %v2682, %v2679
    %v2749 = vpack.c.b16 %v2686, %v2683
    %v2750 = vpack.c.b16 %v2687, %v2684
    %v2751 = vpack.c.b16 %v2688, %v2685
    %v2752 = vpack.c.b16 %v2692, %v2689
    %v2753 = vpack.c.b16 %v2693, %v2690
    %v2754 = vpack.c.b16 %v2694, %v2691
    %v2755 = vpack.c.b16 %v2698, %v2695
    %v2756 = vpack.c.b16 %v2699, %v2696
    %v2757 = vpack.c.b16 %v2700, %v2697
    %v2813 = vsel %vm1803, %v2493, 0
    %v2816 = vsel %vm1807, %v2755, 0
    %v2819 = vsel %vm1807, %v2756, 0
    %v2822 = vsel %vm1807, %v2757, 0
    %2824 = vmatprep.subr.bf16.mxu0 %v2723
    %2825 = vmatpush1.bf16.msra.mxu0 %v2722
    %2826 = vmatprep.subr.bf16.mxu0 %v2720
    %2827 = vmatpush1.bf16.msra.mxu0 %v2719
    %2828 = vmatprep.subr.bf16.mxu0 %v2717
    %2829 = vmatpush1.bf16.msra.mxu0 %v2716
    %2830 = vmatprep.subr.bf16.mxu0 %v2714
    %2831 = vmatpush1.bf16.msra.mxu0 %v2713
    %2832 = vmatprep.subr.bf16.mxu0 %v2711
    %2833 = vmatpush1.bf16.msra.mxu0 %v2710
    %2834 = vmatprep.subr.bf16.mxu0 %v2708
    %2835 = vmatpush1.bf16.msra.mxu0 %v2707
    %2836 = vmatprep.subr.bf16.mxu0 %v2705
    %2837 = vmatpush1.bf16.msra.mxu0 %v2704
    %2838 = vmatprep.subr.bf16.mxu0 %v2702
    %2839 = vmatpush1.bf16.msra.mxu0 %v2701
    %2840 = vmatprep.subr.bf16.mxu0 %v2747
    %2841 = vmatpush2.bf16.msra.mxu0 %v2746
    %2842 = vmatprep.subr.bf16.mxu0 %v2744
    %2843 = vmatpush2.bf16.msra.mxu0 %v2743
    %2844 = vmatprep.subr.bf16.mxu0 %v2741
    %2845 = vmatpush2.bf16.msra.mxu0 %v2740
    %2846 = vmatprep.subr.bf16.mxu0 %v2738
    %2847 = vmatpush2.bf16.msra.mxu0 %v2737
    %2848 = vmatprep.subr.bf16.mxu0 %v2735
    %2849 = vmatpush2.bf16.msra.mxu0 %v2734
    %2850 = vmatprep.subr.bf16.mxu0 %v2732
    %2851 = vmatpush2.bf16.msra.mxu0 %v2731
    %2852 = vmatprep.subr.bf16.mxu0 %v2729
    %2853 = vmatpush2.bf16.msra.mxu0 %v2728
    %2854 = vmatprep.subr.bf16.mxu0 %v2726
    %2855 = vmatpush2.bf16.msra.mxu0 %v2725
    %2856 = vmatprep.mubr.bf16.mxu0 %v2492
    %2857 = vmatmul.mubr.bf16.gmra.mxu0 %v2491
    %v2858 = vpop.f32.mrf.mxu0
    %v2859 = vadd.f32 %v2499, %v2858
    %v2860 = vpop.f32.mrf.mxu0
    %v2861 = vadd.f32 %v2503, %v2860
    %v2862 = vpop.f32.mrf.mxu0
    %v2863 = vpop.f32.mrf.mxu0
    %2864 = vdwg.mxu0
    %2865 = vmatprep.subr.bf16.mxu0 0
    %2866 = vmatpush1.bf16.msra.mxu0 0
    %2867 = vmatprep.subr.bf16.mxu0 0
    %2868 = vmatpush1.bf16.msra.mxu0 0
    %2869 = vmatprep.subr.bf16.mxu0 0
    %2870 = vmatpush1.bf16.msra.mxu0 0
    %2871 = vmatprep.subr.bf16.mxu0 0
    %2872 = vmatpush1.bf16.msra.mxu0 0
    %2873 = vmatprep.subr.bf16.mxu0 0
    %2874 = vmatpush1.bf16.msra.mxu0 0
    %2875 = vmatprep.subr.bf16.mxu0 %v2819
    %2876 = vmatpush1.bf16.msra.mxu0 %v2816
    %2877 = vmatprep.subr.bf16.mxu0 %v2753
    %2878 = vmatpush1.bf16.msra.mxu0 %v2752
    %2879 = vmatprep.subr.bf16.mxu0 %v2750
    %2880 = vmatpush1.bf16.msra.mxu0 %v2749
    %2881 = vmatprep.subr.bf16.mxu0 0
    %2882 = vmatpush2.bf16.msra.mxu0 0
    %2883 = vmatprep.subr.bf16.mxu0 0
    %2884 = vmatpush2.bf16.msra.mxu0 0
    %2885 = vmatprep.subr.bf16.mxu0 0
    %2886 = vmatpush2.bf16.msra.mxu0 0
    %2887 = vmatprep.subr.bf16.mxu0 0
    %2888 = vmatpush2.bf16.msra.mxu0 0
    %2889 = vmatprep.subr.bf16.mxu0 0
    %2890 = vmatpush2.bf16.msra.mxu0 0
    %2891 = vmatprep.subr.bf16.mxu0 0
    %2892 = vmatpush2.bf16.msra.mxu0 0
    %2893 = vmatprep.subr.bf16.mxu0 0
    %2894 = vmatpush2.bf16.msra.mxu0 0
    %2895 = vmatprep.subr.bf16.mxu0 0
    %2896 = vmatpush2.bf16.msra.mxu0 0
    %2897 = vmatprep.mubr.bf16.mxu0 0
    %2898 = vmatmul.mubr.bf16.gmra.mxu0 %v2813
    %v2899 = vpop.f32.mrf.mxu0
    %v2900 = vadd.f32 %v2859, %v2899
    %v2901 = vpop.f32.mrf.mxu0
    %v2902 = vadd.f32 %v2861, %v2901
    %v2903 = vpop.f32.mrf.mxu0
    %v2904 = vpop.f32.mrf.mxu0
    %2905 = vdwg.mxu0
    %2906 = vmatprep.subr.bf16.mxu0 0
    %2907 = vmatpush1.bf16.msra.mxu0 %v2724
    %2908 = vmatprep.subr.bf16.mxu0 0
    %2909 = vmatpush1.bf16.msra.mxu0 %v2721
    %2910 = vmatprep.subr.bf16.mxu0 0
    %2911 = vmatpush1.bf16.msra.mxu0 %v2718
    %2912 = vmatprep.subr.bf16.mxu0 0
    %2913 = vmatpush1.bf16.msra.mxu0 %v2715
    %2914 = vmatprep.subr.bf16.mxu0 0
    %2915 = vmatpush1.bf16.msra.mxu0 %v2712
    %2916 = vmatprep.subr.bf16.mxu0 0
    %2917 = vmatpush1.bf16.msra.mxu0 %v2709
    %2918 = vmatprep.subr.bf16.mxu0 0
    %2919 = vmatpush1.bf16.msra.mxu0 %v2706
    %2920 = vmatprep.subr.bf16.mxu0 0
    %2921 = vmatpush1.bf16.msra.mxu0 %v2703
    %2922 = vmatprep.subr.bf16.mxu0 0
    %2923 = vmatpush2.bf16.msra.mxu0 %v2748
    %2924 = vmatprep.subr.bf16.mxu0 0
    %2925 = vmatpush2.bf16.msra.mxu0 %v2745
    %2926 = vmatprep.subr.bf16.mxu0 0
    %2927 = vmatpush2.bf16.msra.mxu0 %v2742
    %2928 = vmatprep.subr.bf16.mxu0 0
    %2929 = vmatpush2.bf16.msra.mxu0 %v2739
    %2930 = vmatprep.subr.bf16.mxu0 0
    %2931 = vmatpush2.bf16.msra.mxu0 %v2736
    %2932 = vmatprep.subr.bf16.mxu0 0
    %2933 = vmatpush2.bf16.msra.mxu0 %v2733
    %2934 = vmatprep.subr.bf16.mxu0 0
    %2935 = vmatpush2.bf16.msra.mxu0 %v2730
    %2936 = vmatprep.subr.bf16.mxu0 0
    %2937 = vmatpush2.bf16.msra.mxu0 %v2727
    %2938 = vmatprep.mubr.bf16.mxu0 %v2492
    %2939 = vmatmul.mubr.bf16.gmra.mxu0 %v2491
    %v2940 = vpop.f32.mrf.mxu0
    %v2941 = vadd.f32 %v2507, %v2940
    %v2942 = vpop.f32.mrf.mxu0
    %v2943 = vpop.f32.mrf.mxu0
    %v2944 = vpop.f32.mrf.mxu0
    %2945 = vdwg.mxu0
    %2946 = vmatprep.subr.bf16.mxu0 0
    %2947 = vmatpush1.bf16.msra.mxu0 0
    %2948 = vmatprep.subr.bf16.mxu0 0
    %2949 = vmatpush1.bf16.msra.mxu0 0
    %2950 = vmatprep.subr.bf16.mxu0 0
    %2951 = vmatpush1.bf16.msra.mxu0 0
    %2952 = vmatprep.subr.bf16.mxu0 0
    %2953 = vmatpush1.bf16.msra.mxu0 0
    %2954 = vmatprep.subr.bf16.mxu0 0
    %2955 = vmatpush1.bf16.msra.mxu0 0
    %2956 = vmatprep.subr.bf16.mxu0 0
    %2957 = vmatpush1.bf16.msra.mxu0 %v2822
    %2958 = vmatprep.subr.bf16.mxu0 0
    %2959 = vmatpush1.bf16.msra.mxu0 %v2754
    %2960 = vmatprep.subr.bf16.mxu0 0
    %2961 = vmatpush1.bf16.msra.mxu0 %v2751
    %2962 = vmatprep.subr.bf16.mxu0 0
    %2963 = vmatpush2.bf16.msra.mxu0 0
    %2964 = vmatprep.subr.bf16.mxu0 0
    %2965 = vmatpush2.bf16.msra.mxu0 0
    %2966 = vmatprep.subr.bf16.mxu0 0
    %2967 = vmatpush2.bf16.msra.mxu0 0
    %2968 = vmatprep.subr.bf16.mxu0 0
    %2969 = vmatpush2.bf16.msra.mxu0 0
    %2970 = vmatprep.subr.bf16.mxu0 0
    %2971 = vmatpush2.bf16.msra.mxu0 0
    %2972 = vmatprep.subr.bf16.mxu0 0
    %2973 = vmatpush2.bf16.msra.mxu0 0
    %2974 = vmatprep.subr.bf16.mxu0 0
    %2975 = vmatpush2.bf16.msra.mxu0 0
    %2976 = vmatprep.subr.bf16.mxu0 0
    %2977 = vmatpush2.bf16.msra.mxu0 0
    %2978 = vmatprep.mubr.bf16.mxu0 0
    %2979 = vmatmul.mubr.bf16.gmra.mxu0 %v2813
    %v2980 = vpop.f32.mrf.mxu0
    %v2981 = vadd.f32 %v2941, %v2980
    %v2982 = vpop.f32.mrf.mxu0
    %v2983 = vpop.f32.mrf.mxu0
    %v2984 = vpop.f32.mrf.mxu0
    %2985 = vdwg.mxu0
    %vm2986 = vcmp.gt.f32.partialorder %v2900, 0.0
    %vm2987 = vcmp.gt.f32.partialorder %v2902, 0.0
    %vm2988 = vcmp.gt.f32.partialorder %v2981, 0.0
    %v2989 = vmul.f32 %v2900, 1.442695
    %v2990 = vpow.pop %v2989
    %v2991 = vmul.f32 %v2902, 1.442695
    %v2992 = vpow.pop %v2991
    %v2993 = vmul.f32 %v2981, 1.442695
    %v2994 = vpow.pop %v2993
    %v2995 = vsub.f32 %v2990, 1.0
    %v2996 = vsub.f32 %v2992, 1.0
    %v2997 = vsub.f32 %v2994, 1.0
    %v2998 = vsel %vm2986, %v2900, %v2995
    %v2999 = vsel %vm2987, %v2902, %v2996
    %v3000 = vsel %vm2988, %v2981, %v2997
    %v3001 = vld [vmem:[%s12] sm:$0xff]
    %v3002 = vld [vmem:[%s12 + $0x8] sm:$0xff]
    %v3003 = vld [vmem:[%s12 + $0x10] sm:$0xff]
    %v3004 = vld [vmem:[%s12 + $0x18] sm:$0xf]
    %v3005 = vld [vmem:[%s12 + $0x1c] sm:$0xff]
    %v3006 = vld [vmem:[%s12 + $0x24] sm:$0xff]
    %v3007 = vld [vmem:[%s12 + $0x2c] sm:$0xff]
    %v3008 = vld [vmem:[%s12 + $0x34] sm:$0xf]
    %v3009 = vld [vmem:[%s12 + $0x38] sm:$0xff]
    %v3010 = vld [vmem:[%s12 + $0x40] sm:$0xff]
    %v3011 = vld [vmem:[%s12 + $0x48] sm:$0xff]
    %v3012 = vld [vmem:[%s12 + $0x50] sm:$0xf]
    %v3013 = vld [vmem:[%s12 + $0x54] sm:$0xff]
    %v3014 = vld [vmem:[%s12 + $0x5c] sm:$0xff]
    %v3015 = vld [vmem:[%s12 + $0x64] sm:$0xff]
    %v3016 = vld [vmem:[%s12 + $0x6c] sm:$0xf]
    %v3017 = vld [vmem:[%s12 + $0x70] sm:$0xff]
    %v3018 = vld [vmem:[%s12 + $0x78] sm:$0xff]
    %v3019 = vld [vmem:[%s12 + $0x80] sm:$0xff]
    %v3020 = vld [vmem:[%s12 + $0x88] sm:$0xf]
    %v3021 = vld [vmem:[%s12 + $0x8c] sm:$0xff]
    %v3022 = vld [vmem:[%s12 + $0x94] sm:$0xff]
    %v3023 = vld [vmem:[%s12 + $0x9c] sm:$0xff]
    %v3024 = vld [vmem:[%s12 + $0xa4] sm:$0xf]
    %v3025 = vld [vmem:[%s12 + $0xa8] sm:$0xff]
    %v3026 = vld [vmem:[%s12 + $0xb0] sm:$0xff]
    %v3027 = vld [vmem:[%s12 + $0xb8] sm:$0xff]
    %v3028 = vld [vmem:[%s12 + $0xc0] sm:$0xf]
    %v3029 = vld [vmem:[%s12 + $0xc4] sm:$0xff]
    %v3030 = vld [vmem:[%s12 + $0xcc] sm:$0xff]
    %v3031 = vld [vmem:[%s12 + $0xd4] sm:$0xff]
    %v3032 = vld [vmem:[%s12 + $0xdc] sm:$0xf]
    %v3033 = vld [vmem:[%s12 + $0xe0] sm:$0xff]
    %v3034 = vld [vmem:[%s12 + $0xe8] sm:$0xff]
    %v3035 = vld [vmem:[%s12 + $0xf0] sm:$0xff]
    %v3036 = vld [vmem:[%s12 + $0xf8] sm:$0xf]
    %v3037 = vld [vmem:[%s12 + $0xfc] sm:$0xff]
    %v3038 = vld [vmem:[%s12 + $0x104] sm:$0xff]
    %v3039 = vld [vmem:[%s12 + $0x10c] sm:$0xff]
    %v3040 = vld [vmem:[%s12 + $0x114] sm:$0xf]
    %v3041 = vld [vmem:[%s12 + $0x118] sm:$0xff]
    %v3042 = vld [vmem:[%s12 + $0x120] sm:$0xff]
    %v3043 = vld [vmem:[%s12 + $0x128] sm:$0xff]
    %v3044 = vld [vmem:[%s12 + $0x130] sm:$0xf]
    %v3045 = vld [vmem:[%s12 + $0x134] sm:$0xff]
    %v3046 = vld [vmem:[%s12 + $0x13c] sm:$0xff]
    %v3047 = vld [vmem:[%s12 + $0x144] sm:$0xff]
    %v3048 = vld [vmem:[%s12 + $0x14c] sm:$0xf]
    %v3049 = vld [vmem:[%s12 + $0x150] sm:$0xff]
    %v3050 = vld [vmem:[%s12 + $0x158] sm:$0xff]
    %v3051 = vld [vmem:[%s12 + $0x160] sm:$0xff]
    %v3052 = vld [vmem:[%s12 + $0x168] sm:$0xf]
    %v3053 = vld [vmem:[%s12 + $0x16c] sm:$0xff]
    %v3054 = vld [vmem:[%s12 + $0x174] sm:$0xff]
    %v3055 = vld [vmem:[%s12 + $0x17c] sm:$0xff]
    %v3056 = vld [vmem:[%s12 + $0x184] sm:$0xf]
    %v3057 = vld [vmem:[%s12 + $0x188] sm:$0xff]
    %v3058 = vld [vmem:[%s12 + $0x190] sm:$0xff]
    %v3059 = vld [vmem:[%s12 + $0x198] sm:$0xff]
    %v3060 = vld [vmem:[%s12 + $0x1a0] sm:$0xf]
    %v3061 = vld [vmem:[%s12 + $0x1a4] sm:$0xff]
    %v3062 = vld [vmem:[%s12 + $0x1ac] sm:$0xff]
    %v3063 = vld [vmem:[%s12 + $0x1b4] sm:$0xff]
    %v3064 = vld [vmem:[%s12 + $0x1bc] sm:$0xf]
    %v3065 = vld [vmem:[%s12 + $0x1c0] sm:$0xff]
    %v3066 = vld [vmem:[%s12 + $0x1c8] sm:$0xff]
    %v3067 = vld [vmem:[%s12 + $0x1d0] sm:$0xff]
    %v3068 = vld [vmem:[%s12 + $0x1d8] sm:$0xf]
    %v3069 = vld [vmem:[%s12 + $0x1dc] sm:$0xff]
    %v3070 = vld [vmem:[%s12 + $0x1e4] sm:$0xff]
    %v3071 = vld [vmem:[%s12 + $0x1ec] sm:$0xff]
    %v3072 = vld [vmem:[%s12 + $0x1f4] sm:$0xf]
    %v3073 = vld [vmem:[%s12 + $0x1f8] sm:$0xff]
    %v3074 = vld [vmem:[%s12 + $0x200] sm:$0xff]
    %v3075 = vld [vmem:[%s12 + $0x208] sm:$0xff]
    %v3076 = vld [vmem:[%s12 + $0x210] sm:$0xf]
    %v3077 = vld [vmem:[%s12 + $0x214] sm:$0xff]
    %v3078 = vld [vmem:[%s12 + $0x21c] sm:$0xff]
    %v3079 = vld [vmem:[%s12 + $0x224] sm:$0xff]
    %v3080 = vld [vmem:[%s12 + $0x22c] sm:$0xf]
    %v3081 = vld [vmem:[%s12 + $0x230] sm:$0xff]
    %v3082 = vld [vmem:[%s12 + $0x238] sm:$0xff]
    %v3083 = vld [vmem:[%s12 + $0x240] sm:$0xff]
    %v3084 = vld [vmem:[%s12 + $0x248] sm:$0xf]
    %v3085 = vld [vmem:[%s12 + $0x24c] sm:$0xff]
    %v3086 = vld [vmem:[%s12 + $0x254] sm:$0xff]
    %v3087 = vld [vmem:[%s12 + $0x25c] sm:$0xff]
    %v3088 = vld [vmem:[%s12 + $0x264] sm:$0xf]
    %v3089 = vld [vmem:[%s12 + $0x268] sm:$0xff]
    %v3090 = vld [vmem:[%s12 + $0x270] sm:$0xff]
    %v3091 = vld [vmem:[%s12 + $0x278] sm:$0xff]
    %v3092 = vld [vmem:[%s12 + $0x280] sm:$0xf]
    %v3093 = vld [vmem:[%s12 + $0x284] sm:$0xff]
    %v3094 = vld [vmem:[%s12 + $0x28c] sm:$0xff]
    %v3095 = vld [vmem:[%s12 + $0x294] sm:$0xff]
    %v3096 = vld [vmem:[%s12 + $0x29c] sm:$0xf]
    %v3097 = vld [vmem:[%s12 + $0x2a0] sm:$0xff]
    %v3098 = vld [vmem:[%s12 + $0x2a8] sm:$0xff]
    %v3099 = vld [vmem:[%s12 + $0x2b0] sm:$0xff]
    %v3100 = vld [vmem:[%s12 + $0x2b8] sm:$0xf]
    %v3101 = vld [vmem:[%s12 + $0x2bc] sm:$0xff]
    %v3102 = vld [vmem:[%s12 + $0x2c4] sm:$0xff]
    %v3103 = vld [vmem:[%s12 + $0x2cc] sm:$0xff]
    %v3104 = vld [vmem:[%s12 + $0x2d4] sm:$0xf]
    %v3105 = vld [vmem:[%s12 + $0x2d8] sm:$0xff]
    %v3106 = vld [vmem:[%s12 + $0x2e0] sm:$0xff]
    %v3107 = vld [vmem:[%s12 + $0x2e8] sm:$0xff]
    %v3108 = vld [vmem:[%s12 + $0x2f0] sm:$0xf]
    %v3109 = vld [vmem:[%s12 + $0x2f4] sm:$0xff]
    %v3110 = vld [vmem:[%s12 + $0x2fc] sm:$0xff]
    %v3111 = vld [vmem:[%s12 + $0x304] sm:$0xff]
    %v3112 = vld [vmem:[%s12 + $0x30c] sm:$0xf]
    %v3113 = vld [vmem:[%s12 + $0x310] sm:$0xff]
    %v3114 = vld [vmem:[%s12 + $0x318] sm:$0xff]
    %v3115 = vld [vmem:[%s12 + $0x320] sm:$0xff]
    %v3116 = vld [vmem:[%s12 + $0x328] sm:$0xf]
    %v3117 = vld [vmem:[%s12 + $0x32c] sm:$0xff]
    %v3118 = vld [vmem:[%s12 + $0x334] sm:$0xff]
    %v3119 = vld [vmem:[%s12 + $0x33c] sm:$0xff]
    %v3120 = vld [vmem:[%s12 + $0x344] sm:$0xf]
    %v3121 = vld [vmem:[%s12 + $0x348] sm:$0xff]
    %v3122 = vld [vmem:[%s12 + $0x350] sm:$0xff]
    %v3123 = vld [vmem:[%s12 + $0x358] sm:$0xff]
    %v3124 = vld [vmem:[%s12 + $0x360] sm:$0xf]
    %v3125 = vld [vmem:[%s12 + $0x364] sm:$0xff]
    %v3126 = vld [vmem:[%s12 + $0x36c] sm:$0xff]
    %v3127 = vld [vmem:[%s12 + $0x374] sm:$0xff]
    %v3128 = vld [vmem:[%s12 + $0x37c] sm:$0xf]
    %v3129 = vld [vmem:[%s12 + $0x380] sm:$0xff]
    %v3130 = vld [vmem:[%s12 + $0x388] sm:$0xff]
    %v3131 = vld [vmem:[%s12 + $0x390] sm:$0xff]
    %v3132 = vld [vmem:[%s12 + $0x398] sm:$0xf]
    %v3133 = vld [vmem:[%s12 + $0x39c] sm:$0xff]
    %v3134 = vld [vmem:[%s12 + $0x3a4] sm:$0xff]
    %v3135 = vld [vmem:[%s12 + $0x3ac] sm:$0xff]
    %v3136 = vld [vmem:[%s12 + $0x3b4] sm:$0xf]
    %v3137 = vld [vmem:[%s12 + $0x3b8] sm:$0xff]
    %v3138 = vld [vmem:[%s12 + $0x3c0] sm:$0xff]
    %v3139 = vld [vmem:[%s12 + $0x3c8] sm:$0xff]
    %v3140 = vld [vmem:[%s12 + $0x3d0] sm:$0xf]
    %v3141 = vld [vmem:[%s12 + $0x3d4] sm:$0xff]
    %v3142 = vld [vmem:[%s12 + $0x3dc] sm:$0xff]
    %v3143 = vld [vmem:[%s12 + $0x3e4] sm:$0xff]
    %v3144 = vld [vmem:[%s12 + $0x3ec] sm:$0xf]
    %v3145 = vld [vmem:[%s12 + $0x3f0] sm:$0xff]
    %v3146 = vld [vmem:[%s12 + $0x3f8] sm:$0xff]
    %v3147 = vld [vmem:[%s12 + $0x400] sm:$0xff]
    %v3148 = vld [vmem:[%s12 + $0x408] sm:$0xf]
    %v3149 = vld [vmem:[%s12 + $0x40c] sm:$0x33]
    %v3150 = vld [vmem:[%s12 + $0x414] sm:$0x33]
    %v3151 = vld [vmem:[%s12 + $0x41c] sm:$0x33]
    %v3152 = vld [vmem:[%s12 + $0x424] sm:$0x3]
    %v3153 = vpack.c.bf16 %v2998, %v2998
    %v3154 = vpack.c.bf16 %v2999, %v2999
    %v3155 = vpack.c.bf16 %v3000, %v3000
    %v3156 = vld [vmem:[%s13] sm:$0xff]
    %v3158 = vlaneseq
    %v3159 = vshrl.u32 %v3158, 7
    %v3160 = vsub.s32 0, %v3159
    %v3161 = vrot.slane %v3156, %v3160
    %v3162 = vlaneseq
    %v3163 = vshrl.u32 %v3162, 7
    %v3164 = vsub.s32 1, %v3163
    %v3165 = vrot.slane %v3156, %v3164
    %v3166 = vlaneseq
    %v3167 = vshrl.u32 %v3166, 7
    %v3168 = vsub.s32 2, %v3167
    %v3169 = vrot.slane %v3156, %v3168
    %v3170 = vlaneseq
    %v3171 = vshrl.u32 %v3170, 7
    %v3172 = vsub.s32 3, %v3171
    %v3173 = vrot.slane %v3156, %v3172
    %v3174 = vlaneseq
    %v3175 = vshrl.u32 %v3174, 7
    %v3176 = vsub.s32 4, %v3175
    %v3177 = vrot.slane %v3156, %v3176
    %v3178 = vlaneseq
    %v3179 = vshrl.u32 %v3178, 7
    %v3180 = vsub.s32 5, %v3179
    %v3181 = vrot.slane %v3156, %v3180
    %v3182 = vlaneseq
    %v3183 = vshrl.u32 %v3182, 7
    %v3184 = vsub.s32 6, %v3183
    %v3185 = vrot.slane %v3156, %v3184
    %v3345 = vunpack.c.l.b16 %v3001
    %v3346 = vunpack.c.h.b16 %v3001
    %v3347 = vunpack.c.l.b16 %v3002
    %v3348 = vunpack.c.h.b16 %v3002
    %v3349 = vunpack.c.l.b16 %v3003
    %v3350 = vunpack.c.h.b16 %v3003
    %v3351 = vunpack.c.l.b16 %v3004
    %v3352 = vunpack.c.l.b16 %v3005
    %v3353 = vunpack.c.h.b16 %v3005
    %v3354 = vunpack.c.l.b16 %v3006
    %v3355 = vunpack.c.h.b16 %v3006
    %v3356 = vunpack.c.l.b16 %v3007
    %v3357 = vunpack.c.h.b16 %v3007
    %v3358 = vunpack.c.l.b16 %v3008
    %v3359 = vunpack.c.l.b16 %v3009
    %v3360 = vunpack.c.h.b16 %v3009
    %v3361 = vunpack.c.l.b16 %v3010
    %v3362 = vunpack.c.h.b16 %v3010
    %v3363 = vunpack.c.l.b16 %v3011
    %v3364 = vunpack.c.h.b16 %v3011
    %v3365 = vunpack.c.l.b16 %v3012
    %v3366 = vunpack.c.l.b16 %v3013
    %v3367 = vunpack.c.h.b16 %v3013
    %v3368 = vunpack.c.l.b16 %v3014
    %v3369 = vunpack.c.h.b16 %v3014
    %v3370 = vunpack.c.l.b16 %v3015
    %v3371 = vunpack.c.h.b16 %v3015
    %v3372 = vunpack.c.l.b16 %v3016
    %v3373 = vunpack.c.l.b16 %v3017
    %v3374 = vunpack.c.h.b16 %v3017
    %v3375 = vunpack.c.l.b16 %v3018
    %v3376 = vunpack.c.h.b16 %v3018
    %v3377 = vunpack.c.l.b16 %v3019
    %v3378 = vunpack.c.h.b16 %v3019
    %v3379 = vunpack.c.l.b16 %v3020
    %v3380 = vunpack.c.l.b16 %v3021
    %v3381 = vunpack.c.h.b16 %v3021
    %v3382 = vunpack.c.l.b16 %v3022
    %v3383 = vunpack.c.h.b16 %v3022
    %v3384 = vunpack.c.l.b16 %v3023
    %v3385 = vunpack.c.h.b16 %v3023
    %v3386 = vunpack.c.l.b16 %v3024
    %v3387 = vunpack.c.l.b16 %v3025
    %v3388 = vunpack.c.h.b16 %v3025
    %v3389 = vunpack.c.l.b16 %v3026
    %v3390 = vunpack.c.h.b16 %v3026
    %v3391 = vunpack.c.l.b16 %v3027
    %v3392 = vunpack.c.h.b16 %v3027
    %v3393 = vunpack.c.l.b16 %v3028
    %v3394 = vunpack.c.l.b16 %v3029
    %v3395 = vunpack.c.h.b16 %v3029
    %v3396 = vunpack.c.l.b16 %v3030
    %v3397 = vunpack.c.h.b16 %v3030
    %v3398 = vunpack.c.l.b16 %v3031
    %v3399 = vunpack.c.h.b16 %v3031
    %v3400 = vunpack.c.l.b16 %v3032
    %v3401 = vunpack.c.l.b16 %v3033
    %v3402 = vunpack.c.h.b16 %v3033
    %v3403 = vunpack.c.l.b16 %v3034
    %v3404 = vunpack.c.h.b16 %v3034
    %v3405 = vunpack.c.l.b16 %v3035
    %v3406 = vunpack.c.h.b16 %v3035
    %v3407 = vunpack.c.l.b16 %v3036
    %v3408 = vunpack.c.l.b16 %v3037
    %v3409 = vunpack.c.h.b16 %v3037
    %v3410 = vunpack.c.l.b16 %v3038
    %v3411 = vunpack.c.h.b16 %v3038
    %v3412 = vunpack.c.l.b16 %v3039
    %v3413 = vunpack.c.h.b16 %v3039
    %v3414 = vunpack.c.l.b16 %v3040
    %v3415 = vunpack.c.l.b16 %v3041
    %v3416 = vunpack.c.h.b16 %v3041
    %v3417 = vunpack.c.l.b16 %v3042
    %v3418 = vunpack.c.h.b16 %v3042
    %v3419 = vunpack.c.l.b16 %v3043
    %v3420 = vunpack.c.h.b16 %v3043
    %v3421 = vunpack.c.l.b16 %v3044
    %v3422 = vunpack.c.l.b16 %v3045
    %v3423 = vunpack.c.h.b16 %v3045
    %v3424 = vunpack.c.l.b16 %v3046
    %v3425 = vunpack.c.h.b16 %v3046
    %v3426 = vunpack.c.l.b16 %v3047
    %v3427 = vunpack.c.h.b16 %v3047
    %v3428 = vunpack.c.l.b16 %v3048
    %v3429 = vunpack.c.l.b16 %v3049
    %v3430 = vunpack.c.h.b16 %v3049
    %v3431 = vunpack.c.l.b16 %v3050
    %v3432 = vunpack.c.h.b16 %v3050
    %v3433 = vunpack.c.l.b16 %v3051
    %v3434 = vunpack.c.h.b16 %v3051
    %v3435 = vunpack.c.l.b16 %v3052
    %v3436 = vunpack.c.l.b16 %v3053
    %v3437 = vunpack.c.h.b16 %v3053
    %v3438 = vunpack.c.l.b16 %v3054
    %v3439 = vunpack.c.h.b16 %v3054
    %v3440 = vunpack.c.l.b16 %v3055
    %v3441 = vunpack.c.h.b16 %v3055
    %v3442 = vunpack.c.l.b16 %v3056
    %v3443 = vunpack.c.l.b16 %v3057
    %v3444 = vunpack.c.h.b16 %v3057
    %v3445 = vunpack.c.l.b16 %v3058
    %v3446 = vunpack.c.h.b16 %v3058
    %v3447 = vunpack.c.l.b16 %v3059
    %v3448 = vunpack.c.h.b16 %v3059
    %v3449 = vunpack.c.l.b16 %v3060
    %v3450 = vunpack.c.l.b16 %v3061
    %v3451 = vunpack.c.h.b16 %v3061
    %v3452 = vunpack.c.l.b16 %v3062
    %v3453 = vunpack.c.h.b16 %v3062
    %v3454 = vunpack.c.l.b16 %v3063
    %v3455 = vunpack.c.h.b16 %v3063
    %v3456 = vunpack.c.l.b16 %v3064
    %v3457 = vunpack.c.l.b16 %v3065
    %v3458 = vunpack.c.h.b16 %v3065
    %v3459 = vunpack.c.l.b16 %v3066
    %v3460 = vunpack.c.h.b16 %v3066
    %v3461 = vunpack.c.l.b16 %v3067
    %v3462 = vunpack.c.h.b16 %v3067
    %v3463 = vunpack.c.l.b16 %v3068
    %v3464 = vunpack.c.l.b16 %v3069
    %v3465 = vunpack.c.h.b16 %v3069
    %v3466 = vunpack.c.l.b16 %v3070
    %v3467 = vunpack.c.h.b16 %v3070
    %v3468 = vunpack.c.l.b16 %v3071
    %v3469 = vunpack.c.h.b16 %v3071
    %v3470 = vunpack.c.l.b16 %v3072
    %v3471 = vunpack.c.l.b16 %v3073
    %v3472 = vunpack.c.h.b16 %v3073
    %v3473 = vunpack.c.l.b16 %v3074
    %v3474 = vunpack.c.h.b16 %v3074
    %v3475 = vunpack.c.l.b16 %v3075
    %v3476 = vunpack.c.h.b16 %v3075
    %v3477 = vunpack.c.l.b16 %v3076
    %v3478 = vunpack.c.l.b16 %v3077
    %v3479 = vunpack.c.h.b16 %v3077
    %v3480 = vunpack.c.l.b16 %v3078
    %v3481 = vunpack.c.h.b16 %v3078
    %v3482 = vunpack.c.l.b16 %v3079
    %v3483 = vunpack.c.h.b16 %v3079
    %v3484 = vunpack.c.l.b16 %v3080
    %v3485 = vunpack.c.l.b16 %v3081
    %v3486 = vunpack.c.h.b16 %v3081
    %v3487 = vunpack.c.l.b16 %v3082
    %v3488 = vunpack.c.h.b16 %v3082
    %v3489 = vunpack.c.l.b16 %v3083
    %v3490 = vunpack.c.h.b16 %v3083
    %v3491 = vunpack.c.l.b16 %v3084
    %v3492 = vunpack.c.l.b16 %v3085
    %v3493 = vunpack.c.h.b16 %v3085
    %v3494 = vunpack.c.l.b16 %v3086
    %v3495 = vunpack.c.h.b16 %v3086
    %v3496 = vunpack.c.l.b16 %v3087
    %v3497 = vunpack.c.h.b16 %v3087
    %v3498 = vunpack.c.l.b16 %v3088
    %v3499 = vunpack.c.l.b16 %v3089
    %v3500 = vunpack.c.h.b16 %v3089
    %v3501 = vunpack.c.l.b16 %v3090
    %v3502 = vunpack.c.h.b16 %v3090
    %v3503 = vunpack.c.l.b16 %v3091
    %v3504 = vunpack.c.h.b16 %v3091
    %v3505 = vunpack.c.l.b16 %v3092
    %v3506 = vunpack.c.l.b16 %v3093
    %v3507 = vunpack.c.h.b16 %v3093
    %v3508 = vunpack.c.l.b16 %v3094
    %v3509 = vunpack.c.h.b16 %v3094
    %v3510 = vunpack.c.l.b16 %v3095
    %v3511 = vunpack.c.h.b16 %v3095
    %v3512 = vunpack.c.l.b16 %v3096
    %v3513 = vunpack.c.l.b16 %v3097
    %v3514 = vunpack.c.h.b16 %v3097
    %v3515 = vunpack.c.l.b16 %v3098
    %v3516 = vunpack.c.h.b16 %v3098
    %v3517 = vunpack.c.l.b16 %v3099
    %v3518 = vunpack.c.h.b16 %v3099
    %v3519 = vunpack.c.l.b16 %v3100
    %v3520 = vunpack.c.l.b16 %v3101
    %v3521 = vunpack.c.h.b16 %v3101
    %v3522 = vunpack.c.l.b16 %v3102
    %v3523 = vunpack.c.h.b16 %v3102
    %v3524 = vunpack.c.l.b16 %v3103
    %v3525 = vunpack.c.h.b16 %v3103
    %v3526 = vunpack.c.l.b16 %v3104
    %v3527 = vunpack.c.l.b16 %v3105
    %v3528 = vunpack.c.h.b16 %v3105
    %v3529 = vunpack.c.l.b16 %v3106
    %v3530 = vunpack.c.h.b16 %v3106
    %v3531 = vunpack.c.l.b16 %v3107
    %v3532 = vunpack.c.h.b16 %v3107
    %v3533 = vunpack.c.l.b16 %v3108
    %v3534 = vunpack.c.l.b16 %v3109
    %v3535 = vunpack.c.h.b16 %v3109
    %v3536 = vunpack.c.l.b16 %v3110
    %v3537 = vunpack.c.h.b16 %v3110
    %v3538 = vunpack.c.l.b16 %v3111
    %v3539 = vunpack.c.h.b16 %v3111
    %v3540 = vunpack.c.l.b16 %v3112
    %v3541 = vunpack.c.l.b16 %v3113
    %v3542 = vunpack.c.h.b16 %v3113
    %v3543 = vunpack.c.l.b16 %v3114
    %v3544 = vunpack.c.h.b16 %v3114
    %v3545 = vunpack.c.l.b16 %v3115
    %v3546 = vunpack.c.h.b16 %v3115
    %v3547 = vunpack.c.l.b16 %v3116
    %v3548 = vunpack.c.l.b16 %v3117
    %v3549 = vunpack.c.h.b16 %v3117
    %v3550 = vunpack.c.l.b16 %v3118
    %v3551 = vunpack.c.h.b16 %v3118
    %v3552 = vunpack.c.l.b16 %v3119
    %v3553 = vunpack.c.h.b16 %v3119
    %v3554 = vunpack.c.l.b16 %v3120
    %v3555 = vunpack.c.l.b16 %v3121
    %v3556 = vunpack.c.h.b16 %v3121
    %v3557 = vunpack.c.l.b16 %v3122
    %v3558 = vunpack.c.h.b16 %v3122
    %v3559 = vunpack.c.l.b16 %v3123
    %v3560 = vunpack.c.h.b16 %v3123
    %v3561 = vunpack.c.l.b16 %v3124
    %v3562 = vunpack.c.l.b16 %v3125
    %v3563 = vunpack.c.h.b16 %v3125
    %v3564 = vunpack.c.l.b16 %v3126
    %v3565 = vunpack.c.h.b16 %v3126
    %v3566 = vunpack.c.l.b16 %v3127
    %v3567 = vunpack.c.h.b16 %v3127
    %v3568 = vunpack.c.l.b16 %v3128
    %v3569 = vunpack.c.l.b16 %v3129
    %v3570 = vunpack.c.h.b16 %v3129
    %v3571 = vunpack.c.l.b16 %v3130
    %v3572 = vunpack.c.h.b16 %v3130
    %v3573 = vunpack.c.l.b16 %v3131
    %v3574 = vunpack.c.h.b16 %v3131
    %v3575 = vunpack.c.l.b16 %v3132
    %v3576 = vunpack.c.l.b16 %v3133
    %v3577 = vunpack.c.h.b16 %v3133
    %v3578 = vunpack.c.l.b16 %v3134
    %v3579 = vunpack.c.h.b16 %v3134
    %v3580 = vunpack.c.l.b16 %v3135
    %v3581 = vunpack.c.h.b16 %v3135
    %v3582 = vunpack.c.l.b16 %v3136
    %v3583 = vunpack.c.l.b16 %v3137
    %v3584 = vunpack.c.h.b16 %v3137
    %v3585 = vunpack.c.l.b16 %v3138
    %v3586 = vunpack.c.h.b16 %v3138
    %v3587 = vunpack.c.l.b16 %v3139
    %v3588 = vunpack.c.h.b16 %v3139
    %v3589 = vunpack.c.l.b16 %v3140
    %v3590 = vunpack.c.l.b16 %v3141
    %v3591 = vunpack.c.h.b16 %v3141
    %v3592 = vunpack.c.l.b16 %v3142
    %v3593 = vunpack.c.h.b16 %v3142
    %v3594 = vunpack.c.l.b16 %v3143
    %v3595 = vunpack.c.h.b16 %v3143
    %v3596 = vunpack.c.l.b16 %v3144
    %v3597 = vunpack.c.l.b16 %v3145
    %v3598 = vunpack.c.h.b16 %v3145
    %v3599 = vunpack.c.l.b16 %v3146
    %v3600 = vunpack.c.h.b16 %v3146
    %v3601 = vunpack.c.l.b16 %v3147
    %v3602 = vunpack.c.h.b16 %v3147
    %v3603 = vunpack.c.l.b16 %v3148
    %v3604 = vunpack.c.l.b16 %v3149
    %v3605 = vunpack.c.h.b16 %v3149
    %v3606 = vunpack.c.l.b16 %v3150
    %v3607 = vunpack.c.h.b16 %v3150
    %v3608 = vunpack.c.l.b16 %v3151
    %v3609 = vunpack.c.h.b16 %v3151
    %v3610 = vunpack.c.l.b16 %v3152
    %v3611 = vpack.c.b16 %v3352, %v3345
    %v3612 = vpack.c.b16 %v3353, %v3346
    %v3613 = vpack.c.b16 %v3354, %v3347
    %v3614 = vpack.c.b16 %v3355, %v3348
    %v3615 = vpack.c.b16 %v3356, %v3349
    %v3616 = vpack.c.b16 %v3357, %v3350
    %v3617 = vpack.c.b16 %v3358, %v3351
    %v3618 = vpack.c.b16 %v3366, %v3359
    %v3619 = vpack.c.b16 %v3367, %v3360
    %v3620 = vpack.c.b16 %v3368, %v3361
    %v3621 = vpack.c.b16 %v3369, %v3362
    %v3622 = vpack.c.b16 %v3370, %v3363
    %v3623 = vpack.c.b16 %v3371, %v3364
    %v3624 = vpack.c.b16 %v3372, %v3365
    %v3625 = vpack.c.b16 %v3380, %v3373
    %v3626 = vpack.c.b16 %v3381, %v3374
    %v3627 = vpack.c.b16 %v3382, %v3375
    %v3628 = vpack.c.b16 %v3383, %v3376
    %v3629 = vpack.c.b16 %v3384, %v3377
    %v3630 = vpack.c.b16 %v3385, %v3378
    %v3631 = vpack.c.b16 %v3386, %v3379
    %v3632 = vpack.c.b16 %v3394, %v3387
    %v3633 = vpack.c.b16 %v3395, %v3388
    %v3634 = vpack.c.b16 %v3396, %v3389
    %v3635 = vpack.c.b16 %v3397, %v3390
    %v3636 = vpack.c.b16 %v3398, %v3391
    %v3637 = vpack.c.b16 %v3399, %v3392
    %v3638 = vpack.c.b16 %v3400, %v3393
    %v3639 = vpack.c.b16 %v3408, %v3401
    %v3640 = vpack.c.b16 %v3409, %v3402
    %v3641 = vpack.c.b16 %v3410, %v3403
    %v3642 = vpack.c.b16 %v3411, %v3404
    %v3643 = vpack.c.b16 %v3412, %v3405
    %v3644 = vpack.c.b16 %v3413, %v3406
    %v3645 = vpack.c.b16 %v3414, %v3407
    %v3646 = vpack.c.b16 %v3422, %v3415
    %v3647 = vpack.c.b16 %v3423, %v3416
    %v3648 = vpack.c.b16 %v3424, %v3417
    %v3649 = vpack.c.b16 %v3425, %v3418
    %v3650 = vpack.c.b16 %v3426, %v3419
    %v3651 = vpack.c.b16 %v3427, %v3420
    %v3652 = vpack.c.b16 %v3428, %v3421
    %v3653 = vpack.c.b16 %v3436, %v3429
    %v3654 = vpack.c.b16 %v3437, %v3430
    %v3655 = vpack.c.b16 %v3438, %v3431
    %v3656 = vpack.c.b16 %v3439, %v3432
    %v3657 = vpack.c.b16 %v3440, %v3433
    %v3658 = vpack.c.b16 %v3441, %v3434
    %v3659 = vpack.c.b16 %v3442, %v3435
    %v3660 = vpack.c.b16 %v3450, %v3443
    %v3661 = vpack.c.b16 %v3451, %v3444
    %v3662 = vpack.c.b16 %v3452, %v3445
    %v3663 = vpack.c.b16 %v3453, %v3446
    %v3664 = vpack.c.b16 %v3454, %v3447
    %v3665 = vpack.c.b16 %v3455, %v3448
    %v3666 = vpack.c.b16 %v3456, %v3449
    %v3667 = vpack.c.b16 %v3464, %v3457
    %v3668 = vpack.c.b16 %v3465, %v3458
    %v3669 = vpack.c.b16 %v3466, %v3459
    %v3670 = vpack.c.b16 %v3467, %v3460
    %v3671 = vpack.c.b16 %v3468, %v3461
    %v3672 = vpack.c.b16 %v3469, %v3462
    %v3673 = vpack.c.b16 %v3470, %v3463
    %v3674 = vpack.c.b16 %v3478, %v3471
    %v3675 = vpack.c.b16 %v3479, %v3472
    %v3676 = vpack.c.b16 %v3480, %v3473
    %v3677 = vpack.c.b16 %v3481, %v3474
    %v3678 = vpack.c.b16 %v3482, %v3475
    %v3679 = vpack.c.b16 %v3483, %v3476
    %v3680 = vpack.c.b16 %v3484, %v3477
    %v3681 = vpack.c.b16 %v3492, %v3485
    %v3682 = vpack.c.b16 %v3493, %v3486
    %v3683 = vpack.c.b16 %v3494, %v3487
    %v3684 = vpack.c.b16 %v3495, %v3488
    %v3685 = vpack.c.b16 %v3496, %v3489
    %v3686 = vpack.c.b16 %v3497, %v3490
    %v3687 = vpack.c.b16 %v3498, %v3491
    %v3688 = vpack.c.b16 %v3506, %v3499
    %v3689 = vpack.c.b16 %v3507, %v3500
    %v3690 = vpack.c.b16 %v3508, %v3501
    %v3691 = vpack.c.b16 %v3509, %v3502
    %v3692 = vpack.c.b16 %v3510, %v3503
    %v3693 = vpack.c.b16 %v3511, %v3504
    %v3694 = vpack.c.b16 %v3512, %v3505
    %v3695 = vpack.c.b16 %v3520, %v3513
    %v3696 = vpack.c.b16 %v3521, %v3514
    %v3697 = vpack.c.b16 %v3522, %v3515
    %v3698 = vpack.c.b16 %v3523, %v3516
    %v3699 = vpack.c.b16 %v3524, %v3517
    %v3700 = vpack.c.b16 %v3525, %v3518
    %v3701 = vpack.c.b16 %v3526, %v3519
    %v3702 = vpack.c.b16 %v3534, %v3527
    %v3703 = vpack.c.b16 %v3535, %v3528
    %v3704 = vpack.c.b16 %v3536, %v3529
    %v3705 = vpack.c.b16 %v3537, %v3530
    %v3706 = vpack.c.b16 %v3538, %v3531
    %v3707 = vpack.c.b16 %v3539, %v3532
    %v3708 = vpack.c.b16 %v3540, %v3533
    %v3709 = vpack.c.b16 %v3548, %v3541
    %v3710 = vpack.c.b16 %v3549, %v3542
    %v3711 = vpack.c.b16 %v3550, %v3543
    %v3712 = vpack.c.b16 %v3551, %v3544
    %v3713 = vpack.c.b16 %v3552, %v3545
    %v3714 = vpack.c.b16 %v3553, %v3546
    %v3715 = vpack.c.b16 %v3554, %v3547
    %v3716 = vpack.c.b16 %v3562, %v3555
    %v3717 = vpack.c.b16 %v3563, %v3556
    %v3718 = vpack.c.b16 %v3564, %v3557
    %v3719 = vpack.c.b16 %v3565, %v3558
    %v3720 = vpack.c.b16 %v3566, %v3559
    %v3721 = vpack.c.b16 %v3567, %v3560
    %v3722 = vpack.c.b16 %v3568, %v3561
    %v3723 = vpack.c.b16 %v3576, %v3569
    %v3724 = vpack.c.b16 %v3577, %v3570
    %v3725 = vpack.c.b16 %v3578, %v3571
    %v3726 = vpack.c.b16 %v3579, %v3572
    %v3727 = vpack.c.b16 %v3580, %v3573
    %v3728 = vpack.c.b16 %v3581, %v3574
    %v3729 = vpack.c.b16 %v3582, %v3575
    %v3730 = vpack.c.b16 %v3590, %v3583
    %v3731 = vpack.c.b16 %v3591, %v3584
    %v3732 = vpack.c.b16 %v3592, %v3585
    %v3733 = vpack.c.b16 %v3593, %v3586
    %v3734 = vpack.c.b16 %v3594, %v3587
    %v3735 = vpack.c.b16 %v3595, %v3588
    %v3736 = vpack.c.b16 %v3596, %v3589
    %v3737 = vpack.c.b16 %v3604, %v3597
    %v3738 = vpack.c.b16 %v3605, %v3598
    %v3739 = vpack.c.b16 %v3606, %v3599
    %v3740 = vpack.c.b16 %v3607, %v3600
    %v3741 = vpack.c.b16 %v3608, %v3601
    %v3742 = vpack.c.b16 %v3609, %v3602
    %v3743 = vpack.c.b16 %v3610, %v3603
    %v3871 = vsel %vm1803, %v3155, 0
    %v3874 = vsel %vm1807, %v3737, 0
    %v3877 = vsel %vm1807, %v3738, 0
    %v3880 = vsel %vm1807, %v3739, 0
    %v3883 = vsel %vm1807, %v3740, 0
    %v3886 = vsel %vm1807, %v3741, 0
    %v3889 = vsel %vm1807, %v3742, 0
    %v3892 = vsel %vm1807, %v3743, 0
    %3894 = vmatprep.subr.bf16.mxu0 %v3661
    %3895 = vmatpush1.bf16.msra.mxu0 %v3660
    %3896 = vmatprep.subr.bf16.mxu0 %v3654
    %3897 = vmatpush1.bf16.msra.mxu0 %v3653
    %3898 = vmatprep.subr.bf16.mxu0 %v3647
    %3899 = vmatpush1.bf16.msra.mxu0 %v3646
    %3900 = vmatprep.subr.bf16.mxu0 %v3640
    %3901 = vmatpush1.bf16.msra.mxu0 %v3639
    %3902 = vmatprep.subr.bf16.mxu0 %v3633
    %3903 = vmatpush1.bf16.msra.mxu0 %v3632
    %3904 = vmatprep.subr.bf16.mxu0 %v3626
    %3905 = vmatpush1.bf16.msra.mxu0 %v3625
    %3906 = vmatprep.subr.bf16.mxu0 %v3619
    %3907 = vmatpush1.bf16.msra.mxu0 %v3618
    %3908 = vmatprep.subr.bf16.mxu0 %v3612
    %3909 = vmatpush1.bf16.msra.mxu0 %v3611
    %3910 = vmatprep.subr.bf16.mxu0 %v3717
    %3911 = vmatpush2.bf16.msra.mxu0 %v3716
    %3912 = vmatprep.subr.bf16.mxu0 %v3710
    %3913 = vmatpush2.bf16.msra.mxu0 %v3709
    %3914 = vmatprep.subr.bf16.mxu0 %v3703
    %3915 = vmatpush2.bf16.msra.mxu0 %v3702
    %3916 = vmatprep.subr.bf16.mxu0 %v3696
    %3917 = vmatpush2.bf16.msra.mxu0 %v3695
    %3918 = vmatprep.subr.bf16.mxu0 %v3689
    %3919 = vmatpush2.bf16.msra.mxu0 %v3688
    %3920 = vmatprep.subr.bf16.mxu0 %v3682
    %3921 = vmatpush2.bf16.msra.mxu0 %v3681
    %3922 = vmatprep.subr.bf16.mxu0 %v3675
    %3923 = vmatpush2.bf16.msra.mxu0 %v3674
    %3924 = vmatprep.subr.bf16.mxu0 %v3668
    %3925 = vmatpush2.bf16.msra.mxu0 %v3667
    %3926 = vmatprep.mubr.bf16.mxu0 %v3154
    %3927 = vmatmul.mubr.bf16.gmra.mxu0 %v3153
    %v3928 = vpop.f32.mrf.mxu0
    %v3929 = vadd.f32 %v3161, %v3928
    %v3930 = vpop.f32.mrf.mxu0
    %v3931 = vadd.f32 %v3165, %v3930
    %v3932 = vpop.f32.mrf.mxu0
    %v3933 = vpop.f32.mrf.mxu0
    %3934 = vdwg.mxu0
    %3935 = vmatprep.subr.bf16.mxu0 0
    %3936 = vmatpush1.bf16.msra.mxu0 0
    %3937 = vmatprep.subr.bf16.mxu0 0
    %3938 = vmatpush1.bf16.msra.mxu0 0
    %3939 = vmatprep.subr.bf16.mxu0 0
    %3940 = vmatpush1.bf16.msra.mxu0 0
    %3941 = vmatprep.subr.bf16.mxu0 0
    %3942 = vmatpush1.bf16.msra.mxu0 0
    %3943 = vmatprep.subr.bf16.mxu0 0
    %3944 = vmatpush1.bf16.msra.mxu0 0
    %3945 = vmatprep.subr.bf16.mxu0 %v3877
    %3946 = vmatpush1.bf16.msra.mxu0 %v3874
    %3947 = vmatprep.subr.bf16.mxu0 %v3731
    %3948 = vmatpush1.bf16.msra.mxu0 %v3730
    %3949 = vmatprep.subr.bf16.mxu0 %v3724
    %3950 = vmatpush1.bf16.msra.mxu0 %v3723
    %3951 = vmatprep.subr.bf16.mxu0 0
    %3952 = vmatpush2.bf16.msra.mxu0 0
    %3953 = vmatprep.subr.bf16.mxu0 0
    %3954 = vmatpush2.bf16.msra.mxu0 0
    %3955 = vmatprep.subr.bf16.mxu0 0
    %3956 = vmatpush2.bf16.msra.mxu0 0
    %3957 = vmatprep.subr.bf16.mxu0 0
    %3958 = vmatpush2.bf16.msra.mxu0 0
    %3959 = vmatprep.subr.bf16.mxu0 0
    %3960 = vmatpush2.bf16.msra.mxu0 0
    %3961 = vmatprep.subr.bf16.mxu0 0
    %3962 = vmatpush2.bf16.msra.mxu0 0
    %3963 = vmatprep.subr.bf16.mxu0 0
    %3964 = vmatpush2.bf16.msra.mxu0 0
    %3965 = vmatprep.subr.bf16.mxu0 0
    %3966 = vmatpush2.bf16.msra.mxu0 0
    %3967 = vmatprep.mubr.bf16.mxu0 0
    %3968 = vmatmul.mubr.bf16.gmra.mxu0 %v3871
    %v3969 = vpop.f32.mrf.mxu0
    %v3970 = vadd.f32 %v3929, %v3969
    %v3971 = vpop.f32.mrf.mxu0
    %v3972 = vadd.f32 %v3931, %v3971
    %v3973 = vpop.f32.mrf.mxu0
    %v3974 = vpop.f32.mrf.mxu0
    %3975 = vdwg.mxu0
    %3976 = vmatprep.subr.bf16.mxu0 %v3663
    %3977 = vmatpush1.bf16.msra.mxu0 %v3662
    %3978 = vmatprep.subr.bf16.mxu0 %v3656
    %3979 = vmatpush1.bf16.msra.mxu0 %v3655
    %3980 = vmatprep.subr.bf16.mxu0 %v3649
    %3981 = vmatpush1.bf16.msra.mxu0 %v3648
    %3982 = vmatprep.subr.bf16.mxu0 %v3642
    %3983 = vmatpush1.bf16.msra.mxu0 %v3641
    %3984 = vmatprep.subr.bf16.mxu0 %v3635
    %3985 = vmatpush1.bf16.msra.mxu0 %v3634
    %3986 = vmatprep.subr.bf16.mxu0 %v3628
    %3987 = vmatpush1.bf16.msra.mxu0 %v3627
    %3988 = vmatprep.subr.bf16.mxu0 %v3621
    %3989 = vmatpush1.bf16.msra.mxu0 %v3620
    %3990 = vmatprep.subr.bf16.mxu0 %v3614
    %3991 = vmatpush1.bf16.msra.mxu0 %v3613
    %3992 = vmatprep.subr.bf16.mxu0 %v3719
    %3993 = vmatpush2.bf16.msra.mxu0 %v3718
    %3994 = vmatprep.subr.bf16.mxu0 %v3712
    %3995 = vmatpush2.bf16.msra.mxu0 %v3711
    %3996 = vmatprep.subr.bf16.mxu0 %v3705
    %3997 = vmatpush2.bf16.msra.mxu0 %v3704
    %3998 = vmatprep.subr.bf16.mxu0 %v3698
    %3999 = vmatpush2.bf16.msra.mxu0 %v3697
    %4000 = vmatprep.subr.bf16.mxu0 %v3691
    %4001 = vmatpush2.bf16.msra.mxu0 %v3690
    %4002 = vmatprep.subr.bf16.mxu0 %v3684
    %4003 = vmatpush2.bf16.msra.mxu0 %v3683
    %4004 = vmatprep.subr.bf16.mxu0 %v3677
    %4005 = vmatpush2.bf16.msra.mxu0 %v3676
    %4006 = vmatprep.subr.bf16.mxu0 %v3670
    %4007 = vmatpush2.bf16.msra.mxu0 %v3669
    %4008 = vmatprep.mubr.bf16.mxu0 %v3154
    %4009 = vmatmul.mubr.bf16.gmra.mxu0 %v3153
    %v4010 = vpop.f32.mrf.mxu0
    %v4011 = vadd.f32 %v3169, %v4010
    %v4012 = vpop.f32.mrf.mxu0
    %v4013 = vadd.f32 %v3173, %v4012
    %v4014 = vpop.f32.mrf.mxu0
    %v4015 = vpop.f32.mrf.mxu0
    %4016 = vdwg.mxu0
    %4017 = vmatprep.subr.bf16.mxu0 0
    %4018 = vmatpush1.bf16.msra.mxu0 0
    %4019 = vmatprep.subr.bf16.mxu0 0
    %4020 = vmatpush1.bf16.msra.mxu0 0
    %4021 = vmatprep.subr.bf16.mxu0 0
    %4022 = vmatpush1.bf16.msra.mxu0 0
    %4023 = vmatprep.subr.bf16.mxu0 0
    %4024 = vmatpush1.bf16.msra.mxu0 0
    %4025 = vmatprep.subr.bf16.mxu0 0
    %4026 = vmatpush1.bf16.msra.mxu0 0
    %4027 = vmatprep.subr.bf16.mxu0 %v3883
    %4028 = vmatpush1.bf16.msra.mxu0 %v3880
    %4029 = vmatprep.subr.bf16.mxu0 %v3733
    %4030 = vmatpush1.bf16.msra.mxu0 %v3732
    %4031 = vmatprep.subr.bf16.mxu0 %v3726
    %4032 = vmatpush1.bf16.msra.mxu0 %v3725
    %4033 = vmatprep.subr.bf16.mxu0 0
    %4034 = vmatpush2.bf16.msra.mxu0 0
    %4035 = vmatprep.subr.bf16.mxu0 0
    %4036 = vmatpush2.bf16.msra.mxu0 0
    %4037 = vmatprep.subr.bf16.mxu0 0
    %4038 = vmatpush2.bf16.msra.mxu0 0
    %4039 = vmatprep.subr.bf16.mxu0 0
    %4040 = vmatpush2.bf16.msra.mxu0 0
    %4041 = vmatprep.subr.bf16.mxu0 0
    %4042 = vmatpush2.bf16.msra.mxu0 0
    %4043 = vmatprep.subr.bf16.mxu0 0
    %4044 = vmatpush2.bf16.msra.mxu0 0
    %4045 = vmatprep.subr.bf16.mxu0 0
    %4046 = vmatpush2.bf16.msra.mxu0 0
    %4047 = vmatprep.subr.bf16.mxu0 0
    %4048 = vmatpush2.bf16.msra.mxu0 0
    %4049 = vmatprep.mubr.bf16.mxu0 0
    %4050 = vmatmul.mubr.bf16.gmra.mxu0 %v3871
    %v4051 = vpop.f32.mrf.mxu0
    %v4052 = vadd.f32 %v4011, %v4051
    %v4053 = vpop.f32.mrf.mxu0
    %v4054 = vadd.f32 %v4013, %v4053
    %v4055 = vpop.f32.mrf.mxu0
    %v4056 = vpop.f32.mrf.mxu0
    %4057 = vdwg.mxu0
    %4058 = vmatprep.subr.bf16.mxu0 %v3665
    %4059 = vmatpush1.bf16.msra.mxu0 %v3664
    %4060 = vmatprep.subr.bf16.mxu0 %v3658
    %4061 = vmatpush1.bf16.msra.mxu0 %v3657
    %4062 = vmatprep.subr.bf16.mxu0 %v3651
    %4063 = vmatpush1.bf16.msra.mxu0 %v3650
    %4064 = vmatprep.subr.bf16.mxu0 %v3644
    %4065 = vmatpush1.bf16.msra.mxu0 %v3643
    %4066 = vmatprep.subr.bf16.mxu0 %v3637
    %4067 = vmatpush1.bf16.msra.mxu0 %v3636
    %4068 = vmatprep.subr.bf16.mxu0 %v3630
    %4069 = vmatpush1.bf16.msra.mxu0 %v3629
    %4070 = vmatprep.subr.bf16.mxu0 %v3623
    %4071 = vmatpush1.bf16.msra.mxu0 %v3622
    %4072 = vmatprep.subr.bf16.mxu0 %v3616
    %4073 = vmatpush1.bf16.msra.mxu0 %v3615
    %4074 = vmatprep.subr.bf16.mxu0 %v3721
    %4075 = vmatpush2.bf16.msra.mxu0 %v3720
    %4076 = vmatprep.subr.bf16.mxu0 %v3714
    %4077 = vmatpush2.bf16.msra.mxu0 %v3713
    %4078 = vmatprep.subr.bf16.mxu0 %v3707
    %4079 = vmatpush2.bf16.msra.mxu0 %v3706
    %4080 = vmatprep.subr.bf16.mxu0 %v3700
    %4081 = vmatpush2.bf16.msra.mxu0 %v3699
    %4082 = vmatprep.subr.bf16.mxu0 %v3693
    %4083 = vmatpush2.bf16.msra.mxu0 %v3692
    %4084 = vmatprep.subr.bf16.mxu0 %v3686
    %4085 = vmatpush2.bf16.msra.mxu0 %v3685
    %4086 = vmatprep.subr.bf16.mxu0 %v3679
    %4087 = vmatpush2.bf16.msra.mxu0 %v3678
    %4088 = vmatprep.subr.bf16.mxu0 %v3672
    %4089 = vmatpush2.bf16.msra.mxu0 %v3671
    %4090 = vmatprep.mubr.bf16.mxu0 %v3154
    %4091 = vmatmul.mubr.bf16.gmra.mxu0 %v3153
    %v4092 = vpop.f32.mrf.mxu0
    %v4093 = vadd.f32 %v3177, %v4092
    %v4094 = vpop.f32.mrf.mxu0
    %v4095 = vadd.f32 %v3181, %v4094
    %v4096 = vpop.f32.mrf.mxu0
    %v4097 = vpop.f32.mrf.mxu0
    %4098 = vdwg.mxu0
    %4099 = vmatprep.subr.bf16.mxu0 0
    %4100 = vmatpush1.bf16.msra.mxu0 0
    %4101 = vmatprep.subr.bf16.mxu0 0
    %4102 = vmatpush1.bf16.msra.mxu0 0
    %4103 = vmatprep.subr.bf16.mxu0 0
    %4104 = vmatpush1.bf16.msra.mxu0 0
    %4105 = vmatprep.subr.bf16.mxu0 0
    %4106 = vmatpush1.bf16.msra.mxu0 0
    %4107 = vmatprep.subr.bf16.mxu0 0
    %4108 = vmatpush1.bf16.msra.mxu0 0
    %4109 = vmatprep.subr.bf16.mxu0 %v3889
    %4110 = vmatpush1.bf16.msra.mxu0 %v3886
    %4111 = vmatprep.subr.bf16.mxu0 %v3735
    %4112 = vmatpush1.bf16.msra.mxu0 %v3734
    %4113 = vmatprep.subr.bf16.mxu0 %v3728
    %4114 = vmatpush1.bf16.msra.mxu0 %v3727
    %4115 = vmatprep.subr.bf16.mxu0 0
    %4116 = vmatpush2.bf16.msra.mxu0 0
    %4117 = vmatprep.subr.bf16.mxu0 0
    %4118 = vmatpush2.bf16.msra.mxu0 0
    %4119 = vmatprep.subr.bf16.mxu0 0
    %4120 = vmatpush2.bf16.msra.mxu0 0
    %4121 = vmatprep.subr.bf16.mxu0 0
    %4122 = vmatpush2.bf16.msra.mxu0 0
    %4123 = vmatprep.subr.bf16.mxu0 0
    %4124 = vmatpush2.bf16.msra.mxu0 0
    %4125 = vmatprep.subr.bf16.mxu0 0
    %4126 = vmatpush2.bf16.msra.mxu0 0
    %4127 = vmatprep.subr.bf16.mxu0 0
    %4128 = vmatpush2.bf16.msra.mxu0 0
    %4129 = vmatprep.subr.bf16.mxu0 0
    %4130 = vmatpush2.bf16.msra.mxu0 0
    %4131 = vmatprep.mubr.bf16.mxu0 0
    %4132 = vmatmul.mubr.bf16.gmra.mxu0 %v3871
    %v4133 = vpop.f32.mrf.mxu0
    %v4134 = vadd.f32 %v4093, %v4133
    %v4135 = vpop.f32.mrf.mxu0
    %v4136 = vadd.f32 %v4095, %v4135
    %v4137 = vpop.f32.mrf.mxu0
    %v4138 = vpop.f32.mrf.mxu0
    %4139 = vdwg.mxu0
    %4140 = vmatprep.subr.bf16.mxu0 0
    %4141 = vmatpush1.bf16.msra.mxu0 %v3666
    %4142 = vmatprep.subr.bf16.mxu0 0
    %4143 = vmatpush1.bf16.msra.mxu0 %v3659
    %4144 = vmatprep.subr.bf16.mxu0 0
    %4145 = vmatpush1.bf16.msra.mxu0 %v3652
    %4146 = vmatprep.subr.bf16.mxu0 0
    %4147 = vmatpush1.bf16.msra.mxu0 %v3645
    %4148 = vmatprep.subr.bf16.mxu0 0
    %4149 = vmatpush1.bf16.msra.mxu0 %v3638
    %4150 = vmatprep.subr.bf16.mxu0 0
    %4151 = vmatpush1.bf16.msra.mxu0 %v3631
    %4152 = vmatprep.subr.bf16.mxu0 0
    %4153 = vmatpush1.bf16.msra.mxu0 %v3624
    %4154 = vmatprep.subr.bf16.mxu0 0
    %4155 = vmatpush1.bf16.msra.mxu0 %v3617
    %4156 = vmatprep.subr.bf16.mxu0 0
    %4157 = vmatpush2.bf16.msra.mxu0 %v3722
    %4158 = vmatprep.subr.bf16.mxu0 0
    %4159 = vmatpush2.bf16.msra.mxu0 %v3715
    %4160 = vmatprep.subr.bf16.mxu0 0
    %4161 = vmatpush2.bf16.msra.mxu0 %v3708
    %4162 = vmatprep.subr.bf16.mxu0 0
    %4163 = vmatpush2.bf16.msra.mxu0 %v3701
    %4164 = vmatprep.subr.bf16.mxu0 0
    %4165 = vmatpush2.bf16.msra.mxu0 %v3694
    %4166 = vmatprep.subr.bf16.mxu0 0
    %4167 = vmatpush2.bf16.msra.mxu0 %v3687
    %4168 = vmatprep.subr.bf16.mxu0 0
    %4169 = vmatpush2.bf16.msra.mxu0 %v3680
    %4170 = vmatprep.subr.bf16.mxu0 0
    %4171 = vmatpush2.bf16.msra.mxu0 %v3673
    %4172 = vmatprep.mubr.bf16.mxu0 %v3154
    %4173 = vmatmul.mubr.bf16.gmra.mxu0 %v3153
    %v4174 = vpop.f32.mrf.mxu0
    %v4175 = vadd.f32 %v3185, %v4174
    %v4176 = vpop.f32.mrf.mxu0
    %v4177 = vpop.f32.mrf.mxu0
    %v4178 = vpop.f32.mrf.mxu0
    %4179 = vdwg.mxu0
    %4180 = vmatprep.subr.bf16.mxu0 0
    %4181 = vmatpush1.bf16.msra.mxu0 0
    %4182 = vmatprep.subr.bf16.mxu0 0
    %4183 = vmatpush1.bf16.msra.mxu0 0
    %4184 = vmatprep.subr.bf16.mxu0 0
    %4185 = vmatpush1.bf16.msra.mxu0 0
    %4186 = vmatprep.subr.bf16.mxu0 0
    %4187 = vmatpush1.bf16.msra.mxu0 0
    %4188 = vmatprep.subr.bf16.mxu0 0
    %4189 = vmatpush1.bf16.msra.mxu0 0
    %4190 = vmatprep.subr.bf16.mxu0 0
    %4191 = vmatpush1.bf16.msra.mxu0 %v3892
    %4192 = vmatprep.subr.bf16.mxu0 0
    %4193 = vmatpush1.bf16.msra.mxu0 %v3736
    %4194 = vmatprep.subr.bf16.mxu0 0
    %4195 = vmatpush1.bf16.msra.mxu0 %v3729
    %4196 = vmatprep.subr.bf16.mxu0 0
    %4197 = vmatpush2.bf16.msra.mxu0 0
    %4198 = vmatprep.subr.bf16.mxu0 0
    %4199 = vmatpush2.bf16.msra.mxu0 0
    %4200 = vmatprep.subr.bf16.mxu0 0
    %4201 = vmatpush2.bf16.msra.mxu0 0
    %4202 = vmatprep.subr.bf16.mxu0 0
    %4203 = vmatpush2.bf16.msra.mxu0 0
    %4204 = vmatprep.subr.bf16.mxu0 0
    %4205 = vmatpush2.bf16.msra.mxu0 0
    %4206 = vmatprep.subr.bf16.mxu0 0
    %4207 = vmatpush2.bf16.msra.mxu0 0
    %4208 = vmatprep.subr.bf16.mxu0 0
    %4209 = vmatpush2.bf16.msra.mxu0 0
    %4210 = vmatprep.subr.bf16.mxu0 0
    %4211 = vmatpush2.bf16.msra.mxu0 0
    %4212 = vmatprep.mubr.bf16.mxu0 0
    %4213 = vmatmul.mubr.bf16.gmra.mxu0 %v3871
    %v4214 = vpop.f32.mrf.mxu0
    %v4215 = vadd.f32 %v4175, %v4214
    %v4216 = vpop.f32.mrf.mxu0
    %v4217 = vpop.f32.mrf.mxu0
    %v4218 = vpop.f32.mrf.mxu0
    %4219 = vdwg.mxu0
    %4220 = vst [vmem:[#allocation4] sm:$0xff] %v3970
    %4221 = vst [vmem:[#allocation4 + $0x8] sm:$0xff] %v3972
    %4222 = vst [vmem:[#allocation4 + $0x10] sm:$0xff] %v4052
    %4223 = vst [vmem:[#allocation4 + $0x18] sm:$0xff] %v4054
    %4224 = vst [vmem:[#allocation4 + $0x20] sm:$0xff] %v4134
    %4225 = vst [vmem:[#allocation4 + $0x28] sm:$0xff] %v4136
    %4226 = vst [vmem:[#allocation4 + $0x30] sm:$0xff] %v4215
    // Predicated region
    $region58: #{tpu_custom_call.1} parent=1 // pred_check
      _
    $region59: #{tpu_custom_call.1} parent=1 // pred_check_branch
      %4228 = sbr.rel (0) target = $region61
    $region60: #{tpu_custom_call.1} parent=1 // pred_region
      %s4230 = ssub.s32 128, 128
      %4231 = vsyncadd [#allocation3], %s4230
      %s4233 = sshll.u32 [#allocation2], 4
      %s4234 = int_to_ptr.vmem [resolvable:$true] %s4233
      %4236 = dma.vmem_to_hbm [thread:$0]  %s4234, 128, %s14, [#allocation3]
    $region61: #{tpu_custom_call.1} parent=1 // pred_fallthru
      _
    // Predicated region
    $region62: #{tpu_custom_call.1} parent=1 // pred_check
      _
    $region63: #{tpu_custom_call.1} parent=1 // pred_check_branch
      %4238 = sbr.rel (0) target = $region65
    $region64: #{tpu_custom_call.1} parent=1 // pred_region
      %s4240 = ssub.s32 896, 896
      %4241 = vsyncadd [#allocation5], %s4240
      %s4243 = sshll.u32 [#allocation4], 4
      %s4244 = int_to_ptr.vmem [resolvable:$true] %s4243
      %4246 = dma.vmem_to_hbm [thread:$0]  %s4244, 896, %s15, [#allocation5]
    $region65: #{tpu_custom_call.1} parent=1 // pred_fallthru
      _
    // Predicated region
    $region66: #{tpu_custom_call.1} parent=1 // pred_check
      _
    $region67: #{tpu_custom_call.1} parent=1 // pred_check_branch
      %4248 = sbr.rel (0) target = $region69
    $region68: #{tpu_custom_call.1} parent=1 // pred_region
      %4249 = dma.done [#allocation3], 128
    $region69: #{tpu_custom_call.1} parent=1 // pred_fallthru
      _
    // Predicated region
    $region70: #{tpu_custom_call.1} parent=1 // pred_check
      _
    $region71: #{tpu_custom_call.1} parent=1 // pred_check_branch
      %4251 = sbr.rel (0) target = $region73
    $region72: #{tpu_custom_call.1} parent=1 // pred_region
      %4252 = dma.done [#allocation5], 896
    $region73: #{tpu_custom_call.1} parent=1 // pred_fallthru
      _
    %4253 = vsyncpa [#allocation3], 1
    %4254 = vsyncpa [#allocation5], 1

</llo_original>
